<compile_context>
chip_gen: v6e
topology: v6e:2x2x1
jax: 0.10.0
libtpu: 0.0.40
codegen_flags: <defaults>
</compile_context>

<pallas_src>
import jax
import jax.numpy as jnp
from jax import lax
from jax.experimental import pallas as pl
from jax.experimental.pallas import tpu as pltpu


def _round_up(n, m):
    return ((n + m - 1) // m) * m


def _make_fused_kernel(H, W, Cin, Chid, Ct_pad, Chid_pad, base):
    """Fused gates-conv + ConvLSTM update + conv_out kernel (one batch element)."""
    HW = H * W

    def _sigmoid(v):
        # exp and the approximate reciprocal both run on the EUP slot.
        return pl.reciprocal(1.0 + jnp.exp(-v), approx=True)

    def kernel(x_ref, h_ref, c_ref, wg_ref, bg_ref, wo_ref, bo_ref,
               out_ref, h_out_ref, c_out_ref, catp_ref, hp_ref):
        # Static halo masks: a 3x3 SAME conv realized as lane shifts of the
        # row-flattened slab wraps around at the left/right image borders;
        # those output columns are zeroed per tap.  Top/bottom halo rows are
        # handled by the physical zero rows of the slab.
        col = lax.broadcasted_iota(jnp.int32, (1, HW), 1) % W
        mask_l = (col != 0).astype(jnp.float32)        # dx == 0 taps
        mask_r = (col != W - 1).astype(jnp.float32)    # dx == 2 taps

        def conv3x3(slab_ref, w_ref, n_out):
            # slab_ref: (C, L) zero-padded, row-flattened image; image pixels
            # live at lanes [base, base + HW).  Tap (dy, dx) is a constant lane
            # shift of the slab, so each tap is one (n_out, C) x (C, HW) MXU
            # matmul with HW (lane-dense) as the N dimension.
            acc = jnp.zeros((n_out, HW), jnp.float32)
            for dy in range(3):
                for dx in range(3):
                    k = dy * 3 + dx
                    start = base - (W + 1) + dy * W + dx
                    tap = slab_ref[:, start:start + HW]
                    if dx == 0:
                        tap = tap * mask_l
                    elif dx == 2:
                        tap = tap * mask_r
                    acc = acc + jnp.dot(w_ref[k], tap,
                                        preferred_element_type=jnp.float32)
            return acc

        # ---- assemble zero-padded, row-flattened concat(hidden, x) in VMEM ----
        # 1/grad_norm is already folded into the x rows of wg, so raw x is
        # written here (no per-pixel rescale inside the kernel).
        catp_ref[...] = jnp.zeros_like(catp_ref)
        catp_ref[0:Chid, base:base + HW] = h_ref[0]
        catp_ref[Chid:Chid + Cin, base:base + HW] = x_ref[0]

        # ---- gates conv: all 4 gates fused into one 4*Chid-row output --------
        gates = conv3x3(catp_ref, wg_ref, 4 * Chid) + bg_ref[...]

        in_g = _sigmoid(gates[0 * Chid:1 * Chid, :])
        rem_g = _sigmoid(gates[1 * Chid:2 * Chid, :])
        out_g = _sigmoid(gates[2 * Chid:3 * Chid, :])
        cell_g = jnp.tanh(gates[3 * Chid:4 * Chid, :])

        cell_new = rem_g * c_ref[0] + in_g * cell_g
        hidden_new = out_g * jnp.tanh(cell_new)
        h_out_ref[0] = hidden_new
        c_out_ref[0] = cell_new

        # ---- conv_out, fused: pad the new hidden state in VMEM and reuse it ---
        hp_ref[...] = jnp.zeros_like(hp_ref)
        hp_ref[0:Chid, base:base + HW] = hidden_new
        out_ref[0] = conv3x3(hp_ref, wo_ref, Cin) + bo_ref[...]

    return kernel


@jax.jit
def conv_lstm_grad_forward(x, hidden, cell, params):
    """One ConvLstmGradModel.forward step (eval mode); returns out, (hidden', cell')."""
    B, Cin, H, W = x.shape
    Chid = hidden.shape[1]
    Ct = Cin + Chid
    Ct_pad = _round_up(Ct, 8)
    Chid_pad = _round_up(Chid, 8)
    HW = H * W
    base = _round_up(W + 1, 128)       # lane-aligned start of the image lanes
    L = base + HW + W + 1              # row-flattened, row-padded slab length

    x = x.astype(jnp.float32)
    hidden = hidden.astype(jnp.float32)
    cell = cell.astype(jnp.float32)

    # grad_norm = sqrt(mean(x**2)): plain XLA reduction (no extra Pallas pass).
    # NOTE: like the PyTorch reference, an all-zero x would divide by zero.
    grad_norm = jnp.sqrt(jnp.mean(jnp.square(x)))
    inv_gn = 1.0 / grad_norm

    # ---- pack weights into kernel layout (tiny; fused by XLA) ----------------
    # Kernel slab channel order is [hidden, x, zero-pad]; 1/grad_norm is folded
    # into the x rows so the kernel never rescales activations.
    wg = params["gates_w"].astype(jnp.float32)            # (4*Chid, Ct, 3, 3), ci = [x, h]
    wg = jnp.concatenate([wg[:, Cin:], wg[:, :Cin] * inv_gn], axis=1)
    wg = jnp.pad(wg, ((0, 0), (0, Ct_pad - Ct), (0, 0), (0, 0)))
    wg_k = jnp.transpose(wg, (2, 3, 0, 1)).reshape(9, 4 * Chid, Ct_pad)
    bg_k = params["gates_b"].astype(jnp.float32).reshape(4 * Chid, 1)

    wo = params["conv_out_w"].astype(jnp.float32)         # (Cin, Chid, 3, 3)
    wo = jnp.pad(wo, ((0, 0), (0, Chid_pad - Chid), (0, 0), (0, 0)))
    wo_k = jnp.transpose(wo, (2, 3, 0, 1)).reshape(9, Cin, Chid_pad)
    bo_k = params["conv_out_b"].astype(jnp.float32).reshape(Cin, 1)

    # ---- activations: NCHW with H*W flattened onto the lane axis (free) ------
    x_f = x.reshape(B, Cin, HW)
    h_f = hidden.reshape(B, Chid, HW)
    c_f = cell.reshape(B, Chid, HW)

    # TODO(synk): nn.Dropout(p=0.1) is identity in eval mode; training-mode
    # dropout is not implemented.
    # TODO(synk): only the downsamp=None path is implemented (AvgPool2d /
    # UpsamplingBilinear2d are Identity in that configuration).

    kernel = _make_fused_kernel(H, W, Cin, Chid, Ct_pad, Chid_pad, base)

    out_f, h_new_f, c_new_f = pl.pallas_call(
        kernel,
        out_shape=(jax.ShapeDtypeStruct((B, Cin, HW), jnp.float32),
                   jax.ShapeDtypeStruct((B, Chid, HW), jnp.float32),
                   jax.ShapeDtypeStruct((B, Chid, HW), jnp.float32)),
        grid=(B,),
        in_specs=[
            pl.BlockSpec((1, Cin, HW), lambda b: (b, 0, 0)),            # x
            pl.BlockSpec((1, Chid, HW), lambda b: (b, 0, 0)),           # hidden
            pl.BlockSpec((1, Chid, HW), lambda b: (b, 0, 0)),           # cell
            pl.BlockSpec((9, 4 * Chid, Ct_pad), lambda b: (0, 0, 0)),   # gates W
            pl.BlockSpec((4 * Chid, 1), lambda b: (0, 0)),              # gates b
            pl.BlockSpec((9, Cin, Chid_pad), lambda b: (0, 0, 0)),      # conv_out W
            pl.BlockSpec((Cin, 1), lambda b: (0, 0)),                   # conv_out b
        ],
        out_specs=(
            pl.BlockSpec((1, Cin, HW), lambda b: (b, 0, 0)),
            pl.BlockSpec((1, Chid, HW), lambda b: (b, 0, 0)),
            pl.BlockSpec((1, Chid, HW), lambda b: (b, 0, 0)),
        ),
        scratch_shapes=[pltpu.VMEM((Ct_pad, L), jnp.float32),    # padded concat slab
                        pltpu.VMEM((Chid_pad, L), jnp.float32)],  # padded hidden slab
        compiler_params=pltpu.CompilerParams(
            # Batch is embarrassingly parallel -> v7x's two TensorCores split
            # it; neutral on single-core v5e/v6e.
            dimension_semantics=("parallel",)),
    )(x_f, h_f, c_f, wg_k, bg_k, wo_k, bo_k)

    return (out_f.reshape(B, Cin, H, W),
            (h_new_f.reshape(B, Chid, H, W), c_new_f.reshape(B, Chid, H, W)))


# ---------------------------------------------------------- plain-JAX check --

def reference_forward(x, hidden, cell, params):
    gn = jnp.sqrt(jnp.mean(jnp.square(x)))
    cat = jnp.concatenate([x / gn, hidden], axis=1)
    gates = lax.conv_general_dilated(
        cat, params["gates_w"], (1, 1), "SAME",
        dimension_numbers=("NCHW", "OIHW", "NCHW"))
    gates = gates + params["gates_b"].reshape(1, -1, 1, 1)
    i_g, r_g, o_g, c_g = jnp.split(gates, 4, axis=1)
    i_g, r_g, o_g = map(jax.nn.sigmoid, (i_g, r_g, o_g))
    c_g = jnp.tanh(c_g)
    cell_new = r_g * cell + i_g * c_g
    hidden_new = o_g * jnp.tanh(cell_new)
    out = lax.conv_general_dilated(
        hidden_new, params["conv_out_w"], (1, 1), "SAME",
        dimension_numbers=("NCHW", "OIHW", "NCHW"))
    out = out + params["conv_out_b"].reshape(1, -1, 1, 1)
    return out, hidden_new, cell_new


if __name__ == "__main__":
    B, Cin, Chid, H, W = 2, 4, 32, 16, 16
    Ct = Cin + Chid
    key = jax.random.PRNGKey(0)
    kx, kh, kc, k1, k2, k3, k4 = jax.random.split(key, 7)

    x = jax.random.normal(kx, (B, Cin, H, W), jnp.float32)
    # Parameters in native PyTorch (OIHW) layout.
    params = {
        "gates_w": jax.random.normal(k1, (4 * Chid, Ct, 3, 3), jnp.float32)
                   / (9.0 * Ct) ** 0.5,
        "gates_b": jax.random.normal(k2, (4 * Chid,), jnp.float32) * 0.05,
        "conv_out_w": jax.random.normal(k3, (Cin, Chid, 3, 3), jnp.float32)
                      / (9.0 * Chid) ** 0.5,
        "conv_out_b": jax.random.normal(k4, (Cin,), jnp.float32) * 0.05,
    }
    # reset_state() gives zero hidden/cell; use small non-zero states here so
    # the hidden-channel path of the gates conv is also exercised.
    h0 = 0.1 * jax.random.normal(kh, (B, Chid, H, W), jnp.float32)
    c0 = 0.1 * jax.random.normal(kc, (B, Chid, H, W), jnp.float32)

    out, (h1, c1) = conv_lstm_grad_forward(x, h0, c0, params)
    out = jax.block_until_ready(out)

    ref_out, ref_h, ref_c = reference_forward(x, h0, c0, params)
    err_out = float(jnp.max(jnp.abs(out - ref_out)))
    err_h = float(jnp.max(jnp.abs(h1 - ref_h)))
    err_c = float(jnp.max(jnp.abs(c1 - ref_c)))
    # Tolerance tightened vs. the previous 5e-2; the residual slack covers the
    # MXU's default-precision f32 matmul passes (on both the kernel and the
    # XLA-conv reference paths) plus the approximate EUP reciprocal in sigmoid.
    assert err_out < 2e-2 and err_h < 2e-2 and err_c < 2e-2, (err_out, err_h, err_c)
    print("KERNEL_OK")
</pallas_src>

<mosaic_0001>
module attributes {stable_mosaic.version = 11 : i64} {
  func.func @kernel(%arg0: i32, %arg1: memref<1x4x256xf32, #tpu.memory_space<vmem>>, %arg2: memref<1x32x256xf32, #tpu.memory_space<vmem>>, %arg3: memref<1x32x256xf32, #tpu.memory_space<vmem>>, %arg4: memref<9x128x40xf32, #tpu.memory_space<vmem>>, %arg5: memref<128x1xf32, #tpu.memory_space<vmem>>, %arg6: memref<9x4x32xf32, #tpu.memory_space<vmem>>, %arg7: memref<4x1xf32, #tpu.memory_space<vmem>>, %arg8: memref<1x4x256xf32, #tpu.memory_space<vmem>>, %arg9: memref<1x32x256xf32, #tpu.memory_space<vmem>>, %arg10: memref<1x32x256xf32, #tpu.memory_space<vmem>>, %arg11: memref<40x401xf32, #tpu.memory_space<vmem>>, %arg12: memref<32x401xf32, #tpu.memory_space<vmem>>) attributes {dimension_semantics = [#tpu.dimension_semantics<parallel>], iteration_bounds = array<i64: 2>, scalar_prefetch = 0 : i64, scratch_operands = 2 : i64, tpu.core_type = #tpu.core_type<tc>, window_params = [{transform_indices = @transform_0, window_bounds = array<i64: 1, 4, 256>}, {transform_indices = @transform_1, window_bounds = array<i64: 1, 32, 256>}, {transform_indices = @transform_2, window_bounds = array<i64: 1, 32, 256>}, {pipeline_mode = #tpu.pipeline_mode<synchronous>, transform_indices = @transform_3, window_bounds = array<i64: 9, 128, 40>}, {pipeline_mode = #tpu.pipeline_mode<synchronous>, transform_indices = @transform_4, window_bounds = array<i64: 128, 1>}, {pipeline_mode = #tpu.pipeline_mode<synchronous>, transform_indices = @transform_5, window_bounds = array<i64: 9, 4, 32>}, {pipeline_mode = #tpu.pipeline_mode<synchronous>, transform_indices = @transform_6, window_bounds = array<i64: 4, 1>}, {transform_indices = @transform_7, window_bounds = array<i64: 1, 4, 256>}, {transform_indices = @transform_8, window_bounds = array<i64: 1, 32, 256>}, {transform_indices = @transform_9, window_bounds = array<i64: 1, 32, 256>}]} {
    %0 = tpu.iota {dimensions = array<i32: 1>} : vector<1x256xi32>
    %c16_i32 = arith.constant 16 : i32
    %c0_i32 = arith.constant 0 : i32
    %1 = arith.cmpi eq, %c16_i32, %c0_i32 : i32
    %c1_i32 = arith.constant 1 : i32
    %2 = arith.select %1, %c1_i32, %c16_i32 : i32
    %3 = vector.broadcast %2 : i32 to vector<1x256xi32>
    %4 = arith.remsi %0, %3 : vector<1x256xi32>
    %c0_i32_0 = arith.constant 0 : i32
    %5 = vector.broadcast %c0_i32_0 : i32 to vector<1x256xi32>
    %6 = arith.cmpi ne, %4, %5 : vector<1x256xi32>
    %c0_i32_1 = arith.constant 0 : i32
    %7 = vector.broadcast %c0_i32_1 : i32 to vector<1x256xi32>
    %8 = arith.cmpi slt, %4, %7 : vector<1x256xi32>
    %c0_i32_2 = arith.constant 0 : i32
    %9 = arith.cmpi slt, %2, %c0_i32_2 : i32
    %10 = vector.broadcast %9 : i1 to vector<1x256xi1>
    %11 = vector.broadcast %10 : vector<1x256xi1> to vector<1x256xi1>
    %12 = arith.xori %8, %11 : vector<1x256xi1>
    %13 = arith.andi %12, %6 : vector<1x256xi1>
    %14 = vector.broadcast %2 : i32 to vector<1x256xi32>
    %15 = arith.addi %4, %14 : vector<1x256xi32>
    %16 = arith.select %13, %15, %4 : vector<1x256xi1>, vector<1x256xi32>
    %c0_i32_3 = arith.constant 0 : i32
    %17 = vector.broadcast %c0_i32_3 : i32 to vector<1x256xi32>
    %18 = arith.cmpi ne, %16, %17 : vector<1x256xi32>
    %19 = arith.extui %18 : vector<1x256xi1> to vector<1x256xi32>
    %20 = arith.sitofp %19 : vector<1x256xi32> to vector<1x256xf32>
    %c15_i32 = arith.constant 15 : i32
    %21 = vector.broadcast %c15_i32 : i32 to vector<1x256xi32>
    %22 = arith.cmpi ne, %16, %21 : vector<1x256xi32>
    %23 = arith.extui %22 : vector<1x256xi1> to vector<1x256xi32>
    %24 = arith.sitofp %23 : vector<1x256xi32> to vector<1x256xf32>
    %cst = arith.constant 0.000000e+00 : f32
    %25 = vector.broadcast %cst : f32 to vector<40x401xf32>
    %c0 = arith.constant 0 : index
    %c0_4 = arith.constant 0 : index
    %26 = vector.load %arg11[%c0, %c0_4] : memref<40x401xf32, #tpu.memory_space<vmem>>, vector<40x401xf32>
    tpu.vector_store %arg11[%c0, %c0_4], %25 {strides = array<i32>} : memref<40x401xf32, #tpu.memory_space<vmem>>, vector<40x401xf32>,
    %c0_5 = arith.constant 0 : index
    %c0_6 = arith.constant 0 : index
    %c0_7 = arith.constant 0 : index
    %27 = vector.load %arg2[%c0_5, %c0_6, %c0_7] : memref<1x32x256xf32, #tpu.memory_space<vmem>>, vector<1x32x256xf32>
    %28 = vector.shape_cast %27 : vector<1x32x256xf32> to vector<32x256xf32>
    %c0_8 = arith.constant 0 : index
    %c128 = arith.constant 128 : index
    %29 = vector.load %arg11[%c0_8, %c128] : memref<40x401xf32, #tpu.memory_space<vmem>>, vector<32x256xf32>
    tpu.vector_store %arg11[%c0_8, %c128], %28 {strides = array<i32>} : memref<40x401xf32, #tpu.memory_space<vmem>>, vector<32x256xf32>,
    %c0_9 = arith.constant 0 : index
    %c0_10 = arith.constant 0 : index
    %c0_11 = arith.constant 0 : index
    %30 = vector.load %arg1[%c0_9, %c0_10, %c0_11] : memref<1x4x256xf32, #tpu.memory_space<vmem>>, vector<1x4x256xf32>
    %31 = vector.shape_cast %30 : vector<1x4x256xf32> to vector<4x256xf32>
    %c32 = arith.constant 32 : index
    %c128_12 = arith.constant 128 : index
    %32 = vector.load %arg11[%c32, %c128_12] : memref<40x401xf32, #tpu.memory_space<vmem>>, vector<4x256xf32>
    tpu.vector_store %arg11[%c32, %c128_12], %31 {strides = array<i32>} : memref<40x401xf32, #tpu.memory_space<vmem>>, vector<4x256xf32>,
    %cst_13 = arith.constant 0.000000e+00 : f32
    %33 = vector.broadcast %cst_13 : f32 to vector<128x256xf32>
    %c0_14 = arith.constant 0 : index
    %c111 = arith.constant 111 : index
    %34 = vector.load %arg11[%c0_14, %c111] : memref<40x401xf32, #tpu.memory_space<vmem>>, vector<40x256xf32>
    %35 = vector.broadcast %20 : vector<1x256xf32> to vector<40x256xf32>
    %36 = arith.mulf %34, %35 : vector<40x256xf32>
    %c0_15 = arith.constant 0 : index
    %c0_16 = arith.constant 0 : index
    %c0_17 = arith.constant 0 : index
    %37 = vector.load %arg4[%c0_15, %c0_16, %c0_17] : memref<9x128x40xf32, #tpu.memory_space<vmem>>, vector<1x128x40xf32>
    %38 = vector.shape_cast %37 : vector<1x128x40xf32> to vector<128x40xf32>
    %cst_18 = arith.constant dense<0.000000e+00> : vector<128x256xf32>
    %39 = tpu.matmul %38, %36, %cst_18 {dimension_numbers = #tpu.dot_dimension_numbers<[1], [0], [0], [1], [0, 0, 1, 1], [], []>} : vector<128x40xf32>, vector<40x256xf32>, vector<128x256xf32> -> vector<128x256xf32>
    %40 = arith.addf %33, %39 : vector<128x256xf32>
    %c0_19 = arith.constant 0 : index
    %c112 = arith.constant 112 : index
    %41 = vector.load %arg11[%c0_19, %c112] : memref<40x401xf32, #tpu.memory_space<vmem>>, vector<40x256xf32>
    %c1 = arith.constant 1 : index
    %c0_20 = arith.constant 0 : index
    %c0_21 = arith.constant 0 : index
    %42 = vector.load %arg4[%c1, %c0_20, %c0_21] : memref<9x128x40xf32, #tpu.memory_space<vmem>>, vector<1x128x40xf32>
    %43 = vector.shape_cast %42 : vector<1x128x40xf32> to vector<128x40xf32>
    %cst_22 = arith.constant dense<0.000000e+00> : vector<128x256xf32>
    %44 = tpu.matmul %43, %41, %cst_22 {dimension_numbers = #tpu.dot_dimension_numbers<[1], [0], [0], [1], [0, 0, 1, 1], [], []>} : vector<128x40xf32>, vector<40x256xf32>, vector<128x256xf32> -> vector<128x256xf32>
    %45 = arith.addf %40, %44 : vector<128x256xf32>
    %c0_23 = arith.constant 0 : index
    %c113 = arith.constant 113 : index
    %46 = vector.load %arg11[%c0_23, %c113] : memref<40x401xf32, #tpu.memory_space<vmem>>, vector<40x256xf32>
    %47 = vector.broadcast %24 : vector<1x256xf32> to vector<40x256xf32>
    %48 = arith.mulf %46, %47 : vector<40x256xf32>
    %c2 = arith.constant 2 : index
    %c0_24 = arith.constant 0 : index
    %c0_25 = arith.constant 0 : index
    %49 = vector.load %arg4[%c2, %c0_24, %c0_25] : memref<9x128x40xf32, #tpu.memory_space<vmem>>, vector<1x128x40xf32>
    %50 = vector.shape_cast %49 : vector<1x128x40xf32> to vector<128x40xf32>
    %cst_26 = arith.constant dense<0.000000e+00> : vector<128x256xf32>
    %51 = tpu.matmul %50, %48, %cst_26 {dimension_numbers = #tpu.dot_dimension_numbers<[1], [0], [0], [1], [0, 0, 1, 1], [], []>} : vector<128x40xf32>, vector<40x256xf32>, vector<128x256xf32> -> vector<128x256xf32>
    %52 = arith.addf %45, %51 : vector<128x256xf32>
    %c0_27 = arith.constant 0 : index
    %c127 = arith.constant 127 : index
    %53 = vector.load %arg11[%c0_27, %c127] : memref<40x401xf32, #tpu.memory_space<vmem>>, vector<40x256xf32>
    %54 = vector.broadcast %20 : vector<1x256xf32> to vector<40x256xf32>
    %55 = arith.mulf %53, %54 : vector<40x256xf32>
    %c3 = arith.constant 3 : index
    %c0_28 = arith.constant 0 : index
    %c0_29 = arith.constant 0 : index
    %56 = vector.load %arg4[%c3, %c0_28, %c0_29] : memref<9x128x40xf32, #tpu.memory_space<vmem>>, vector<1x128x40xf32>
    %57 = vector.shape_cast %56 : vector<1x128x40xf32> to vector<128x40xf32>
    %cst_30 = arith.constant dense<0.000000e+00> : vector<128x256xf32>
    %58 = tpu.matmul %57, %55, %cst_30 {dimension_numbers = #tpu.dot_dimension_numbers<[1], [0], [0], [1], [0, 0, 1, 1], [], []>} : vector<128x40xf32>, vector<40x256xf32>, vector<128x256xf32> -> vector<128x256xf32>
    %59 = arith.addf %52, %58 : vector<128x256xf32>
    %c0_31 = arith.constant 0 : index
    %c128_32 = arith.constant 128 : index
    %60 = vector.load %arg11[%c0_31, %c128_32] : memref<40x401xf32, #tpu.memory_space<vmem>>, vector<40x256xf32>
    %c4 = arith.constant 4 : index
    %c0_33 = arith.constant 0 : index
    %c0_34 = arith.constant 0 : index
    %61 = vector.load %arg4[%c4, %c0_33, %c0_34] : memref<9x128x40xf32, #tpu.memory_space<vmem>>, vector<1x128x40xf32>
    %62 = vector.shape_cast %61 : vector<1x128x40xf32> to vector<128x40xf32>
    %cst_35 = arith.constant dense<0.000000e+00> : vector<128x256xf32>
    %63 = tpu.matmul %62, %60, %cst_35 {dimension_numbers = #tpu.dot_dimension_numbers<[1], [0], [0], [1], [0, 0, 1, 1], [], []>} : vector<128x40xf32>, vector<40x256xf32>, vector<128x256xf32> -> vector<128x256xf32>
    %64 = arith.addf %59, %63 : vector<128x256xf32>
    %c0_36 = arith.constant 0 : index
    %c129 = arith.constant 129 : index
    %65 = vector.load %arg11[%c0_36, %c129] : memref<40x401xf32, #tpu.memory_space<vmem>>, vector<40x256xf32>
    %66 = vector.broadcast %24 : vector<1x256xf32> to vector<40x256xf32>
    %67 = arith.mulf %65, %66 : vector<40x256xf32>
    %c5 = arith.constant 5 : index
    %c0_37 = arith.constant 0 : index
    %c0_38 = arith.constant 0 : index
    %68 = vector.load %arg4[%c5, %c0_37, %c0_38] : memref<9x128x40xf32, #tpu.memory_space<vmem>>, vector<1x128x40xf32>
    %69 = vector.shape_cast %68 : vector<1x128x40xf32> to vector<128x40xf32>
    %cst_39 = arith.constant dense<0.000000e+00> : vector<128x256xf32>
    %70 = tpu.matmul %69, %67, %cst_39 {dimension_numbers = #tpu.dot_dimension_numbers<[1], [0], [0], [1], [0, 0, 1, 1], [], []>} : vector<128x40xf32>, vector<40x256xf32>, vector<128x256xf32> -> vector<128x256xf32>
    %71 = arith.addf %64, %70 : vector<128x256xf32>
    %c0_40 = arith.constant 0 : index
    %c143 = arith.constant 143 : index
    %72 = vector.load %arg11[%c0_40, %c143] : memref<40x401xf32, #tpu.memory_space<vmem>>, vector<40x256xf32>
    %73 = vector.broadcast %20 : vector<1x256xf32> to vector<40x256xf32>
    %74 = arith.mulf %72, %73 : vector<40x256xf32>
    %c6 = arith.constant 6 : index
    %c0_41 = arith.constant 0 : index
    %c0_42 = arith.constant 0 : index
    %75 = vector.load %arg4[%c6, %c0_41, %c0_42] : memref<9x128x40xf32, #tpu.memory_space<vmem>>, vector<1x128x40xf32>
    %76 = vector.shape_cast %75 : vector<1x128x40xf32> to vector<128x40xf32>
    %cst_43 = arith.constant dense<0.000000e+00> : vector<128x256xf32>
    %77 = tpu.matmul %76, %74, %cst_43 {dimension_numbers = #tpu.dot_dimension_numbers<[1], [0], [0], [1], [0, 0, 1, 1], [], []>} : vector<128x40xf32>, vector<40x256xf32>, vector<128x256xf32> -> vector<128x256xf32>
    %78 = arith.addf %71, %77 : vector<128x256xf32>
    %c0_44 = arith.constant 0 : index
    %c144 = arith.constant 144 : index
    %79 = vector.load %arg11[%c0_44, %c144] : memref<40x401xf32, #tpu.memory_space<vmem>>, vector<40x256xf32>
    %c7 = arith.constant 7 : index
    %c0_45 = arith.constant 0 : index
    %c0_46 = arith.constant 0 : index
    %80 = vector.load %arg4[%c7, %c0_45, %c0_46] : memref<9x128x40xf32, #tpu.memory_space<vmem>>, vector<1x128x40xf32>
    %81 = vector.shape_cast %80 : vector<1x128x40xf32> to vector<128x40xf32>
    %cst_47 = arith.constant dense<0.000000e+00> : vector<128x256xf32>
    %82 = tpu.matmul %81, %79, %cst_47 {dimension_numbers = #tpu.dot_dimension_numbers<[1], [0], [0], [1], [0, 0, 1, 1], [], []>} : vector<128x40xf32>, vector<40x256xf32>, vector<128x256xf32> -> vector<128x256xf32>
    %83 = arith.addf %78, %82 : vector<128x256xf32>
    %c0_48 = arith.constant 0 : index
    %c145 = arith.constant 145 : index
    %84 = vector.load %arg11[%c0_48, %c145] : memref<40x401xf32, #tpu.memory_space<vmem>>, vector<40x256xf32>
    %85 = vector.broadcast %24 : vector<1x256xf32> to vector<40x256xf32>
    %86 = arith.mulf %84, %85 : vector<40x256xf32>
    %c8 = arith.constant 8 : index
    %c0_49 = arith.constant 0 : index
    %c0_50 = arith.constant 0 : index
    %87 = vector.load %arg4[%c8, %c0_49, %c0_50] : memref<9x128x40xf32, #tpu.memory_space<vmem>>, vector<1x128x40xf32>
    %88 = vector.shape_cast %87 : vector<1x128x40xf32> to vector<128x40xf32>
    %cst_51 = arith.constant dense<0.000000e+00> : vector<128x256xf32>
    %89 = tpu.matmul %88, %86, %cst_51 {dimension_numbers = #tpu.dot_dimension_numbers<[1], [0], [0], [1], [0, 0, 1, 1], [], []>} : vector<128x40xf32>, vector<40x256xf32>, vector<128x256xf32> -> vector<128x256xf32>
    %90 = arith.addf %83, %89 : vector<128x256xf32>
    %c0_52 = arith.constant 0 : index
    %c0_53 = arith.constant 0 : index
    %91 = vector.load %arg5[%c0_52, %c0_53] : memref<128x1xf32, #tpu.memory_space<vmem>>, vector<128x1xf32>
    %92 = vector.broadcast %91 : vector<128x1xf32> to vector<128x256xf32>
    %93 = arith.addf %90, %92 : vector<128x256xf32>
    %94 = vector.extract_strided_slice %93 {offsets = [0, 0], sizes = [32, 256], strides = [1, 1]} : vector<128x256xf32> to vector<32x256xf32>
    %cst_54 = arith.constant 0.000000e+00 : f32
    %95 = vector.broadcast %cst_54 : f32 to vector<32x256xf32>
    %96 = arith.subf %95, %94 : vector<32x256xf32>
    %97 = math.exp %96 : vector<32x256xf32>
    %cst_55 = arith.constant 1.000000e+00 : f32
    %98 = vector.broadcast %cst_55 : f32 to vector<32x256xf32>
    %99 = arith.addf %98, %97 : vector<32x256xf32>
    %100 = tpu.reciprocal %99 {approx = true} : vector<32x256xf32> -> vector<32x256xf32>
    %101 = vector.extract_strided_slice %93 {offsets = [32, 0], sizes = [32, 256], strides = [1, 1]} : vector<128x256xf32> to vector<32x256xf32>
    %cst_56 = arith.constant 0.000000e+00 : f32
    %102 = vector.broadcast %cst_56 : f32 to vector<32x256xf32>
    %103 = arith.subf %102, %101 : vector<32x256xf32>
    %104 = math.exp %103 : vector<32x256xf32>
    %cst_57 = arith.constant 1.000000e+00 : f32
    %105 = vector.broadcast %cst_57 : f32 to vector<32x256xf32>
    %106 = arith.addf %105, %104 : vector<32x256xf32>
    %107 = tpu.reciprocal %106 {approx = true} : vector<32x256xf32> -> vector<32x256xf32>
    %108 = vector.extract_strided_slice %93 {offsets = [64, 0], sizes = [32, 256], strides = [1, 1]} : vector<128x256xf32> to vector<32x256xf32>
    %cst_58 = arith.constant 0.000000e+00 : f32
    %109 = vector.broadcast %cst_58 : f32 to vector<32x256xf32>
    %110 = arith.subf %109, %108 : vector<32x256xf32>
    %111 = math.exp %110 : vector<32x256xf32>
    %cst_59 = arith.constant 1.000000e+00 : f32
    %112 = vector.broadcast %cst_59 : f32 to vector<32x256xf32>
    %113 = arith.addf %112, %111 : vector<32x256xf32>
    %114 = tpu.reciprocal %113 {approx = true} : vector<32x256xf32> -> vector<32x256xf32>
    %115 = vector.extract_strided_slice %93 {offsets = [96, 0], sizes = [32, 256], strides = [1, 1]} : vector<128x256xf32> to vector<32x256xf32>
    %116 = math.tanh %115 : vector<32x256xf32>
    %c0_60 = arith.constant 0 : index
    %c0_61 = arith.constant 0 : index
    %c0_62 = arith.constant 0 : index
    %117 = vector.load %arg3[%c0_60, %c0_61, %c0_62] : memref<1x32x256xf32, #tpu.memory_space<vmem>>, vector<1x32x256xf32>
    %118 = vector.shape_cast %117 : vector<1x32x256xf32> to vector<32x256xf32>
    %119 = arith.mulf %107, %118 : vector<32x256xf32>
    %120 = arith.mulf %100, %116 : vector<32x256xf32>
    %121 = arith.addf %119, %120 : vector<32x256xf32>
    %122 = math.tanh %121 : vector<32x256xf32>
    %123 = arith.mulf %114, %122 : vector<32x256xf32>
    %c0_63 = arith.constant 0 : index
    %c0_64 = arith.constant 0 : index
    %c0_65 = arith.constant 0 : index
    %124 = vector.load %arg9[%c0_63, %c0_64, %c0_65] : memref<1x32x256xf32, #tpu.memory_space<vmem>>, vector<1x32x256xf32>
    %125 = vector.shape_cast %124 : vector<1x32x256xf32> to vector<32x256xf32>
    %126 = vector.shape_cast %123 : vector<32x256xf32> to vector<1x32x256xf32>
    tpu.vector_store %arg9[%c0_63, %c0_64, %c0_65], %126 {strides = array<i32>} : memref<1x32x256xf32, #tpu.memory_space<vmem>>, vector<1x32x256xf32>,
    %c0_66 = arith.constant 0 : index
    %c0_67 = arith.constant 0 : index
    %c0_68 = arith.constant 0 : index
    %127 = vector.load %arg10[%c0_66, %c0_67, %c0_68] : memref<1x32x256xf32, #tpu.memory_space<vmem>>, vector<1x32x256xf32>
    %128 = vector.shape_cast %127 : vector<1x32x256xf32> to vector<32x256xf32>
    %129 = vector.shape_cast %121 : vector<32x256xf32> to vector<1x32x256xf32>
    tpu.vector_store %arg10[%c0_66, %c0_67, %c0_68], %129 {strides = array<i32>} : memref<1x32x256xf32, #tpu.memory_space<vmem>>, vector<1x32x256xf32>,
    %cst_69 = arith.constant 0.000000e+00 : f32
    %130 = vector.broadcast %cst_69 : f32 to vector<32x401xf32>
    %c0_70 = arith.constant 0 : index
    %c0_71 = arith.constant 0 : index
    %131 = vector.load %arg12[%c0_70, %c0_71] : memref<32x401xf32, #tpu.memory_space<vmem>>, vector<32x401xf32>
    tpu.vector_store %arg12[%c0_70, %c0_71], %130 {strides = array<i32>} : memref<32x401xf32, #tpu.memory_space<vmem>>, vector<32x401xf32>,
    %c0_72 = arith.constant 0 : index
    %c128_73 = arith.constant 128 : index
    %132 = vector.load %arg12[%c0_72, %c128_73] : memref<32x401xf32, #tpu.memory_space<vmem>>, vector<32x256xf32>
    tpu.vector_store %arg12[%c0_72, %c128_73], %123 {strides = array<i32>} : memref<32x401xf32, #tpu.memory_space<vmem>>, vector<32x256xf32>,
    %cst_74 = arith.constant 0.000000e+00 : f32
    %133 = vector.broadcast %cst_74 : f32 to vector<4x256xf32>
    %c0_75 = arith.constant 0 : index
    %c111_76 = arith.constant 111 : index
    %134 = vector.load %arg12[%c0_75, %c111_76] : memref<32x401xf32, #tpu.memory_space<vmem>>, vector<32x256xf32>
    %135 = vector.broadcast %20 : vector<1x256xf32> to vector<32x256xf32>
    %136 = arith.mulf %134, %135 : vector<32x256xf32>
    %c0_77 = arith.constant 0 : index
    %c0_78 = arith.constant 0 : index
    %c0_79 = arith.constant 0 : index
    %137 = vector.load %arg6[%c0_77, %c0_78, %c0_79] : memref<9x4x32xf32, #tpu.memory_space<vmem>>, vector<1x4x32xf32>
    %138 = vector.shape_cast %137 : vector<1x4x32xf32> to vector<4x32xf32>
    %cst_80 = arith.constant dense<0.000000e+00> : vector<4x256xf32>
    %139 = tpu.matmul %138, %136, %cst_80 {dimension_numbers = #tpu.dot_dimension_numbers<[1], [0], [0], [1], [0, 0, 1, 1], [], []>} : vector<4x32xf32>, vector<32x256xf32>, vector<4x256xf32> -> vector<4x256xf32>
    %140 = arith.addf %133, %139 : vector<4x256xf32>
    %c0_81 = arith.constant 0 : index
    %c112_82 = arith.constant 112 : index
    %141 = vector.load %arg12[%c0_81, %c112_82] : memref<32x401xf32, #tpu.memory_space<vmem>>, vector<32x256xf32>
    %c1_83 = arith.constant 1 : index
    %c0_84 = arith.constant 0 : index
    %c0_85 = arith.constant 0 : index
    %142 = vector.load %arg6[%c1_83, %c0_84, %c0_85] : memref<9x4x32xf32, #tpu.memory_space<vmem>>, vector<1x4x32xf32>
    %143 = vector.shape_cast %142 : vector<1x4x32xf32> to vector<4x32xf32>
    %cst_86 = arith.constant dense<0.000000e+00> : vector<4x256xf32>
    %144 = tpu.matmul %143, %141, %cst_86 {dimension_numbers = #tpu.dot_dimension_numbers<[1], [0], [0], [1], [0, 0, 1, 1], [], []>} : vector<4x32xf32>, vector<32x256xf32>, vector<4x256xf32> -> vector<4x256xf32>
    %145 = arith.addf %140, %144 : vector<4x256xf32>
    %c0_87 = arith.constant 0 : index
    %c113_88 = arith.constant 113 : index
    %146 = vector.load %arg12[%c0_87, %c113_88] : memref<32x401xf32, #tpu.memory_space<vmem>>, vector<32x256xf32>
    %147 = vector.broadcast %24 : vector<1x256xf32> to vector<32x256xf32>
    %148 = arith.mulf %146, %147 : vector<32x256xf32>
    %c2_89 = arith.constant 2 : index
    %c0_90 = arith.constant 0 : index
    %c0_91 = arith.constant 0 : index
    %149 = vector.load %arg6[%c2_89, %c0_90, %c0_91] : memref<9x4x32xf32, #tpu.memory_space<vmem>>, vector<1x4x32xf32>
    %150 = vector.shape_cast %149 : vector<1x4x32xf32> to vector<4x32xf32>
    %cst_92 = arith.constant dense<0.000000e+00> : vector<4x256xf32>
    %151 = tpu.matmul %150, %148, %cst_92 {dimension_numbers = #tpu.dot_dimension_numbers<[1], [0], [0], [1], [0, 0, 1, 1], [], []>} : vector<4x32xf32>, vector<32x256xf32>, vector<4x256xf32> -> vector<4x256xf32>
    %152 = arith.addf %145, %151 : vector<4x256xf32>
    %c0_93 = arith.constant 0 : index
    %c127_94 = arith.constant 127 : index
    %153 = vector.load %arg12[%c0_93, %c127_94] : memref<32x401xf32, #tpu.memory_space<vmem>>, vector<32x256xf32>
    %154 = vector.broadcast %20 : vector<1x256xf32> to vector<32x256xf32>
    %155 = arith.mulf %153, %154 : vector<32x256xf32>
    %c3_95 = arith.constant 3 : index
    %c0_96 = arith.constant 0 : index
    %c0_97 = arith.constant 0 : index
    %156 = vector.load %arg6[%c3_95, %c0_96, %c0_97] : memref<9x4x32xf32, #tpu.memory_space<vmem>>, vector<1x4x32xf32>
    %157 = vector.shape_cast %156 : vector<1x4x32xf32> to vector<4x32xf32>
    %cst_98 = arith.constant dense<0.000000e+00> : vector<4x256xf32>
    %158 = tpu.matmul %157, %155, %cst_98 {dimension_numbers = #tpu.dot_dimension_numbers<[1], [0], [0], [1], [0, 0, 1, 1], [], []>} : vector<4x32xf32>, vector<32x256xf32>, vector<4x256xf32> -> vector<4x256xf32>
    %159 = arith.addf %152, %158 : vector<4x256xf32>
    %c0_99 = arith.constant 0 : index
    %c128_100 = arith.constant 128 : index
    %160 = vector.load %arg12[%c0_99, %c128_100] : memref<32x401xf32, #tpu.memory_space<vmem>>, vector<32x256xf32>
    %c4_101 = arith.constant 4 : index
    %c0_102 = arith.constant 0 : index
    %c0_103 = arith.constant 0 : index
    %161 = vector.load %arg6[%c4_101, %c0_102, %c0_103] : memref<9x4x32xf32, #tpu.memory_space<vmem>>, vector<1x4x32xf32>
    %162 = vector.shape_cast %161 : vector<1x4x32xf32> to vector<4x32xf32>
    %cst_104 = arith.constant dense<0.000000e+00> : vector<4x256xf32>
    %163 = tpu.matmul %162, %160, %cst_104 {dimension_numbers = #tpu.dot_dimension_numbers<[1], [0], [0], [1], [0, 0, 1, 1], [], []>} : vector<4x32xf32>, vector<32x256xf32>, vector<4x256xf32> -> vector<4x256xf32>
    %164 = arith.addf %159, %163 : vector<4x256xf32>
    %c0_105 = arith.constant 0 : index
    %c129_106 = arith.constant 129 : index
    %165 = vector.load %arg12[%c0_105, %c129_106] : memref<32x401xf32, #tpu.memory_space<vmem>>, vector<32x256xf32>
    %166 = vector.broadcast %24 : vector<1x256xf32> to vector<32x256xf32>
    %167 = arith.mulf %165, %166 : vector<32x256xf32>
    %c5_107 = arith.constant 5 : index
    %c0_108 = arith.constant 0 : index
    %c0_109 = arith.constant 0 : index
    %168 = vector.load %arg6[%c5_107, %c0_108, %c0_109] : memref<9x4x32xf32, #tpu.memory_space<vmem>>, vector<1x4x32xf32>
    %169 = vector.shape_cast %168 : vector<1x4x32xf32> to vector<4x32xf32>
    %cst_110 = arith.constant dense<0.000000e+00> : vector<4x256xf32>
    %170 = tpu.matmul %169, %167, %cst_110 {dimension_numbers = #tpu.dot_dimension_numbers<[1], [0], [0], [1], [0, 0, 1, 1], [], []>} : vector<4x32xf32>, vector<32x256xf32>, vector<4x256xf32> -> vector<4x256xf32>
    %171 = arith.addf %164, %170 : vector<4x256xf32>
    %c0_111 = arith.constant 0 : index
    %c143_112 = arith.constant 143 : index
    %172 = vector.load %arg12[%c0_111, %c143_112] : memref<32x401xf32, #tpu.memory_space<vmem>>, vector<32x256xf32>
    %173 = vector.broadcast %20 : vector<1x256xf32> to vector<32x256xf32>
    %174 = arith.mulf %172, %173 : vector<32x256xf32>
    %c6_113 = arith.constant 6 : index
    %c0_114 = arith.constant 0 : index
    %c0_115 = arith.constant 0 : index
    %175 = vector.load %arg6[%c6_113, %c0_114, %c0_115] : memref<9x4x32xf32, #tpu.memory_space<vmem>>, vector<1x4x32xf32>
    %176 = vector.shape_cast %175 : vector<1x4x32xf32> to vector<4x32xf32>
    %cst_116 = arith.constant dense<0.000000e+00> : vector<4x256xf32>
    %177 = tpu.matmul %176, %174, %cst_116 {dimension_numbers = #tpu.dot_dimension_numbers<[1], [0], [0], [1], [0, 0, 1, 1], [], []>} : vector<4x32xf32>, vector<32x256xf32>, vector<4x256xf32> -> vector<4x256xf32>
    %178 = arith.addf %171, %177 : vector<4x256xf32>
    %c0_117 = arith.constant 0 : index
    %c144_118 = arith.constant 144 : index
    %179 = vector.load %arg12[%c0_117, %c144_118] : memref<32x401xf32, #tpu.memory_space<vmem>>, vector<32x256xf32>
    %c7_119 = arith.constant 7 : index
    %c0_120 = arith.constant 0 : index
    %c0_121 = arith.constant 0 : index
    %180 = vector.load %arg6[%c7_119, %c0_120, %c0_121] : memref<9x4x32xf32, #tpu.memory_space<vmem>>, vector<1x4x32xf32>
    %181 = vector.shape_cast %180 : vector<1x4x32xf32> to vector<4x32xf32>
    %cst_122 = arith.constant dense<0.000000e+00> : vector<4x256xf32>
    %182 = tpu.matmul %181, %179, %cst_122 {dimension_numbers = #tpu.dot_dimension_numbers<[1], [0], [0], [1], [0, 0, 1, 1], [], []>} : vector<4x32xf32>, vector<32x256xf32>, vector<4x256xf32> -> vector<4x256xf32>
    %183 = arith.addf %178, %182 : vector<4x256xf32>
    %c0_123 = arith.constant 0 : index
    %c145_124 = arith.constant 145 : index
    %184 = vector.load %arg12[%c0_123, %c145_124] : memref<32x401xf32, #tpu.memory_space<vmem>>, vector<32x256xf32>
    %185 = vector.broadcast %24 : vector<1x256xf32> to vector<32x256xf32>
    %186 = arith.mulf %184, %185 : vector<32x256xf32>
    %c8_125 = arith.constant 8 : index
    %c0_126 = arith.constant 0 : index
    %c0_127 = arith.constant 0 : index
    %187 = vector.load %arg6[%c8_125, %c0_126, %c0_127] : memref<9x4x32xf32, #tpu.memory_space<vmem>>, vector<1x4x32xf32>
    %188 = vector.shape_cast %187 : vector<1x4x32xf32> to vector<4x32xf32>
    %cst_128 = arith.constant dense<0.000000e+00> : vector<4x256xf32>
    %189 = tpu.matmul %188, %186, %cst_128 {dimension_numbers = #tpu.dot_dimension_numbers<[1], [0], [0], [1], [0, 0, 1, 1], [], []>} : vector<4x32xf32>, vector<32x256xf32>, vector<4x256xf32> -> vector<4x256xf32>
    %190 = arith.addf %183, %189 : vector<4x256xf32>
    %c0_129 = arith.constant 0 : index
    %c0_130 = arith.constant 0 : index
    %191 = vector.load %arg7[%c0_129, %c0_130] : memref<4x1xf32, #tpu.memory_space<vmem>>, vector<4x1xf32>
    %192 = vector.broadcast %191 : vector<4x1xf32> to vector<4x256xf32>
    %193 = arith.addf %190, %192 : vector<4x256xf32>
    %c0_131 = arith.constant 0 : index
    %c0_132 = arith.constant 0 : index
    %c0_133 = arith.constant 0 : index
    %194 = vector.load %arg8[%c0_131, %c0_132, %c0_133] : memref<1x4x256xf32, #tpu.memory_space<vmem>>, vector<1x4x256xf32>
    %195 = vector.shape_cast %194 : vector<1x4x256xf32> to vector<4x256xf32>
    %196 = vector.shape_cast %193 : vector<4x256xf32> to vector<1x4x256xf32>
    tpu.vector_store %arg8[%c0_131, %c0_132, %c0_133], %196 {strides = array<i32>} : memref<1x4x256xf32, #tpu.memory_space<vmem>>, vector<1x4x256xf32>,
    return
  }
  func.func @transform_0(%arg0: i32) -> (i32, i32, i32) {
    %c0_i32 = arith.constant 0 : i32
    %c0_i32_0 = arith.constant 0 : i32
    %c0_i32_1 = arith.constant 0 : i32
    return %arg0, %c0_i32, %c0_i32_0 : i32, i32, i32
  }
  func.func @transform_1(%arg0: i32) -> (i32, i32, i32) {
    %c0_i32 = arith.constant 0 : i32
    %c0_i32_0 = arith.constant 0 : i32
    %c0_i32_1 = arith.constant 0 : i32
    return %arg0, %c0_i32, %c0_i32_0 : i32, i32, i32
  }
  func.func @transform_2(%arg0: i32) -> (i32, i32, i32) {
    %c0_i32 = arith.constant 0 : i32
    %c0_i32_0 = arith.constant 0 : i32
    %c0_i32_1 = arith.constant 0 : i32
    return %arg0, %c0_i32, %c0_i32_0 : i32, i32, i32
  }
  func.func @transform_3(%arg0: i32) -> (i32, i32, i32) {
    %c0_i32 = arith.constant 0 : i32
    %c0_i32_0 = arith.constant 0 : i32
    %c0_i32_1 = arith.constant 0 : i32
    %c0_i32_2 = arith.constant 0 : i32
    return %c0_i32, %c0_i32_0, %c0_i32_1 : i32, i32, i32
  }
  func.func @transform_4(%arg0: i32) -> (i32, i32) {
    %c0_i32 = arith.constant 0 : i32
    %c0_i32_0 = arith.constant 0 : i32
    %c0_i32_1 = arith.constant 0 : i32
    return %c0_i32, %c0_i32_0 : i32, i32
  }
  func.func @transform_5(%arg0: i32) -> (i32, i32, i32) {
    %c0_i32 = arith.constant 0 : i32
    %c0_i32_0 = arith.constant 0 : i32
    %c0_i32_1 = arith.constant 0 : i32
    %c0_i32_2 = arith.constant 0 : i32
    return %c0_i32, %c0_i32_0, %c0_i32_1 : i32, i32, i32
  }
  func.func @transform_6(%arg0: i32) -> (i32, i32) {
    %c0_i32 = arith.constant 0 : i32
    %c0_i32_0 = arith.constant 0 : i32
    %c0_i32_1 = arith.constant 0 : i32
    return %c0_i32, %c0_i32_0 : i32, i32
  }
  func.func @transform_7(%arg0: i32) -> (i32, i32, i32) {
    %c0_i32 = arith.constant 0 : i32
    %c0_i32_0 = arith.constant 0 : i32
    %c0_i32_1 = arith.constant 0 : i32
    return %arg0, %c0_i32, %c0_i32_0 : i32, i32, i32
  }
  func.func @transform_8(%arg0: i32) -> (i32, i32, i32) {
    %c0_i32 = arith.constant 0 : i32
    %c0_i32_0 = arith.constant 0 : i32
    %c0_i32_1 = arith.constant 0 : i32
    return %arg0, %c0_i32, %c0_i32_0 : i32, i32, i32
  }
  func.func @transform_9(%arg0: i32) -> (i32, i32, i32) {
    %c0_i32 = arith.constant 0 : i32
    %c0_i32_0 = arith.constant 0 : i32
    %c0_i32_1 = arith.constant 0 : i32
    return %arg0, %c0_i32, %c0_i32_0 : i32, i32, i32
  }
}

</mosaic_0001>

<llo_original>
// kernel: conv_lstm_grad_forward.1
$region0: #{conv_lstm_grad_forward.1}
  #allocation0 [shape = 'u32[]', space=smem, size = 0x4, offset = 0x4, fixed_abs, tag = 'smem constant byte address 0x4 - core index']
  #allocation1 [shape = 'u32[144,128]{1,0:T(1,128)}', space=vmem, size = 0x12000, scoped, tag = 'internal scratch']
  #allocation2 [shape = 'f32[40,401]{1,0:T(8,128)}', space=vmem, size = 0x14000, scoped, tag = 'scratch operand']
  #allocation3 [shape = 'f32[32,401]{1,0:T(8,128)}', space=vmem, size = 0x10000, scoped, tag = 'scratch operand']
  %s0 = inlined_call_operand.vmem [shape: f32[2,4,256], index: 0, kind: input, shape index: {}]
  %s1 = inlined_call_operand.vmem [shape: f32[2,32,256], index: 1, kind: input, shape index: {}]
  %s2 = inlined_call_operand.vmem [shape: f32[2,32,256], index: 2, kind: input, shape index: {}]
  %s3 = inlined_call_operand.vmem [shape: f32[9,128,40], index: 3, kind: input, shape index: {}]
  %s4 = inlined_call_operand.vmem [shape: f32[128,1], index: 4, kind: input, shape index: {}]
  %s5 = inlined_call_operand.vmem [shape: f32[9,4,32], index: 5, kind: input, shape index: {}]
  %s6 = inlined_call_operand.vmem [shape: f32[4,1], index: 6, kind: input, shape index: {}]
  %s7 = inlined_call_operand.vmem [shape: f32[2,4,256], index: 7, kind: output, shape index: {0}]
  %s8 = inlined_call_operand.vmem [shape: f32[2,32,256], index: 8, kind: output, shape index: {1}]
  %s9 = inlined_call_operand.vmem [shape: f32[2,32,256], index: 9, kind: output, shape index: {2}]
  %10 = xla_tuple %s7, %s8, %s9
  %s11 = sld [smem:[#allocation0]]
  $region77: #{conv_lstm_grad_forward.1} parent=0
    _
  %s13 = ssub.s32 1, %s11
  %s14 = scalar_select 0, %s13, %s11
  loop: start=0, step=1, limit=4
  $region2: #{conv_lstm_grad_forward.1} parent=0 // loop_pre_header
    _
  $region3: #{conv_lstm_grad_forward.1} parent=0 // loop_header
    %s16 = sphi 0, %s20
    %p17 = scmp.ge.s32.totalorder %s16, 4
    %s26 = sphi 0, %s28
    %s29 = sphi 0, %s26
    %s30 = sphi 0, %s29
    %s46 = sphi 0, %s30
    %s52 = sphi 0, %s54
    %s55 = sphi 0, %s52
    %s56 = sphi 0, %s55
    %s72 = sphi 0, %s56
    %s78 = sphi 0, %s80
    %s81 = sphi 0, %s78
    %s82 = sphi 0, %s81
    %s98 = sphi 0, %s82
    %s102 = sphi 0, %s102
    %s104 = sphi 0, %s102
    %s105 = sphi 0, %s104
    %s119 = sphi 0, %s105
    %s123 = sphi 0, %s123
    %s125 = sphi 0, %s123
    %s126 = sphi 0, %s125
    %s140 = sphi 0, %s126
    %s144 = sphi 0, %s144
    %s146 = sphi 0, %s144
    %s147 = sphi 0, %s146
    %s161 = sphi 0, %s147
    %s165 = sphi 0, %s165
    %s167 = sphi 0, %s165
    %s168 = sphi 0, %s167
    %s182 = sphi 0, %s168
    %s188 = sphi 0, %s190
    %s191 = sphi 0, %s188
    %s192 = sphi 0, %s191
    %s208 = sphi 0, %s192
    %s214 = sphi 0, %s216
    %s217 = sphi 0, %s214
    %s218 = sphi 0, %s217
    %s234 = sphi 0, %s218
    %s240 = sphi 0, %s242
    %s243 = sphi 0, %s240
    %s244 = sphi 0, %s243
    %s260 = sphi 0, %s244
  $region4: #{conv_lstm_grad_forward.1} parent=0 // loop_header_branch
    %19 = sbr.rel (%p17) target = $region8
  $region5: #{conv_lstm_grad_forward.1} parent=0 // loop_body
    %s21 = ssub.s32 %s16, 1
    %s22 = ssub.s32 %s16, 2
    %s23 = sadd.s32 %s16, 1
    %s24 = ssub.s32 %s16, %s23
    %p25 = scmp.eq.s32.totalorder %s24, 0
    %s27 = sadd.s32 %s26, 1
    %s28 = scalar_select %p25, %s26, %s27
    %p31 = pneg %p25
    %p32 = scmp.eq.s32.totalorder %s16, 1
    %p33 = por %p31, %p32
    %p34 = scmp.ne.s32.totalorder %s26, %s29
    %p35 = scmp.eq.s32.totalorder %s16, 0
    %p36 = por %p34, %p35
    %p37 = scmp.ne.s32.totalorder %s26, %s29
    %p38 = scmp.eq.s32.totalorder %s21, 1
    %p39 = por %p37, %p38
    %p40 = scmp.ne.s32.totalorder %s29, %s30
    %p41 = scmp.eq.s32.totalorder %s21, 0
    %p42 = por %p40, %p41
    %p43 = scmp.ne.s32.totalorder %s29, %s30
    %p44 = scmp.eq.s32.totalorder %s22, 1
    %p45 = por %p43, %p44
    %p47 = scmp.ne.s32.totalorder %s30, %s46
    %p48 = scmp.eq.s32.totalorder %s22, 0
    %p49 = por %p47, %p48
    %s50 = ssub.s32 %s16, %s23
    %p51 = scmp.eq.s32.totalorder %s50, 0
    %s53 = sadd.s32 %s52, 1
    %s54 = scalar_select %p51, %s52, %s53
    %p57 = pneg %p51
    %p58 = scmp.eq.s32.totalorder %s16, 1
    %p59 = por %p57, %p58
    %p60 = scmp.ne.s32.totalorder %s52, %s55
    %p61 = scmp.eq.s32.totalorder %s16, 0
    %p62 = por %p60, %p61
    %p63 = scmp.ne.s32.totalorder %s52, %s55
    %p64 = scmp.eq.s32.totalorder %s21, 1
    %p65 = por %p63, %p64
    %p66 = scmp.ne.s32.totalorder %s55, %s56
    %p67 = scmp.eq.s32.totalorder %s21, 0
    %p68 = por %p66, %p67
    %p69 = scmp.ne.s32.totalorder %s55, %s56
    %p70 = scmp.eq.s32.totalorder %s22, 1
    %p71 = por %p69, %p70
    %p73 = scmp.ne.s32.totalorder %s56, %s72
    %p74 = scmp.eq.s32.totalorder %s22, 0
    %p75 = por %p73, %p74
    %s76 = ssub.s32 %s16, %s23
    %p77 = scmp.eq.s32.totalorder %s76, 0
    %s79 = sadd.s32 %s78, 1
    %s80 = scalar_select %p77, %s78, %s79
    %p83 = pneg %p77
    %p84 = scmp.eq.s32.totalorder %s16, 1
    %p85 = por %p83, %p84
    %p86 = scmp.ne.s32.totalorder %s78, %s81
    %p87 = scmp.eq.s32.totalorder %s16, 0
    %p88 = por %p86, %p87
    %p89 = scmp.ne.s32.totalorder %s78, %s81
    %p90 = scmp.eq.s32.totalorder %s21, 1
    %p91 = por %p89, %p90
    %p92 = scmp.ne.s32.totalorder %s81, %s82
    %p93 = scmp.eq.s32.totalorder %s21, 0
    %p94 = por %p92, %p93
    %p95 = scmp.ne.s32.totalorder %s81, %s82
    %p96 = scmp.eq.s32.totalorder %s22, 1
    %p97 = por %p95, %p96
    %p99 = scmp.ne.s32.totalorder %s82, %s98
    %p100 = scmp.eq.s32.totalorder %s22, 0
    %p101 = por %p99, %p100
    %s103 = sadd.s32 %s102, 1
    %p106 = scmp.eq.s32.totalorder %s16, 1
    %p107 = scmp.ne.s32.totalorder %s102, %s104
    %p108 = scmp.eq.s32.totalorder %s16, 0
    %p109 = por %p107, %p108
    %p110 = scmp.ne.s32.totalorder %s102, %s104
    %p111 = scmp.eq.s32.totalorder %s21, 1
    %p112 = por %p110, %p111
    %p113 = scmp.ne.s32.totalorder %s104, %s105
    %p114 = scmp.eq.s32.totalorder %s21, 0
    %p115 = por %p113, %p114
    %p116 = scmp.ne.s32.totalorder %s104, %s105
    %p117 = scmp.eq.s32.totalorder %s22, 1
    %p118 = por %p116, %p117
    %p120 = scmp.ne.s32.totalorder %s105, %s119
    %p121 = scmp.eq.s32.totalorder %s22, 0
    %p122 = por %p120, %p121
    %s124 = sadd.s32 %s123, 1
    %p127 = scmp.eq.s32.totalorder %s16, 1
    %p128 = scmp.ne.s32.totalorder %s123, %s125
    %p129 = scmp.eq.s32.totalorder %s16, 0
    %p130 = por %p128, %p129
    %p131 = scmp.ne.s32.totalorder %s123, %s125
    %p132 = scmp.eq.s32.totalorder %s21, 1
    %p133 = por %p131, %p132
    %p134 = scmp.ne.s32.totalorder %s125, %s126
    %p135 = scmp.eq.s32.totalorder %s21, 0
    %p136 = por %p134, %p135
    %p137 = scmp.ne.s32.totalorder %s125, %s126
    %p138 = scmp.eq.s32.totalorder %s22, 1
    %p139 = por %p137, %p138
    %p141 = scmp.ne.s32.totalorder %s126, %s140
    %p142 = scmp.eq.s32.totalorder %s22, 0
    %p143 = por %p141, %p142
    %s145 = sadd.s32 %s144, 1
    %p148 = scmp.eq.s32.totalorder %s16, 1
    %p149 = scmp.ne.s32.totalorder %s144, %s146
    %p150 = scmp.eq.s32.totalorder %s16, 0
    %p151 = por %p149, %p150
    %p152 = scmp.ne.s32.totalorder %s144, %s146
    %p153 = scmp.eq.s32.totalorder %s21, 1
    %p154 = por %p152, %p153
    %p155 = scmp.ne.s32.totalorder %s146, %s147
    %p156 = scmp.eq.s32.totalorder %s21, 0
    %p157 = por %p155, %p156
    %p158 = scmp.ne.s32.totalorder %s146, %s147
    %p159 = scmp.eq.s32.totalorder %s22, 1
    %p160 = por %p158, %p159
    %p162 = scmp.ne.s32.totalorder %s147, %s161
    %p163 = scmp.eq.s32.totalorder %s22, 0
    %p164 = por %p162, %p163
    %s166 = sadd.s32 %s165, 1
    %p169 = scmp.eq.s32.totalorder %s16, 1
    %p170 = scmp.ne.s32.totalorder %s165, %s167
    %p171 = scmp.eq.s32.totalorder %s16, 0
    %p172 = por %p170, %p171
    %p173 = scmp.ne.s32.totalorder %s165, %s167
    %p174 = scmp.eq.s32.totalorder %s21, 1
    %p175 = por %p173, %p174
    %p176 = scmp.ne.s32.totalorder %s167, %s168
    %p177 = scmp.eq.s32.totalorder %s21, 0
    %p178 = por %p176, %p177
    %p179 = scmp.ne.s32.totalorder %s167, %s168
    %p180 = scmp.eq.s32.totalorder %s22, 1
    %p181 = por %p179, %p180
    %p183 = scmp.ne.s32.totalorder %s168, %s182
    %p184 = scmp.eq.s32.totalorder %s22, 0
    %p185 = por %p183, %p184
    %s186 = ssub.s32 %s16, %s23
    %p187 = scmp.eq.s32.totalorder %s186, 0
    %s189 = sadd.s32 %s188, 1
    %s190 = scalar_select %p187, %s188, %s189
    %p193 = pneg %p187
    %p194 = scmp.eq.s32.totalorder %s16, 1
    %p195 = por %p193, %p194
    %p196 = scmp.ne.s32.totalorder %s188, %s191
    %p197 = scmp.eq.s32.totalorder %s16, 0
    %p198 = por %p196, %p197
    %p199 = scmp.ne.s32.totalorder %s188, %s191
    %p200 = scmp.eq.s32.totalorder %s21, 1
    %p201 = por %p199, %p200
    %p202 = scmp.ne.s32.totalorder %s191, %s192
    %p203 = scmp.eq.s32.totalorder %s21, 0
    %p204 = por %p202, %p203
    %p205 = scmp.ne.s32.totalorder %s191, %s192
    %p206 = scmp.eq.s32.totalorder %s22, 1
    %p207 = por %p205, %p206
    %p209 = scmp.ne.s32.totalorder %s192, %s208
    %p210 = scmp.eq.s32.totalorder %s22, 0
    %p211 = por %p209, %p210
    %s212 = ssub.s32 %s16, %s23
    %p213 = scmp.eq.s32.totalorder %s212, 0
    %s215 = sadd.s32 %s214, 1
    %s216 = scalar_select %p213, %s214, %s215
    %p219 = pneg %p213
    %p220 = scmp.eq.s32.totalorder %s16, 1
    %p221 = por %p219, %p220
    %p222 = scmp.ne.s32.totalorder %s214, %s217
    %p223 = scmp.eq.s32.totalorder %s16, 0
    %p224 = por %p222, %p223
    %p225 = scmp.ne.s32.totalorder %s214, %s217
    %p226 = scmp.eq.s32.totalorder %s21, 1
    %p227 = por %p225, %p226
    %p228 = scmp.ne.s32.totalorder %s217, %s218
    %p229 = scmp.eq.s32.totalorder %s21, 0
    %p230 = por %p228, %p229
    %p231 = scmp.ne.s32.totalorder %s217, %s218
    %p232 = scmp.eq.s32.totalorder %s22, 1
    %p233 = por %p231, %p232
    %p235 = scmp.ne.s32.totalorder %s218, %s234
    %p236 = scmp.eq.s32.totalorder %s22, 0
    %p237 = por %p235, %p236
    %s238 = ssub.s32 %s16, %s23
    %p239 = scmp.eq.s32.totalorder %s238, 0
    %s241 = sadd.s32 %s240, 1
    %s242 = scalar_select %p239, %s240, %s241
    %p245 = pneg %p239
    %p246 = scmp.eq.s32.totalorder %s16, 1
    %p247 = por %p245, %p246
    %p248 = scmp.ne.s32.totalorder %s240, %s243
    %p249 = scmp.eq.s32.totalorder %s16, 0
    %p250 = por %p248, %p249
    %p251 = scmp.ne.s32.totalorder %s240, %s243
    %p252 = scmp.eq.s32.totalorder %s21, 1
    %p253 = por %p251, %p252
    %p254 = scmp.ne.s32.totalorder %s243, %s244
    %p255 = scmp.eq.s32.totalorder %s21, 0
    %p256 = por %p254, %p255
    %p257 = scmp.ne.s32.totalorder %s243, %s244
    %p258 = scmp.eq.s32.totalorder %s22, 1
    %p259 = por %p257, %p258
    %p261 = scmp.ne.s32.totalorder %s244, %s260
    %p262 = scmp.eq.s32.totalorder %s22, 0
    %p263 = por %p261, %p262
    %p264 = scmp.le.s32.totalorder 1, %s16
    %p265 = scmp.lt.s32.totalorder %s16, 3
    %p266 = pnand %p264, %p265
    %p267 = pneg %p266
    // Predicated region
    $region9: #{conv_lstm_grad_forward.1} parent=5 // pred_check
      _
    $region10: #{conv_lstm_grad_forward.1} parent=5 // pred_check_branch
      %269 = sbr.rel (%p266) target = $region12
    $region11: #{conv_lstm_grad_forward.1} parent=5 // pred_region
      %s270 = ssub.s32 %s16, 1
      // Predicated region
      $region13: #{conv_lstm_grad_forward.1} parent=11 // pred_check
        %p271 = pneg %p115
      $region14: #{conv_lstm_grad_forward.1} parent=11 // pred_check_branch
        %273 = sbr.rel (%p271) target = $region16
      $region15: #{conv_lstm_grad_forward.1} parent=11 // pred_region
        _
      $region16: #{conv_lstm_grad_forward.1} parent=11 // pred_fallthru
        _
      // Predicated region
      $region17: #{conv_lstm_grad_forward.1} parent=11 // pred_check
        %p274 = pneg %p136
      $region18: #{conv_lstm_grad_forward.1} parent=11 // pred_check_branch
        %276 = sbr.rel (%p274) target = $region20
      $region19: #{conv_lstm_grad_forward.1} parent=11 // pred_region
        _
      $region20: #{conv_lstm_grad_forward.1} parent=11 // pred_fallthru
        _
      // Predicated region
      $region21: #{conv_lstm_grad_forward.1} parent=11 // pred_check
        %p277 = pneg %p157
      $region22: #{conv_lstm_grad_forward.1} parent=11 // pred_check_branch
        %279 = sbr.rel (%p277) target = $region24
      $region23: #{conv_lstm_grad_forward.1} parent=11 // pred_region
        _
      $region24: #{conv_lstm_grad_forward.1} parent=11 // pred_fallthru
        _
      // Predicated region
      $region25: #{conv_lstm_grad_forward.1} parent=11 // pred_check
        %p280 = pneg %p178
      $region26: #{conv_lstm_grad_forward.1} parent=11 // pred_check_branch
        %282 = sbr.rel (%p280) target = $region28
      $region27: #{conv_lstm_grad_forward.1} parent=11 // pred_region
        _
      $region28: #{conv_lstm_grad_forward.1} parent=11 // pred_fallthru
        _
    $region12: #{conv_lstm_grad_forward.1} parent=5 // pred_fallthru
      _
    %p283 = scmp.lt.s32.totalorder %s16, 2
    // Predicated region
    $region29: #{conv_lstm_grad_forward.1} parent=5 // pred_check
      %p284 = pneg %p283
    $region30: #{conv_lstm_grad_forward.1} parent=5 // pred_check_branch
      %286 = sbr.rel (%p284) target = $region32
    $region31: #{conv_lstm_grad_forward.1} parent=5 // pred_region
      // Predicated region
      $region33: #{conv_lstm_grad_forward.1} parent=31 // pred_check
        %p287 = pneg %p36
      $region34: #{conv_lstm_grad_forward.1} parent=31 // pred_check_branch
        %289 = sbr.rel (%p287) target = $region36
      $region35: #{conv_lstm_grad_forward.1} parent=31 // pred_region
        %p290 = scmp.lt.s32.totalorder %s16, 1
        %s291 = scalar_select %p290, %s16, 1
        %s292 = smul.addr %s291, 2
        %s293 = smul.addr %s292, 4
        %s294 = scalar_lea.vmem %s0, %s293
      $region36: #{conv_lstm_grad_forward.1} parent=31 // pred_fallthru
        _
      // Predicated region
      $region37: #{conv_lstm_grad_forward.1} parent=31 // pred_check
        %p295 = pneg %p62
      $region38: #{conv_lstm_grad_forward.1} parent=31 // pred_check_branch
        %297 = sbr.rel (%p295) target = $region40
      $region39: #{conv_lstm_grad_forward.1} parent=31 // pred_region
        %p298 = scmp.lt.s32.totalorder %s16, 1
        %s299 = scalar_select %p298, %s16, 1
        %s300 = smul.addr %s299, 8
        %s301 = smul.addr %s300, 8
        %s302 = scalar_lea.vmem %s1, %s301
      $region40: #{conv_lstm_grad_forward.1} parent=31 // pred_fallthru
        _
      // Predicated region
      $region41: #{conv_lstm_grad_forward.1} parent=31 // pred_check
        %p303 = pneg %p88
      $region42: #{conv_lstm_grad_forward.1} parent=31 // pred_check_branch
        %305 = sbr.rel (%p303) target = $region44
      $region43: #{conv_lstm_grad_forward.1} parent=31 // pred_region
        %p306 = scmp.lt.s32.totalorder %s16, 1
        %s307 = scalar_select %p306, %s16, 1
        %s308 = smul.addr %s307, 8
        %s309 = smul.addr %s308, 8
        %s310 = scalar_lea.vmem %s2, %s309
      $region44: #{conv_lstm_grad_forward.1} parent=31 // pred_fallthru
        _
    $region32: #{conv_lstm_grad_forward.1} parent=5 // pred_fallthru
      _
    %p311 = scmp.le.s32.totalorder 1, %s16
    %p312 = scmp.lt.s32.totalorder %s16, 3
    %p313 = pnand %p311, %p312
    %p314 = pneg %p313
    // Predicated region
    $region45: #{conv_lstm_grad_forward.1} parent=5 // pred_check
      _
    $region46: #{conv_lstm_grad_forward.1} parent=5 // pred_check_branch
      %316 = sbr.rel (%p313) target = $region48
    $region47: #{conv_lstm_grad_forward.1} parent=5 // pred_region
      %s317 = ssub.s32 %s16, 1
      %p318 = scmp.lt.s32.totalorder %s21, 1
      %s319 = scalar_select %p318, %s21, 1
      %s320 = smul.addr %s319, 2
      %s321 = smul.addr %s320, 4
      %s322 = scalar_lea.vmem %s0, %s321
      %p323 = pneg %p42
      %p324 = pneg %p39
      %p325 = scmp.lt.s32.totalorder %s21, 1
      %s326 = scalar_select %p325, %s21, 1
      %s327 = smul.addr %s326, 8
      %s328 = smul.addr %s327, 8
      %s329 = scalar_lea.vmem %s1, %s328
      %p330 = pneg %p68
      %p331 = pneg %p65
      %p332 = scmp.lt.s32.totalorder %s21, 1
      %s333 = scalar_select %p332, %s21, 1
      %s334 = smul.addr %s333, 8
      %s335 = smul.addr %s334, 8
      %s336 = scalar_lea.vmem %s2, %s335
      %p337 = pneg %p94
      %p338 = pneg %p91
      %p339 = pneg %p115
      %p340 = pneg %p112
      %p341 = pneg %p136
      %p342 = pneg %p133
      %p343 = pneg %p157
      %p344 = pneg %p154
      %p345 = pneg %p178
      %p346 = pneg %p175
      %p347 = pneg %p204
      %p348 = pneg %p201
      %p349 = scmp.lt.s32.totalorder %s21, 1
      %s350 = scalar_select %p349, %s21, 1
      %s351 = smul.addr %s350, 2
      %s352 = smul.addr %s351, 4
      %s353 = scalar_lea.vmem %s7, %s352
      %p354 = pneg %p230
      %p355 = pneg %p227
      %p356 = scmp.lt.s32.totalorder %s21, 1
      %s357 = scalar_select %p356, %s21, 1
      %s358 = smul.addr %s357, 8
      %s359 = smul.addr %s358, 8
      %s360 = scalar_lea.vmem %s8, %s359
      %p361 = pneg %p256
      %p362 = pneg %p253
      %p363 = scmp.lt.s32.totalorder %s21, 1
      %s364 = scalar_select %p363, %s21, 1
      %s365 = smul.addr %s364, 8
      %s366 = smul.addr %s365, 8
      %s367 = scalar_lea.vmem %s9, %s366
      %p368 = scmp.lt.s32.totalorder %s21, 1
      %s369 = scalar_select %p368, %s21, 1
      %s370 = smul.addr %s369, 2
      %s371 = smul.addr %s370, 4
      %s372 = scalar_lea.vmem %s0, %s371
      %p373 = scmp.lt.s32.totalorder %s21, 1
      %s374 = scalar_select %p373, %s21, 1
      %s375 = smul.addr %s374, 8
      %s376 = smul.addr %s375, 8
      %s377 = scalar_lea.vmem %s1, %s376
      %p378 = scmp.lt.s32.totalorder %s21, 1
      %s379 = scalar_select %p378, %s21, 1
      %s380 = smul.addr %s379, 8
      %s381 = smul.addr %s380, 8
      %s382 = scalar_lea.vmem %s2, %s381
      %p383 = scmp.lt.s32.totalorder %s21, 1
      %s384 = scalar_select %p383, %s21, 1
      %s385 = smul.addr %s384, 2
      %s386 = smul.addr %s385, 4
      %s387 = scalar_lea.vmem %s7, %s386
      %p388 = scmp.lt.s32.totalorder %s21, 1
      %s389 = scalar_select %p388, %s21, 1
      %s390 = smul.addr %s389, 8
      %s391 = smul.addr %s390, 8
      %s392 = scalar_lea.vmem %s8, %s391
      %p393 = scmp.lt.s32.totalorder %s21, 1
      %s394 = scalar_select %p393, %s21, 1
      %s395 = smul.addr %s394, 8
      %s396 = smul.addr %s395, 8
      %s397 = scalar_lea.vmem %s9, %s396
      %v398 = vlaneseq
      %v399 = vand.u32 %v398, 127
      %v400 = vadd.s32 %v399, 128
      %vm401 = vcmp.lt.s32.totalorder %v399, 0
      %v402 = vsub.s32 0, %v399
      %v403 = vsel %vm401, %v402, %v399
      %v404 = vshrl.u32 %v403, 4
      %v405 = vand.u32 %v403, 15
      %v406 = vsub.s32 0, %v405
      %v407 = vsel %vm401, %v406, %v405
      %vm408 = vcmp.lt.s32.totalorder %v400, 0
      %v409 = vsub.s32 0, %v400
      %v410 = vsel %vm408, %v409, %v400
      %v411 = vshrl.u32 %v410, 4
      %v412 = vand.u32 %v410, 15
      %v413 = vsub.s32 0, %v412
      %v414 = vsel %vm408, %v413, %v412
      %vm415 = vcmp.ne.s32.totalorder %v407, 0
      %vm416 = vcmp.ne.s32.totalorder %v414, 0
      %vm417 = vcmp.lt.s32.totalorder %v407, 0
      %vm418 = vcmp.lt.s32.totalorder %v414, 0
      %vm419 = vmand %vm417, %vm415
      %vm420 = vmand %vm418, %vm416
      %v421 = vadd.s32 %v407, 16
      %v422 = vadd.s32 %v414, 16
      %v423 = vsel %vm419, %v421, %v407
      %v424 = vsel %vm420, %v422, %v414
      %vm425 = vcmp.ne.s32.totalorder %v423, 0
      %vm426 = vcmp.ne.s32.totalorder %v424, 0
      %v427 = vsel %vm425, 1, 0
      %v428 = vsel %vm426, 1, 0
      %v429 = vcvt.s32.f32 %v427
      %v430 = vcvt.s32.f32 %v428
      %vm431 = vcmp.ne.s32.totalorder %v423, 15
      %vm432 = vcmp.ne.s32.totalorder %v424, 15
      %v433 = vsel %vm431, 1, 0
      %v434 = vsel %vm432, 1, 0
      %v435 = vcvt.s32.f32 %v433
      %v436 = vcvt.s32.f32 %v434
      %437 = vst [vmem:[#allocation2] sm:$0xff] 0.0
      %438 = vst [vmem:[#allocation2 + $0x8] sm:$0xff] 0.0
      %439 = vst [vmem:[#allocation2 + $0x10] sm:$0xff] 0.0
      %vm440 = vcmask 138240
      %441 = vst.msk [vmem:[#allocation2 + $0x18] sm:$0xff] %vm440, 0.0
      %442 = vst [vmem:[#allocation2 + $0x20] sm:$0xff] 0.0
      %443 = vst [vmem:[#allocation2 + $0x28] sm:$0xff] 0.0
      %444 = vst [vmem:[#allocation2 + $0x30] sm:$0xff] 0.0
      %445 = vst.msk [vmem:[#allocation2 + $0x38] sm:$0xff] %vm440, 0.0
      %446 = vst [vmem:[#allocation2 + $0x40] sm:$0xff] 0.0
      %447 = vst [vmem:[#allocation2 + $0x48] sm:$0xff] 0.0
      %448 = vst [vmem:[#allocation2 + $0x50] sm:$0xff] 0.0
      %449 = vst.msk [vmem:[#allocation2 + $0x58] sm:$0xff] %vm440, 0.0
      %450 = vst [vmem:[#allocation2 + $0x60] sm:$0xff] 0.0
      %451 = vst [vmem:[#allocation2 + $0x68] sm:$0xff] 0.0
      %452 = vst [vmem:[#allocation2 + $0x70] sm:$0xff] 0.0
      %453 = vst.msk [vmem:[#allocation2 + $0x78] sm:$0xff] %vm440, 0.0
      %454 = vst [vmem:[#allocation2 + $0x80] sm:$0xff] 0.0
      %455 = vst [vmem:[#allocation2 + $0x88] sm:$0xff] 0.0
      %456 = vst [vmem:[#allocation2 + $0x90] sm:$0xff] 0.0
      %457 = vst.msk [vmem:[#allocation2 + $0x98] sm:$0xff] %vm440, 0.0
      %v458 = vld [vmem:[%s377] sm:$0xff]
      %v459 = vld [vmem:[%s377 + $0x8] sm:$0xff]
      %v460 = vld [vmem:[%s377 + $0x10] sm:$0xff]
      %v461 = vld [vmem:[%s377 + $0x18] sm:$0xff]
      %v462 = vld [vmem:[%s377 + $0x20] sm:$0xff]
      %v463 = vld [vmem:[%s377 + $0x28] sm:$0xff]
      %v464 = vld [vmem:[%s377 + $0x30] sm:$0xff]
      %v465 = vld [vmem:[%s377 + $0x38] sm:$0xff]
      %466 = vst [vmem:[#allocation2 + $0x8] sm:$0xff] %v458
      %467 = vst [vmem:[#allocation2 + $0x10] sm:$0xff] %v459
      %468 = vst [vmem:[#allocation2 + $0x28] sm:$0xff] %v460
      %469 = vst [vmem:[#allocation2 + $0x30] sm:$0xff] %v461
      %470 = vst [vmem:[#allocation2 + $0x48] sm:$0xff] %v462
      %471 = vst [vmem:[#allocation2 + $0x50] sm:$0xff] %v463
      %472 = vst [vmem:[#allocation2 + $0x68] sm:$0xff] %v464
      %473 = vst [vmem:[#allocation2 + $0x70] sm:$0xff] %v465
      %v474 = vld [vmem:[%s372] sm:$0xff]
      %v476 = vcombine.high %v474, %v474
      %478 = vst [vmem:[#allocation2 + $0x88] sm:$0xf] %v474
      %479 = vst [vmem:[#allocation2 + $0x90] sm:$0xf] %v476
      %v480 = vld [vmem:[#allocation2] sm:$0xff]
      %v481 = vld [vmem:[#allocation2 + $0x8] sm:$0xff]
      %v482 = vld [vmem:[#allocation2 + $0x10] sm:$0xff]
      %v483 = vld [vmem:[#allocation2 + $0x20] sm:$0xff]
      %v484 = vld [vmem:[#allocation2 + $0x28] sm:$0xff]
      %v485 = vld [vmem:[#allocation2 + $0x30] sm:$0xff]
      %v486 = vld [vmem:[#allocation2 + $0x40] sm:$0xff]
      %v487 = vld [vmem:[#allocation2 + $0x48] sm:$0xff]
      %v488 = vld [vmem:[#allocation2 + $0x50] sm:$0xff]
      %v489 = vld [vmem:[#allocation2 + $0x60] sm:$0xff]
      %v490 = vld [vmem:[#allocation2 + $0x68] sm:$0xff]
      %v491 = vld [vmem:[#allocation2 + $0x70] sm:$0xff]
      %v492 = vld [vmem:[#allocation2 + $0x80] sm:$0xff]
      %v493 = vld [vmem:[#allocation2 + $0x88] sm:$0xff]
      %v494 = vld [vmem:[#allocation2 + $0x90] sm:$0xff]
      %497 = vrot.lane.b32.xlu0 %v429, 111
      %v498 = vpop.permute.xlu0 %497
      %499 = vrot.lane.b32.xlu0 %v430, 111
      %v500 = vpop.permute.xlu0 %499
      %vm501 = vcmask 908288
      %v502 = vsel %vm501, %v498, %v500
      %v506 = vmul.f32 %v480, %v498
      %v507 = vmul.f32 %v481, %v502
      %v508 = vmul.f32 %v482, %v500
      %v509 = vmul.f32 %v483, %v498
      %v510 = vmul.f32 %v484, %v502
      %v511 = vmul.f32 %v485, %v500
      %v512 = vmul.f32 %v486, %v498
      %v513 = vmul.f32 %v487, %v502
      %v514 = vmul.f32 %v488, %v500
      %v515 = vmul.f32 %v489, %v498
      %v516 = vmul.f32 %v490, %v502
      %v517 = vmul.f32 %v491, %v500
      %v518 = vmul.f32 %v492, %v498
      %v519 = vmul.f32 %v493, %v502
      %v520 = vmul.f32 %v494, %v500
      %v521 = vld [vmem:[%s3] sm:$0xff]
      %v522 = vld [vmem:[%s3 + $0x8] sm:$0xff]
      %v523 = vld [vmem:[%s3 + $0x10] sm:$0xff]
      %v524 = vld [vmem:[%s3 + $0x18] sm:$0xff]
      %v525 = vld [vmem:[%s3 + $0x20] sm:$0xff]
      %v526 = vld [vmem:[%s3 + $0x28] sm:$0xff]
      %v527 = vld [vmem:[%s3 + $0x30] sm:$0xff]
      %v528 = vld [vmem:[%s3 + $0x38] sm:$0xff]
      %v529 = vld [vmem:[%s3 + $0x40] sm:$0xff]
      %v530 = vld [vmem:[%s3 + $0x48] sm:$0xff]
      %v531 = vld [vmem:[%s3 + $0x50] sm:$0xff]
      %v532 = vld [vmem:[%s3 + $0x58] sm:$0xff]
      %v533 = vld [vmem:[%s3 + $0x60] sm:$0xff]
      %v534 = vld [vmem:[%s3 + $0x68] sm:$0xff]
      %v535 = vld [vmem:[%s3 + $0x70] sm:$0xff]
      %v536 = vld [vmem:[%s3 + $0x78] sm:$0xff]
      %s537 = scalar_lea.vmem %s3, 128
      %v538 = vld [vmem:[%s537] sm:$0xff]
      %v539 = vld [vmem:[%s537 + $0x8] sm:$0xff]
      %v540 = vld [vmem:[%s537 + $0x10] sm:$0xff]
      %v541 = vld [vmem:[%s537 + $0x18] sm:$0xff]
      %v542 = vld [vmem:[%s537 + $0x20] sm:$0xff]
      %v543 = vld [vmem:[%s537 + $0x28] sm:$0xff]
      %v544 = vld [vmem:[%s537 + $0x30] sm:$0xff]
      %v545 = vld [vmem:[%s537 + $0x38] sm:$0xff]
      %v546 = vld [vmem:[%s537 + $0x40] sm:$0xff]
      %v547 = vld [vmem:[%s537 + $0x48] sm:$0xff]
      %v548 = vld [vmem:[%s537 + $0x50] sm:$0xff]
      %v549 = vld [vmem:[%s537 + $0x58] sm:$0xff]
      %v550 = vld [vmem:[%s537 + $0x60] sm:$0xff]
      %v551 = vld [vmem:[%s537 + $0x68] sm:$0xff]
      %v552 = vld [vmem:[%s537 + $0x70] sm:$0xff]
      %v553 = vld [vmem:[%s537 + $0x78] sm:$0xff]
      %569 = vrot.lane.b32.xlu0 %v480, 16
      %v570 = vpop.permute.xlu0 %569
      %571 = vrot.lane.b32.xlu0 %v481, 16
      %v572 = vpop.permute.xlu0 %571
      %573 = vrot.lane.b32.xlu0 %v482, 16
      %v574 = vpop.permute.xlu0 %573
      %575 = vrot.lane.b32.xlu0 %v483, 16
      %v576 = vpop.permute.xlu0 %575
      %577 = vrot.lane.b32.xlu0 %v484, 16
      %v578 = vpop.permute.xlu0 %577
      %579 = vrot.lane.b32.xlu0 %v485, 16
      %v580 = vpop.permute.xlu0 %579
      %581 = vrot.lane.b32.xlu0 %v486, 16
      %v582 = vpop.permute.xlu0 %581
      %583 = vrot.lane.b32.xlu0 %v487, 16
      %v584 = vpop.permute.xlu0 %583
      %585 = vrot.lane.b32.xlu0 %v488, 16
      %v586 = vpop.permute.xlu0 %585
      %587 = vrot.lane.b32.xlu0 %v489, 16
      %v588 = vpop.permute.xlu0 %587
      %589 = vrot.lane.b32.xlu0 %v490, 16
      %v590 = vpop.permute.xlu0 %589
      %591 = vrot.lane.b32.xlu0 %v491, 16
      %v592 = vpop.permute.xlu0 %591
      %593 = vrot.lane.b32.xlu0 %v492, 16
      %v594 = vpop.permute.xlu0 %593
      %595 = vrot.lane.b32.xlu0 %v493, 16
      %v596 = vpop.permute.xlu0 %595
      %597 = vrot.lane.b32.xlu0 %v494, 16
      %v598 = vpop.permute.xlu0 %597
      %vm599 = vcmask 130048
      %v600 = vsel %vm599, %v570, %v572
      %v601 = vsel %vm599, %v572, %v574
      %v602 = vsel %vm599, %v576, %v578
      %v603 = vsel %vm599, %v578, %v580
      %v604 = vsel %vm599, %v582, %v584
      %v605 = vsel %vm599, %v584, %v586
      %v606 = vsel %vm599, %v588, %v590
      %v607 = vsel %vm599, %v590, %v592
      %v608 = vsel %vm599, %v594, %v596
      %v609 = vsel %vm599, %v596, %v598
      %vm620 = vcmask 326656
      %v622 = vsel %vm620, %v538, 0
      %v625 = vsel %vm620, %v539, 0
      %v628 = vsel %vm620, %v540, 0
      %v631 = vsel %vm620, %v541, 0
      %v634 = vsel %vm620, %v542, 0
      %v637 = vsel %vm620, %v543, 0
      %v640 = vsel %vm620, %v544, 0
      %v643 = vsel %vm620, %v545, 0
      %v646 = vsel %vm620, %v546, 0
      %v649 = vsel %vm620, %v547, 0
      %v652 = vsel %vm620, %v548, 0
      %v655 = vsel %vm620, %v549, 0
      %v658 = vsel %vm620, %v550, 0
      %v661 = vsel %vm620, %v551, 0
      %v664 = vsel %vm620, %v552, 0
      %v667 = vsel %vm620, %v553, 0
      %669 = vmatprep.subr.mxu0 0.0
      %670 = vmatpush1.msra.mxu0 0.0
      %671 = vmatprep.subr.mxu0 0.0
      %672 = vmatpush1.msra.mxu0 0.0
      %673 = vmatprep.subr.mxu0 0.0
      %674 = vmatpush1.msra.mxu0 0.0
      %675 = vmatprep.subr.mxu0 0.0
      %676 = vmatpush1.msra.mxu0 0.0
      %677 = vmatprep.subr.mxu0 0.0
      %678 = vmatpush1.msra.mxu0 0.0
      %679 = vmatprep.subr.mxu0 0.0
      %680 = vmatpush1.msra.mxu0 0.0
      %681 = vmatprep.subr.mxu0 0.0
      %682 = vmatpush1.msra.mxu0 0.0
      %683 = vmatprep.subr.mxu0 0.0
      %684 = vmatpush1.msra.mxu0 0.0
      %685 = vmatprep.subr.mxu0 0.0
      %686 = vmatpush1.msra.mxu0 0.0
      %687 = vmatprep.subr.mxu0 0.0
      %688 = vmatpush1.msra.mxu0 0.0
      %689 = vmatprep.subr.mxu0 0.0
      %690 = vmatpush1.msra.mxu0 0.0
      %691 = vmatprep.subr.mxu0 %v609
      %692 = vmatpush1.msra.mxu0 %v608
      %693 = vmatprep.subr.mxu0 %v607
      %694 = vmatpush1.msra.mxu0 %v606
      %695 = vmatprep.subr.mxu0 %v605
      %696 = vmatpush1.msra.mxu0 %v604
      %697 = vmatprep.subr.mxu0 %v603
      %698 = vmatpush1.msra.mxu0 %v602
      %699 = vmatprep.subr.mxu0 %v601
      %700 = vmatpush1.msra.mxu0 %v600
      %701 = vmatprep.subr.mxu0 0.0
      %702 = vmatpush2.msra.mxu0 0.0
      %703 = vmatprep.subr.mxu0 0.0
      %704 = vmatpush2.msra.mxu0 0.0
      %705 = vmatprep.subr.mxu0 0.0
      %706 = vmatpush2.msra.mxu0 0.0
      %707 = vmatprep.subr.mxu0 0.0
      %708 = vmatpush2.msra.mxu0 0.0
      %709 = vmatprep.subr.mxu0 0.0
      %710 = vmatpush2.msra.mxu0 0.0
      %711 = vmatprep.subr.mxu0 0.0
      %712 = vmatpush2.msra.mxu0 0.0
      %713 = vmatprep.subr.mxu0 0.0
      %714 = vmatpush2.msra.mxu0 0.0
      %715 = vmatprep.subr.mxu0 0.0
      %716 = vmatpush2.msra.mxu0 0.0
      %717 = vmatprep.subr.mxu0 0.0
      %718 = vmatpush2.msra.mxu0 0.0
      %719 = vmatprep.subr.mxu0 0.0
      %720 = vmatpush2.msra.mxu0 0.0
      %721 = vmatprep.subr.mxu0 0.0
      %722 = vmatpush2.msra.mxu0 0.0
      %723 = vmatprep.subr.mxu0 0.0
      %724 = vmatpush2.msra.mxu0 0.0
      %725 = vmatprep.subr.mxu0 0.0
      %726 = vmatpush2.msra.mxu0 0.0
      %727 = vmatprep.subr.mxu0 0.0
      %728 = vmatpush2.msra.mxu0 0.0
      %729 = vmatprep.subr.mxu0 0.0
      %730 = vmatpush2.msra.mxu0 0.0
      %731 = vmatprep.subr.mxu0 0.0
      %732 = vmatpush2.msra.mxu0 0.0
      %733 = vmatprep.mubr.f32.mxu0 0.0
      %734 = vmatmul.mubr.f32.gmra.mxu0 %v622
      %v735 = vpop.f32.mrf.mxu0
      %v736 = vadd.f32 0.0, %v735
      %v737 = vpop.f32.mrf.mxu0
      %v738 = vadd.f32 0.0, %v737
      %739 = vmatprep.mubr.f32.mxu0 0.0
      %740 = vmatmul.mubr.f32.gmra.mxu0 %v625
      %v741 = vpop.f32.mrf.mxu0
      %v742 = vadd.f32 0.0, %v741
      %v743 = vpop.f32.mrf.mxu0
      %v744 = vadd.f32 0.0, %v743
      %745 = vmatprep.mubr.f32.mxu0 0.0
      %746 = vmatmul.mubr.f32.gmra.mxu0 %v628
      %v747 = vpop.f32.mrf.mxu0
      %v748 = vadd.f32 0.0, %v747
      %v749 = vpop.f32.mrf.mxu0
      %v750 = vadd.f32 0.0, %v749
      %751 = vmatprep.mubr.f32.mxu0 0.0
      %752 = vmatmul.mubr.f32.gmra.mxu0 %v631
      %v753 = vpop.f32.mrf.mxu0
      %v754 = vadd.f32 0.0, %v753
      %v755 = vpop.f32.mrf.mxu0
      %v756 = vadd.f32 0.0, %v755
      %757 = vmatprep.mubr.f32.mxu0 0.0
      %758 = vmatmul.mubr.f32.gmra.mxu0 %v634
      %v759 = vpop.f32.mrf.mxu0
      %v760 = vadd.f32 0.0, %v759
      %v761 = vpop.f32.mrf.mxu0
      %v762 = vadd.f32 0.0, %v761
      %763 = vmatprep.mubr.f32.mxu0 0.0
      %764 = vmatmul.mubr.f32.gmra.mxu0 %v637
      %v765 = vpop.f32.mrf.mxu0
      %v766 = vadd.f32 0.0, %v765
      %v767 = vpop.f32.mrf.mxu0
      %v768 = vadd.f32 0.0, %v767
      %769 = vmatprep.mubr.f32.mxu0 0.0
      %770 = vmatmul.mubr.f32.gmra.mxu0 %v640
      %v771 = vpop.f32.mrf.mxu0
      %v772 = vadd.f32 0.0, %v771
      %v773 = vpop.f32.mrf.mxu0
      %v774 = vadd.f32 0.0, %v773
      %775 = vmatprep.mubr.f32.mxu0 0.0
      %776 = vmatmul.mubr.f32.gmra.mxu0 %v643
      %v777 = vpop.f32.mrf.mxu0
      %v778 = vadd.f32 0.0, %v777
      %v779 = vpop.f32.mrf.mxu0
      %v780 = vadd.f32 0.0, %v779
      %781 = vmatprep.mubr.f32.mxu0 0.0
      %782 = vmatmul.mubr.f32.gmra.mxu0 %v646
      %v783 = vpop.f32.mrf.mxu0
      %v784 = vadd.f32 0.0, %v783
      %v785 = vpop.f32.mrf.mxu0
      %v786 = vadd.f32 0.0, %v785
      %787 = vmatprep.mubr.f32.mxu0 0.0
      %788 = vmatmul.mubr.f32.gmra.mxu0 %v649
      %v789 = vpop.f32.mrf.mxu0
      %v790 = vadd.f32 0.0, %v789
      %v791 = vpop.f32.mrf.mxu0
      %v792 = vadd.f32 0.0, %v791
      %793 = vmatprep.mubr.f32.mxu0 0.0
      %794 = vmatmul.mubr.f32.gmra.mxu0 %v652
      %v795 = vpop.f32.mrf.mxu0
      %v796 = vadd.f32 0.0, %v795
      %v797 = vpop.f32.mrf.mxu0
      %v798 = vadd.f32 0.0, %v797
      %799 = vmatprep.mubr.f32.mxu0 0.0
      %800 = vmatmul.mubr.f32.gmra.mxu0 %v655
      %v801 = vpop.f32.mrf.mxu0
      %v802 = vadd.f32 0.0, %v801
      %v803 = vpop.f32.mrf.mxu0
      %v804 = vadd.f32 0.0, %v803
      %805 = vmatprep.mubr.f32.mxu0 0.0
      %806 = vmatmul.mubr.f32.gmra.mxu0 %v658
      %v807 = vpop.f32.mrf.mxu0
      %v808 = vadd.f32 0.0, %v807
      %v809 = vpop.f32.mrf.mxu0
      %v810 = vadd.f32 0.0, %v809
      %811 = vmatprep.mubr.f32.mxu0 0.0
      %812 = vmatmul.mubr.f32.gmra.mxu0 %v661
      %v813 = vpop.f32.mrf.mxu0
      %v814 = vadd.f32 0.0, %v813
      %v815 = vpop.f32.mrf.mxu0
      %v816 = vadd.f32 0.0, %v815
      %817 = vmatprep.mubr.f32.mxu0 0.0
      %818 = vmatmul.mubr.f32.gmra.mxu0 %v664
      %v819 = vpop.f32.mrf.mxu0
      %v820 = vadd.f32 0.0, %v819
      %v821 = vpop.f32.mrf.mxu0
      %v822 = vadd.f32 0.0, %v821
      %823 = vmatprep.mubr.f32.mxu0 0.0
      %824 = vmatmul.mubr.f32.gmra.mxu0 %v667
      %v825 = vpop.f32.mrf.mxu0
      %v826 = vadd.f32 0.0, %v825
      %v827 = vpop.f32.mrf.mxu0
      %v828 = vadd.f32 0.0, %v827
      %829 = vdwg.mxu0
      %845 = vrot.lane.b32.xlu0 %v506, 17
      %v846 = vpop.permute.xlu0 %845
      %847 = vrot.lane.b32.xlu0 %v507, 17
      %v848 = vpop.permute.xlu0 %847
      %849 = vrot.lane.b32.xlu0 %v508, 17
      %v850 = vpop.permute.xlu0 %849
      %851 = vrot.lane.b32.xlu0 %v509, 17
      %v852 = vpop.permute.xlu0 %851
      %853 = vrot.lane.b32.xlu0 %v510, 17
      %v854 = vpop.permute.xlu0 %853
      %855 = vrot.lane.b32.xlu0 %v511, 17
      %v856 = vpop.permute.xlu0 %855
      %857 = vrot.lane.b32.xlu0 %v512, 17
      %v858 = vpop.permute.xlu0 %857
      %859 = vrot.lane.b32.xlu0 %v513, 17
      %v860 = vpop.permute.xlu0 %859
      %861 = vrot.lane.b32.xlu0 %v514, 17
      %v862 = vpop.permute.xlu0 %861
      %863 = vrot.lane.b32.xlu0 %v515, 17
      %v864 = vpop.permute.xlu0 %863
      %865 = vrot.lane.b32.xlu0 %v516, 17
      %v866 = vpop.permute.xlu0 %865
      %867 = vrot.lane.b32.xlu0 %v517, 17
      %v868 = vpop.permute.xlu0 %867
      %869 = vrot.lane.b32.xlu0 %v518, 17
      %v870 = vpop.permute.xlu0 %869
      %871 = vrot.lane.b32.xlu0 %v519, 17
      %v872 = vpop.permute.xlu0 %871
      %873 = vrot.lane.b32.xlu0 %v520, 17
      %v874 = vpop.permute.xlu0 %873
      %v875 = vsel %vm440, %v846, %v848
      %v876 = vsel %vm440, %v848, %v850
      %v877 = vsel %vm440, %v852, %v854
      %v878 = vsel %vm440, %v854, %v856
      %v879 = vsel %vm440, %v858, %v860
      %v880 = vsel %vm440, %v860, %v862
      %v881 = vsel %vm440, %v864, %v866
      %v882 = vsel %vm440, %v866, %v868
      %v883 = vsel %vm440, %v870, %v872
      %v884 = vsel %vm440, %v872, %v874
      %v896 = vsel %vm620, %v521, 0
      %v899 = vsel %vm620, %v522, 0
      %v902 = vsel %vm620, %v523, 0
      %v905 = vsel %vm620, %v524, 0
      %v908 = vsel %vm620, %v525, 0
      %v911 = vsel %vm620, %v526, 0
      %v914 = vsel %vm620, %v527, 0
      %v917 = vsel %vm620, %v528, 0
      %v920 = vsel %vm620, %v529, 0
      %v923 = vsel %vm620, %v530, 0
      %v926 = vsel %vm620, %v531, 0
      %v929 = vsel %vm620, %v532, 0
      %v932 = vsel %vm620, %v533, 0
      %v935 = vsel %vm620, %v534, 0
      %v938 = vsel %vm620, %v535, 0
      %v941 = vsel %vm620, %v536, 0
      %943 = vmatprep.subr.mxu0 0.0
      %944 = vmatpush1.msra.mxu0 0.0
      %945 = vmatprep.subr.mxu0 0.0
      %946 = vmatpush1.msra.mxu0 0.0
      %947 = vmatprep.subr.mxu0 0.0
      %948 = vmatpush1.msra.mxu0 0.0
      %949 = vmatprep.subr.mxu0 0.0
      %950 = vmatpush1.msra.mxu0 0.0
      %951 = vmatprep.subr.mxu0 0.0
      %952 = vmatpush1.msra.mxu0 0.0
      %953 = vmatprep.subr.mxu0 0.0
      %954 = vmatpush1.msra.mxu0 0.0
      %955 = vmatprep.subr.mxu0 0.0
      %956 = vmatpush1.msra.mxu0 0.0
      %957 = vmatprep.subr.mxu0 0.0
      %958 = vmatpush1.msra.mxu0 0.0
      %959 = vmatprep.subr.mxu0 0.0
      %960 = vmatpush1.msra.mxu0 0.0
      %961 = vmatprep.subr.mxu0 0.0
      %962 = vmatpush1.msra.mxu0 0.0
      %963 = vmatprep.subr.mxu0 0.0
      %964 = vmatpush1.msra.mxu0 0.0
      %965 = vmatprep.subr.mxu0 %v884
      %966 = vmatpush1.msra.mxu0 %v883
      %967 = vmatprep.subr.mxu0 %v882
      %968 = vmatpush1.msra.mxu0 %v881
      %969 = vmatprep.subr.mxu0 %v880
      %970 = vmatpush1.msra.mxu0 %v879
      %971 = vmatprep.subr.mxu0 %v878
      %972 = vmatpush1.msra.mxu0 %v877
      %973 = vmatprep.subr.mxu0 %v876
      %974 = vmatpush1.msra.mxu0 %v875
      %975 = vmatprep.subr.mxu0 0.0
      %976 = vmatpush2.msra.mxu0 0.0
      %977 = vmatprep.subr.mxu0 0.0
      %978 = vmatpush2.msra.mxu0 0.0
      %979 = vmatprep.subr.mxu0 0.0
      %980 = vmatpush2.msra.mxu0 0.0
      %981 = vmatprep.subr.mxu0 0.0
      %982 = vmatpush2.msra.mxu0 0.0
      %983 = vmatprep.subr.mxu0 0.0
      %984 = vmatpush2.msra.mxu0 0.0
      %985 = vmatprep.subr.mxu0 0.0
      %986 = vmatpush2.msra.mxu0 0.0
      %987 = vmatprep.subr.mxu0 0.0
      %988 = vmatpush2.msra.mxu0 0.0
      %989 = vmatprep.subr.mxu0 0.0
      %990 = vmatpush2.msra.mxu0 0.0
      %991 = vmatprep.subr.mxu0 0.0
      %992 = vmatpush2.msra.mxu0 0.0
      %993 = vmatprep.subr.mxu0 0.0
      %994 = vmatpush2.msra.mxu0 0.0
      %995 = vmatprep.subr.mxu0 0.0
      %996 = vmatpush2.msra.mxu0 0.0
      %997 = vmatprep.subr.mxu0 0.0
      %998 = vmatpush2.msra.mxu0 0.0
      %999 = vmatprep.subr.mxu0 0.0
      %1000 = vmatpush2.msra.mxu0 0.0
      %1001 = vmatprep.subr.mxu0 0.0
      %1002 = vmatpush2.msra.mxu0 0.0
      %1003 = vmatprep.subr.mxu0 0.0
      %1004 = vmatpush2.msra.mxu0 0.0
      %1005 = vmatprep.subr.mxu0 0.0
      %1006 = vmatpush2.msra.mxu0 0.0
      %1007 = vmatprep.mubr.f32.mxu0 0.0
      %1008 = vmatmul.mubr.f32.gmra.mxu0 %v896
      %v1009 = vpop.f32.mrf.mxu0
      %v1010 = vadd.f32 %v736, %v1009
      %v1011 = vpop.f32.mrf.mxu0
      %v1012 = vadd.f32 %v738, %v1011
      %1013 = vmatprep.mubr.f32.mxu0 0.0
      %1014 = vmatmul.mubr.f32.gmra.mxu0 %v899
      %v1015 = vpop.f32.mrf.mxu0
      %v1016 = vadd.f32 %v742, %v1015
      %v1017 = vpop.f32.mrf.mxu0
      %v1018 = vadd.f32 %v744, %v1017
      %1019 = vmatprep.mubr.f32.mxu0 0.0
      %1020 = vmatmul.mubr.f32.gmra.mxu0 %v902
      %v1021 = vpop.f32.mrf.mxu0
      %v1022 = vadd.f32 %v748, %v1021
      %v1023 = vpop.f32.mrf.mxu0
      %v1024 = vadd.f32 %v750, %v1023
      %1025 = vmatprep.mubr.f32.mxu0 0.0
      %1026 = vmatmul.mubr.f32.gmra.mxu0 %v905
      %v1027 = vpop.f32.mrf.mxu0
      %v1028 = vadd.f32 %v754, %v1027
      %v1029 = vpop.f32.mrf.mxu0
      %v1030 = vadd.f32 %v756, %v1029
      %1031 = vmatprep.mubr.f32.mxu0 0.0
      %1032 = vmatmul.mubr.f32.gmra.mxu0 %v908
      %v1033 = vpop.f32.mrf.mxu0
      %v1034 = vadd.f32 %v760, %v1033
      %v1035 = vpop.f32.mrf.mxu0
      %v1036 = vadd.f32 %v762, %v1035
      %1037 = vmatprep.mubr.f32.mxu0 0.0
      %1038 = vmatmul.mubr.f32.gmra.mxu0 %v911
      %v1039 = vpop.f32.mrf.mxu0
      %v1040 = vadd.f32 %v766, %v1039
      %v1041 = vpop.f32.mrf.mxu0
      %v1042 = vadd.f32 %v768, %v1041
      %1043 = vmatprep.mubr.f32.mxu0 0.0
      %1044 = vmatmul.mubr.f32.gmra.mxu0 %v914
      %v1045 = vpop.f32.mrf.mxu0
      %v1046 = vadd.f32 %v772, %v1045
      %v1047 = vpop.f32.mrf.mxu0
      %v1048 = vadd.f32 %v774, %v1047
      %1049 = vmatprep.mubr.f32.mxu0 0.0
      %1050 = vmatmul.mubr.f32.gmra.mxu0 %v917
      %v1051 = vpop.f32.mrf.mxu0
      %v1052 = vadd.f32 %v778, %v1051
      %v1053 = vpop.f32.mrf.mxu0
      %v1054 = vadd.f32 %v780, %v1053
      %1055 = vmatprep.mubr.f32.mxu0 0.0
      %1056 = vmatmul.mubr.f32.gmra.mxu0 %v920
      %v1057 = vpop.f32.mrf.mxu0
      %v1058 = vadd.f32 %v784, %v1057
      %v1059 = vpop.f32.mrf.mxu0
      %v1060 = vadd.f32 %v786, %v1059
      %1061 = vmatprep.mubr.f32.mxu0 0.0
      %1062 = vmatmul.mubr.f32.gmra.mxu0 %v923
      %v1063 = vpop.f32.mrf.mxu0
      %v1064 = vadd.f32 %v790, %v1063
      %v1065 = vpop.f32.mrf.mxu0
      %v1066 = vadd.f32 %v792, %v1065
      %1067 = vmatprep.mubr.f32.mxu0 0.0
      %1068 = vmatmul.mubr.f32.gmra.mxu0 %v926
      %v1069 = vpop.f32.mrf.mxu0
      %v1070 = vadd.f32 %v796, %v1069
      %v1071 = vpop.f32.mrf.mxu0
      %v1072 = vadd.f32 %v798, %v1071
      %1073 = vmatprep.mubr.f32.mxu0 0.0
      %1074 = vmatmul.mubr.f32.gmra.mxu0 %v929
      %v1075 = vpop.f32.mrf.mxu0
      %v1076 = vadd.f32 %v802, %v1075
      %v1077 = vpop.f32.mrf.mxu0
      %v1078 = vadd.f32 %v804, %v1077
      %1079 = vmatprep.mubr.f32.mxu0 0.0
      %1080 = vmatmul.mubr.f32.gmra.mxu0 %v932
      %v1081 = vpop.f32.mrf.mxu0
      %v1082 = vadd.f32 %v808, %v1081
      %v1083 = vpop.f32.mrf.mxu0
      %v1084 = vadd.f32 %v810, %v1083
      %1085 = vmatprep.mubr.f32.mxu0 0.0
      %1086 = vmatmul.mubr.f32.gmra.mxu0 %v935
      %v1087 = vpop.f32.mrf.mxu0
      %v1088 = vadd.f32 %v814, %v1087
      %v1089 = vpop.f32.mrf.mxu0
      %v1090 = vadd.f32 %v816, %v1089
      %1091 = vmatprep.mubr.f32.mxu0 0.0
      %1092 = vmatmul.mubr.f32.gmra.mxu0 %v938
      %v1093 = vpop.f32.mrf.mxu0
      %v1094 = vadd.f32 %v820, %v1093
      %v1095 = vpop.f32.mrf.mxu0
      %v1096 = vadd.f32 %v822, %v1095
      %1097 = vmatprep.mubr.f32.mxu0 0.0
      %1098 = vmatmul.mubr.f32.gmra.mxu0 %v941
      %v1099 = vpop.f32.mrf.mxu0
      %v1100 = vadd.f32 %v826, %v1099
      %v1101 = vpop.f32.mrf.mxu0
      %v1102 = vadd.f32 %v828, %v1101
      %1103 = vdwg.mxu0
      %1106 = vrot.lane.b32.xlu0 %v435, 113
      %v1107 = vpop.permute.xlu0 %1106
      %1108 = vrot.lane.b32.xlu0 %v436, 113
      %v1109 = vpop.permute.xlu0 %1108
      %vm1110 = vcmask 924672
      %v1111 = vsel %vm1110, %v1107, %v1109
      %v1115 = vmul.f32 %v480, %v1107
      %v1116 = vmul.f32 %v481, %v1111
      %v1117 = vmul.f32 %v482, %v1109
      %v1118 = vmul.f32 %v483, %v1107
      %v1119 = vmul.f32 %v484, %v1111
      %v1120 = vmul.f32 %v485, %v1109
      %v1121 = vmul.f32 %v486, %v1107
      %v1122 = vmul.f32 %v487, %v1111
      %v1123 = vmul.f32 %v488, %v1109
      %v1124 = vmul.f32 %v489, %v1107
      %v1125 = vmul.f32 %v490, %v1111
      %v1126 = vmul.f32 %v491, %v1109
      %v1127 = vmul.f32 %v492, %v1107
      %v1128 = vmul.f32 %v493, %v1111
      %v1129 = vmul.f32 %v494, %v1109
      %s1130 = scalar_lea.vmem %s3, 256
      %v1131 = vld [vmem:[%s1130] sm:$0xff]
      %v1132 = vld [vmem:[%s1130 + $0x8] sm:$0xff]
      %v1133 = vld [vmem:[%s1130 + $0x10] sm:$0xff]
      %v1134 = vld [vmem:[%s1130 + $0x18] sm:$0xff]
      %v1135 = vld [vmem:[%s1130 + $0x20] sm:$0xff]
      %v1136 = vld [vmem:[%s1130 + $0x28] sm:$0xff]
      %v1137 = vld [vmem:[%s1130 + $0x30] sm:$0xff]
      %v1138 = vld [vmem:[%s1130 + $0x38] sm:$0xff]
      %v1139 = vld [vmem:[%s1130 + $0x40] sm:$0xff]
      %v1140 = vld [vmem:[%s1130 + $0x48] sm:$0xff]
      %v1141 = vld [vmem:[%s1130 + $0x50] sm:$0xff]
      %v1142 = vld [vmem:[%s1130 + $0x58] sm:$0xff]
      %v1143 = vld [vmem:[%s1130 + $0x60] sm:$0xff]
      %v1144 = vld [vmem:[%s1130 + $0x68] sm:$0xff]
      %v1145 = vld [vmem:[%s1130 + $0x70] sm:$0xff]
      %v1146 = vld [vmem:[%s1130 + $0x78] sm:$0xff]
      %1162 = vrot.lane.b32.xlu0 %v1115, 15
      %v1163 = vpop.permute.xlu0 %1162
      %1164 = vrot.lane.b32.xlu0 %v1116, 15
      %v1165 = vpop.permute.xlu0 %1164
      %1166 = vrot.lane.b32.xlu0 %v1117, 15
      %v1167 = vpop.permute.xlu0 %1166
      %1168 = vrot.lane.b32.xlu0 %v1118, 15
      %v1169 = vpop.permute.xlu0 %1168
      %1170 = vrot.lane.b32.xlu0 %v1119, 15
      %v1171 = vpop.permute.xlu0 %1170
      %1172 = vrot.lane.b32.xlu0 %v1120, 15
      %v1173 = vpop.permute.xlu0 %1172
      %1174 = vrot.lane.b32.xlu0 %v1121, 15
      %v1175 = vpop.permute.xlu0 %1174
      %1176 = vrot.lane.b32.xlu0 %v1122, 15
      %v1177 = vpop.permute.xlu0 %1176
      %1178 = vrot.lane.b32.xlu0 %v1123, 15
      %v1179 = vpop.permute.xlu0 %1178
      %1180 = vrot.lane.b32.xlu0 %v1124, 15
      %v1181 = vpop.permute.xlu0 %1180
      %1182 = vrot.lane.b32.xlu0 %v1125, 15
      %v1183 = vpop.permute.xlu0 %1182
      %1184 = vrot.lane.b32.xlu0 %v1126, 15
      %v1185 = vpop.permute.xlu0 %1184
      %1186 = vrot.lane.b32.xlu0 %v1127, 15
      %v1187 = vpop.permute.xlu0 %1186
      %1188 = vrot.lane.b32.xlu0 %v1128, 15
      %v1189 = vpop.permute.xlu0 %1188
      %1190 = vrot.lane.b32.xlu0 %v1129, 15
      %v1191 = vpop.permute.xlu0 %1190
      %vm1192 = vcmask 121856
      %v1193 = vsel %vm1192, %v1163, %v1165
      %v1194 = vsel %vm1192, %v1165, %v1167
      %v1195 = vsel %vm1192, %v1169, %v1171
      %v1196 = vsel %vm1192, %v1171, %v1173
      %v1197 = vsel %vm1192, %v1175, %v1177
      %v1198 = vsel %vm1192, %v1177, %v1179
      %v1199 = vsel %vm1192, %v1181, %v1183
      %v1200 = vsel %vm1192, %v1183, %v1185
      %v1201 = vsel %vm1192, %v1187, %v1189
      %v1202 = vsel %vm1192, %v1189, %v1191
      %v1214 = vsel %vm620, %v1131, 0
      %v1217 = vsel %vm620, %v1132, 0
      %v1220 = vsel %vm620, %v1133, 0
      %v1223 = vsel %vm620, %v1134, 0
      %v1226 = vsel %vm620, %v1135, 0
      %v1229 = vsel %vm620, %v1136, 0
      %v1232 = vsel %vm620, %v1137, 0
      %v1235 = vsel %vm620, %v1138, 0
      %v1238 = vsel %vm620, %v1139, 0
      %v1241 = vsel %vm620, %v1140, 0
      %v1244 = vsel %vm620, %v1141, 0
      %v1247 = vsel %vm620, %v1142, 0
      %v1250 = vsel %vm620, %v1143, 0
      %v1253 = vsel %vm620, %v1144, 0
      %v1256 = vsel %vm620, %v1145, 0
      %v1259 = vsel %vm620, %v1146, 0
      %1261 = vmatprep.subr.mxu0 0.0
      %1262 = vmatpush1.msra.mxu0 0.0
      %1263 = vmatprep.subr.mxu0 0.0
      %1264 = vmatpush1.msra.mxu0 0.0
      %1265 = vmatprep.subr.mxu0 0.0
      %1266 = vmatpush1.msra.mxu0 0.0
      %1267 = vmatprep.subr.mxu0 0.0
      %1268 = vmatpush1.msra.mxu0 0.0
      %1269 = vmatprep.subr.mxu0 0.0
      %1270 = vmatpush1.msra.mxu0 0.0
      %1271 = vmatprep.subr.mxu0 0.0
      %1272 = vmatpush1.msra.mxu0 0.0
      %1273 = vmatprep.subr.mxu0 0.0
      %1274 = vmatpush1.msra.mxu0 0.0
      %1275 = vmatprep.subr.mxu0 0.0
      %1276 = vmatpush1.msra.mxu0 0.0
      %1277 = vmatprep.subr.mxu0 0.0
      %1278 = vmatpush1.msra.mxu0 0.0
      %1279 = vmatprep.subr.mxu0 0.0
      %1280 = vmatpush1.msra.mxu0 0.0
      %1281 = vmatprep.subr.mxu0 0.0
      %1282 = vmatpush1.msra.mxu0 0.0
      %1283 = vmatprep.subr.mxu0 %v1202
      %1284 = vmatpush1.msra.mxu0 %v1201
      %1285 = vmatprep.subr.mxu0 %v1200
      %1286 = vmatpush1.msra.mxu0 %v1199
      %1287 = vmatprep.subr.mxu0 %v1198
      %1288 = vmatpush1.msra.mxu0 %v1197
      %1289 = vmatprep.subr.mxu0 %v1196
      %1290 = vmatpush1.msra.mxu0 %v1195
      %1291 = vmatprep.subr.mxu0 %v1194
      %1292 = vmatpush1.msra.mxu0 %v1193
      %1293 = vmatprep.subr.mxu0 0.0
      %1294 = vmatpush2.msra.mxu0 0.0
      %1295 = vmatprep.subr.mxu0 0.0
      %1296 = vmatpush2.msra.mxu0 0.0
      %1297 = vmatprep.subr.mxu0 0.0
      %1298 = vmatpush2.msra.mxu0 0.0
      %1299 = vmatprep.subr.mxu0 0.0
      %1300 = vmatpush2.msra.mxu0 0.0
      %1301 = vmatprep.subr.mxu0 0.0
      %1302 = vmatpush2.msra.mxu0 0.0
      %1303 = vmatprep.subr.mxu0 0.0
      %1304 = vmatpush2.msra.mxu0 0.0
      %1305 = vmatprep.subr.mxu0 0.0
      %1306 = vmatpush2.msra.mxu0 0.0
      %1307 = vmatprep.subr.mxu0 0.0
      %1308 = vmatpush2.msra.mxu0 0.0
      %1309 = vmatprep.subr.mxu0 0.0
      %1310 = vmatpush2.msra.mxu0 0.0
      %1311 = vmatprep.subr.mxu0 0.0
      %1312 = vmatpush2.msra.mxu0 0.0
      %1313 = vmatprep.subr.mxu0 0.0
      %1314 = vmatpush2.msra.mxu0 0.0
      %1315 = vmatprep.subr.mxu0 0.0
      %1316 = vmatpush2.msra.mxu0 0.0
      %1317 = vmatprep.subr.mxu0 0.0
      %1318 = vmatpush2.msra.mxu0 0.0
      %1319 = vmatprep.subr.mxu0 0.0
      %1320 = vmatpush2.msra.mxu0 0.0
      %1321 = vmatprep.subr.mxu0 0.0
      %1322 = vmatpush2.msra.mxu0 0.0
      %1323 = vmatprep.subr.mxu0 0.0
      %1324 = vmatpush2.msra.mxu0 0.0
      %1325 = vmatprep.mubr.f32.mxu0 0.0
      %1326 = vmatmul.mubr.f32.gmra.mxu0 %v1214
      %v1327 = vpop.f32.mrf.mxu0
      %v1328 = vadd.f32 0.0, %v1327
      %v1329 = vpop.f32.mrf.mxu0
      %v1330 = vadd.f32 0.0, %v1329
      %1331 = vmatprep.mubr.f32.mxu0 0.0
      %1332 = vmatmul.mubr.f32.gmra.mxu0 %v1217
      %v1333 = vpop.f32.mrf.mxu0
      %v1334 = vadd.f32 0.0, %v1333
      %v1335 = vpop.f32.mrf.mxu0
      %v1336 = vadd.f32 0.0, %v1335
      %1337 = vmatprep.mubr.f32.mxu0 0.0
      %1338 = vmatmul.mubr.f32.gmra.mxu0 %v1220
      %v1339 = vpop.f32.mrf.mxu0
      %v1340 = vadd.f32 0.0, %v1339
      %v1341 = vpop.f32.mrf.mxu0
      %v1342 = vadd.f32 0.0, %v1341
      %1343 = vmatprep.mubr.f32.mxu0 0.0
      %1344 = vmatmul.mubr.f32.gmra.mxu0 %v1223
      %v1345 = vpop.f32.mrf.mxu0
      %v1346 = vadd.f32 0.0, %v1345
      %v1347 = vpop.f32.mrf.mxu0
      %v1348 = vadd.f32 0.0, %v1347
      %1349 = vmatprep.mubr.f32.mxu0 0.0
      %1350 = vmatmul.mubr.f32.gmra.mxu0 %v1226
      %v1351 = vpop.f32.mrf.mxu0
      %v1352 = vadd.f32 0.0, %v1351
      %v1353 = vpop.f32.mrf.mxu0
      %v1354 = vadd.f32 0.0, %v1353
      %1355 = vmatprep.mubr.f32.mxu0 0.0
      %1356 = vmatmul.mubr.f32.gmra.mxu0 %v1229
      %v1357 = vpop.f32.mrf.mxu0
      %v1358 = vadd.f32 0.0, %v1357
      %v1359 = vpop.f32.mrf.mxu0
      %v1360 = vadd.f32 0.0, %v1359
      %1361 = vmatprep.mubr.f32.mxu0 0.0
      %1362 = vmatmul.mubr.f32.gmra.mxu0 %v1232
      %v1363 = vpop.f32.mrf.mxu0
      %v1364 = vadd.f32 0.0, %v1363
      %v1365 = vpop.f32.mrf.mxu0
      %v1366 = vadd.f32 0.0, %v1365
      %1367 = vmatprep.mubr.f32.mxu0 0.0
      %1368 = vmatmul.mubr.f32.gmra.mxu0 %v1235
      %v1369 = vpop.f32.mrf.mxu0
      %v1370 = vadd.f32 0.0, %v1369
      %v1371 = vpop.f32.mrf.mxu0
      %v1372 = vadd.f32 0.0, %v1371
      %1373 = vmatprep.mubr.f32.mxu0 0.0
      %1374 = vmatmul.mubr.f32.gmra.mxu0 %v1238
      %v1375 = vpop.f32.mrf.mxu0
      %v1376 = vadd.f32 0.0, %v1375
      %v1377 = vpop.f32.mrf.mxu0
      %v1378 = vadd.f32 0.0, %v1377
      %1379 = vmatprep.mubr.f32.mxu0 0.0
      %1380 = vmatmul.mubr.f32.gmra.mxu0 %v1241
      %v1381 = vpop.f32.mrf.mxu0
      %v1382 = vadd.f32 0.0, %v1381
      %v1383 = vpop.f32.mrf.mxu0
      %v1384 = vadd.f32 0.0, %v1383
      %1385 = vmatprep.mubr.f32.mxu0 0.0
      %1386 = vmatmul.mubr.f32.gmra.mxu0 %v1244
      %v1387 = vpop.f32.mrf.mxu0
      %v1388 = vadd.f32 0.0, %v1387
      %v1389 = vpop.f32.mrf.mxu0
      %v1390 = vadd.f32 0.0, %v1389
      %1391 = vmatprep.mubr.f32.mxu0 0.0
      %1392 = vmatmul.mubr.f32.gmra.mxu0 %v1247
      %v1393 = vpop.f32.mrf.mxu0
      %v1394 = vadd.f32 0.0, %v1393
      %v1395 = vpop.f32.mrf.mxu0
      %v1396 = vadd.f32 0.0, %v1395
      %1397 = vmatprep.mubr.f32.mxu0 0.0
      %1398 = vmatmul.mubr.f32.gmra.mxu0 %v1250
      %v1399 = vpop.f32.mrf.mxu0
      %v1400 = vadd.f32 0.0, %v1399
      %v1401 = vpop.f32.mrf.mxu0
      %v1402 = vadd.f32 0.0, %v1401
      %1403 = vmatprep.mubr.f32.mxu0 0.0
      %1404 = vmatmul.mubr.f32.gmra.mxu0 %v1253
      %v1405 = vpop.f32.mrf.mxu0
      %v1406 = vadd.f32 0.0, %v1405
      %v1407 = vpop.f32.mrf.mxu0
      %v1408 = vadd.f32 0.0, %v1407
      %1409 = vmatprep.mubr.f32.mxu0 0.0
      %1410 = vmatmul.mubr.f32.gmra.mxu0 %v1256
      %v1411 = vpop.f32.mrf.mxu0
      %v1412 = vadd.f32 0.0, %v1411
      %v1413 = vpop.f32.mrf.mxu0
      %v1414 = vadd.f32 0.0, %v1413
      %1415 = vmatprep.mubr.f32.mxu0 0.0
      %1416 = vmatmul.mubr.f32.gmra.mxu0 %v1259
      %v1417 = vpop.f32.mrf.mxu0
      %v1418 = vadd.f32 0.0, %v1417
      %v1419 = vpop.f32.mrf.mxu0
      %v1420 = vadd.f32 0.0, %v1419
      %1421 = vdwg.mxu0
      %v1422 = vadd.f32 %v1010, %v1328
      %v1423 = vadd.f32 %v1012, %v1330
      %v1424 = vadd.f32 %v1016, %v1334
      %v1425 = vadd.f32 %v1018, %v1336
      %v1426 = vadd.f32 %v1022, %v1340
      %v1427 = vadd.f32 %v1024, %v1342
      %v1428 = vadd.f32 %v1028, %v1346
      %v1429 = vadd.f32 %v1030, %v1348
      %v1430 = vadd.f32 %v1034, %v1352
      %v1431 = vadd.f32 %v1036, %v1354
      %v1432 = vadd.f32 %v1040, %v1358
      %v1433 = vadd.f32 %v1042, %v1360
      %v1434 = vadd.f32 %v1046, %v1364
      %v1435 = vadd.f32 %v1048, %v1366
      %v1436 = vadd.f32 %v1052, %v1370
      %v1437 = vadd.f32 %v1054, %v1372
      %v1438 = vadd.f32 %v1058, %v1376
      %v1439 = vadd.f32 %v1060, %v1378
      %v1440 = vadd.f32 %v1064, %v1382
      %v1441 = vadd.f32 %v1066, %v1384
      %v1442 = vadd.f32 %v1070, %v1388
      %v1443 = vadd.f32 %v1072, %v1390
      %v1444 = vadd.f32 %v1076, %v1394
      %v1445 = vadd.f32 %v1078, %v1396
      %v1446 = vadd.f32 %v1082, %v1400
      %v1447 = vadd.f32 %v1084, %v1402
      %v1448 = vadd.f32 %v1088, %v1406
      %v1449 = vadd.f32 %v1090, %v1408
      %v1450 = vadd.f32 %v1094, %v1412
      %v1451 = vadd.f32 %v1096, %v1414
      %v1452 = vadd.f32 %v1100, %v1418
      %v1453 = vadd.f32 %v1102, %v1420
      %1454 = vrot.lane.b32.xlu0 %v429, 127
      %v1455 = vpop.permute.xlu0 %1454
      %1456 = vrot.lane.b32.xlu0 %v430, 127
      %v1457 = vpop.permute.xlu0 %1456
      %vm1458 = vcmask 1039360
      %v1459 = vsel %vm1458, %v1455, %v1457
      %v1463 = vmul.f32 %v480, %v1455
      %v1464 = vmul.f32 %v481, %v1459
      %v1465 = vmul.f32 %v482, %v1457
      %v1466 = vmul.f32 %v483, %v1455
      %v1467 = vmul.f32 %v484, %v1459
      %v1468 = vmul.f32 %v485, %v1457
      %v1469 = vmul.f32 %v486, %v1455
      %v1470 = vmul.f32 %v487, %v1459
      %v1471 = vmul.f32 %v488, %v1457
      %v1472 = vmul.f32 %v489, %v1455
      %v1473 = vmul.f32 %v490, %v1459
      %v1474 = vmul.f32 %v491, %v1457
      %v1475 = vmul.f32 %v492, %v1455
      %v1476 = vmul.f32 %v493, %v1459
      %v1477 = vmul.f32 %v494, %v1457
      %s1478 = scalar_lea.vmem %s3, 384
      %v1479 = vld [vmem:[%s1478] sm:$0xff]
      %v1480 = vld [vmem:[%s1478 + $0x8] sm:$0xff]
      %v1481 = vld [vmem:[%s1478 + $0x10] sm:$0xff]
      %v1482 = vld [vmem:[%s1478 + $0x18] sm:$0xff]
      %v1483 = vld [vmem:[%s1478 + $0x20] sm:$0xff]
      %v1484 = vld [vmem:[%s1478 + $0x28] sm:$0xff]
      %v1485 = vld [vmem:[%s1478 + $0x30] sm:$0xff]
      %v1486 = vld [vmem:[%s1478 + $0x38] sm:$0xff]
      %v1487 = vld [vmem:[%s1478 + $0x40] sm:$0xff]
      %v1488 = vld [vmem:[%s1478 + $0x48] sm:$0xff]
      %v1489 = vld [vmem:[%s1478 + $0x50] sm:$0xff]
      %v1490 = vld [vmem:[%s1478 + $0x58] sm:$0xff]
      %v1491 = vld [vmem:[%s1478 + $0x60] sm:$0xff]
      %v1492 = vld [vmem:[%s1478 + $0x68] sm:$0xff]
      %v1493 = vld [vmem:[%s1478 + $0x70] sm:$0xff]
      %v1494 = vld [vmem:[%s1478 + $0x78] sm:$0xff]
      %1510 = vrot.lane.b32.xlu0 %v1463, 1
      %v1511 = vpop.permute.xlu0 %1510
      %1512 = vrot.lane.b32.xlu0 %v1464, 1
      %v1513 = vpop.permute.xlu0 %1512
      %1514 = vrot.lane.b32.xlu0 %v1465, 1
      %v1515 = vpop.permute.xlu0 %1514
      %1516 = vrot.lane.b32.xlu0 %v1466, 1
      %v1517 = vpop.permute.xlu0 %1516
      %1518 = vrot.lane.b32.xlu0 %v1467, 1
      %v1519 = vpop.permute.xlu0 %1518
      %1520 = vrot.lane.b32.xlu0 %v1468, 1
      %v1521 = vpop.permute.xlu0 %1520
      %1522 = vrot.lane.b32.xlu0 %v1469, 1
      %v1523 = vpop.permute.xlu0 %1522
      %1524 = vrot.lane.b32.xlu0 %v1470, 1
      %v1525 = vpop.permute.xlu0 %1524
      %1526 = vrot.lane.b32.xlu0 %v1471, 1
      %v1527 = vpop.permute.xlu0 %1526
      %1528 = vrot.lane.b32.xlu0 %v1472, 1
      %v1529 = vpop.permute.xlu0 %1528
      %1530 = vrot.lane.b32.xlu0 %v1473, 1
      %v1531 = vpop.permute.xlu0 %1530
      %1532 = vrot.lane.b32.xlu0 %v1474, 1
      %v1533 = vpop.permute.xlu0 %1532
      %1534 = vrot.lane.b32.xlu0 %v1475, 1
      %v1535 = vpop.permute.xlu0 %1534
      %1536 = vrot.lane.b32.xlu0 %v1476, 1
      %v1537 = vpop.permute.xlu0 %1536
      %1538 = vrot.lane.b32.xlu0 %v1477, 1
      %v1539 = vpop.permute.xlu0 %1538
      %vm1540 = vcmask 7168
      %v1541 = vsel %vm1540, %v1511, %v1513
      %v1542 = vsel %vm1540, %v1513, %v1515
      %v1543 = vsel %vm1540, %v1517, %v1519
      %v1544 = vsel %vm1540, %v1519, %v1521
      %v1545 = vsel %vm1540, %v1523, %v1525
      %v1546 = vsel %vm1540, %v1525, %v1527
      %v1547 = vsel %vm1540, %v1529, %v1531
      %v1548 = vsel %vm1540, %v1531, %v1533
      %v1549 = vsel %vm1540, %v1535, %v1537
      %v1550 = vsel %vm1540, %v1537, %v1539
      %v1562 = vsel %vm620, %v1479, 0
      %v1565 = vsel %vm620, %v1480, 0
      %v1568 = vsel %vm620, %v1481, 0
      %v1571 = vsel %vm620, %v1482, 0
      %v1574 = vsel %vm620, %v1483, 0
      %v1577 = vsel %vm620, %v1484, 0
      %v1580 = vsel %vm620, %v1485, 0
      %v1583 = vsel %vm620, %v1486, 0
      %v1586 = vsel %vm620, %v1487, 0
      %v1589 = vsel %vm620, %v1488, 0
      %v1592 = vsel %vm620, %v1489, 0
      %v1595 = vsel %vm620, %v1490, 0
      %v1598 = vsel %vm620, %v1491, 0
      %v1601 = vsel %vm620, %v1492, 0
      %v1604 = vsel %vm620, %v1493, 0
      %v1607 = vsel %vm620, %v1494, 0
      %1609 = vmatprep.subr.mxu0 0.0
      %1610 = vmatpush1.msra.mxu0 0.0
      %1611 = vmatprep.subr.mxu0 0.0
      %1612 = vmatpush1.msra.mxu0 0.0
      %1613 = vmatprep.subr.mxu0 0.0
      %1614 = vmatpush1.msra.mxu0 0.0
      %1615 = vmatprep.subr.mxu0 0.0
      %1616 = vmatpush1.msra.mxu0 0.0
      %1617 = vmatprep.subr.mxu0 0.0
      %1618 = vmatpush1.msra.mxu0 0.0
      %1619 = vmatprep.subr.mxu0 0.0
      %1620 = vmatpush1.msra.mxu0 0.0
      %1621 = vmatprep.subr.mxu0 0.0
      %1622 = vmatpush1.msra.mxu0 0.0
      %1623 = vmatprep.subr.mxu0 0.0
      %1624 = vmatpush1.msra.mxu0 0.0
      %1625 = vmatprep.subr.mxu0 0.0
      %1626 = vmatpush1.msra.mxu0 0.0
      %1627 = vmatprep.subr.mxu0 0.0
      %1628 = vmatpush1.msra.mxu0 0.0
      %1629 = vmatprep.subr.mxu0 0.0
      %1630 = vmatpush1.msra.mxu0 0.0
      %1631 = vmatprep.subr.mxu0 %v1550
      %1632 = vmatpush1.msra.mxu0 %v1549
      %1633 = vmatprep.subr.mxu0 %v1548
      %1634 = vmatpush1.msra.mxu0 %v1547
      %1635 = vmatprep.subr.mxu0 %v1546
      %1636 = vmatpush1.msra.mxu0 %v1545
      %1637 = vmatprep.subr.mxu0 %v1544
      %1638 = vmatpush1.msra.mxu0 %v1543
      %1639 = vmatprep.subr.mxu0 %v1542
      %1640 = vmatpush1.msra.mxu0 %v1541
      %1641 = vmatprep.subr.mxu0 0.0
      %1642 = vmatpush2.msra.mxu0 0.0
      %1643 = vmatprep.subr.mxu0 0.0
      %1644 = vmatpush2.msra.mxu0 0.0
      %1645 = vmatprep.subr.mxu0 0.0
      %1646 = vmatpush2.msra.mxu0 0.0
      %1647 = vmatprep.subr.mxu0 0.0
      %1648 = vmatpush2.msra.mxu0 0.0
      %1649 = vmatprep.subr.mxu0 0.0
      %1650 = vmatpush2.msra.mxu0 0.0
      %1651 = vmatprep.subr.mxu0 0.0
      %1652 = vmatpush2.msra.mxu0 0.0
      %1653 = vmatprep.subr.mxu0 0.0
      %1654 = vmatpush2.msra.mxu0 0.0
      %1655 = vmatprep.subr.mxu0 0.0
      %1656 = vmatpush2.msra.mxu0 0.0
      %1657 = vmatprep.subr.mxu0 0.0
      %1658 = vmatpush2.msra.mxu0 0.0
      %1659 = vmatprep.subr.mxu0 0.0
      %1660 = vmatpush2.msra.mxu0 0.0
      %1661 = vmatprep.subr.mxu0 0.0
      %1662 = vmatpush2.msra.mxu0 0.0
      %1663 = vmatprep.subr.mxu0 0.0
      %1664 = vmatpush2.msra.mxu0 0.0
      %1665 = vmatprep.subr.mxu0 0.0
      %1666 = vmatpush2.msra.mxu0 0.0
      %1667 = vmatprep.subr.mxu0 0.0
      %1668 = vmatpush2.msra.mxu0 0.0
      %1669 = vmatprep.subr.mxu0 0.0
      %1670 = vmatpush2.msra.mxu0 0.0
      %1671 = vmatprep.subr.mxu0 0.0
      %1672 = vmatpush2.msra.mxu0 0.0
      %1673 = vmatprep.mubr.f32.mxu0 0.0
      %1674 = vmatmul.mubr.f32.gmra.mxu0 %v1562
      %v1675 = vpop.f32.mrf.mxu0
      %v1676 = vadd.f32 0.0, %v1675
      %v1677 = vpop.f32.mrf.mxu0
      %v1678 = vadd.f32 0.0, %v1677
      %1679 = vmatprep.mubr.f32.mxu0 0.0
      %1680 = vmatmul.mubr.f32.gmra.mxu0 %v1565
      %v1681 = vpop.f32.mrf.mxu0
      %v1682 = vadd.f32 0.0, %v1681
      %v1683 = vpop.f32.mrf.mxu0
      %v1684 = vadd.f32 0.0, %v1683
      %1685 = vmatprep.mubr.f32.mxu0 0.0
      %1686 = vmatmul.mubr.f32.gmra.mxu0 %v1568
      %v1687 = vpop.f32.mrf.mxu0
      %v1688 = vadd.f32 0.0, %v1687
      %v1689 = vpop.f32.mrf.mxu0
      %v1690 = vadd.f32 0.0, %v1689
      %1691 = vmatprep.mubr.f32.mxu0 0.0
      %1692 = vmatmul.mubr.f32.gmra.mxu0 %v1571
      %v1693 = vpop.f32.mrf.mxu0
      %v1694 = vadd.f32 0.0, %v1693
      %v1695 = vpop.f32.mrf.mxu0
      %v1696 = vadd.f32 0.0, %v1695
      %1697 = vmatprep.mubr.f32.mxu0 0.0
      %1698 = vmatmul.mubr.f32.gmra.mxu0 %v1574
      %v1699 = vpop.f32.mrf.mxu0
      %v1700 = vadd.f32 0.0, %v1699
      %v1701 = vpop.f32.mrf.mxu0
      %v1702 = vadd.f32 0.0, %v1701
      %1703 = vmatprep.mubr.f32.mxu0 0.0
      %1704 = vmatmul.mubr.f32.gmra.mxu0 %v1577
      %v1705 = vpop.f32.mrf.mxu0
      %v1706 = vadd.f32 0.0, %v1705
      %v1707 = vpop.f32.mrf.mxu0
      %v1708 = vadd.f32 0.0, %v1707
      %1709 = vmatprep.mubr.f32.mxu0 0.0
      %1710 = vmatmul.mubr.f32.gmra.mxu0 %v1580
      %v1711 = vpop.f32.mrf.mxu0
      %v1712 = vadd.f32 0.0, %v1711
      %v1713 = vpop.f32.mrf.mxu0
      %v1714 = vadd.f32 0.0, %v1713
      %1715 = vmatprep.mubr.f32.mxu0 0.0
      %1716 = vmatmul.mubr.f32.gmra.mxu0 %v1583
      %v1717 = vpop.f32.mrf.mxu0
      %v1718 = vadd.f32 0.0, %v1717
      %v1719 = vpop.f32.mrf.mxu0
      %v1720 = vadd.f32 0.0, %v1719
      %1721 = vmatprep.mubr.f32.mxu0 0.0
      %1722 = vmatmul.mubr.f32.gmra.mxu0 %v1586
      %v1723 = vpop.f32.mrf.mxu0
      %v1724 = vadd.f32 0.0, %v1723
      %v1725 = vpop.f32.mrf.mxu0
      %v1726 = vadd.f32 0.0, %v1725
      %1727 = vmatprep.mubr.f32.mxu0 0.0
      %1728 = vmatmul.mubr.f32.gmra.mxu0 %v1589
      %v1729 = vpop.f32.mrf.mxu0
      %v1730 = vadd.f32 0.0, %v1729
      %v1731 = vpop.f32.mrf.mxu0
      %v1732 = vadd.f32 0.0, %v1731
      %1733 = vmatprep.mubr.f32.mxu0 0.0
      %1734 = vmatmul.mubr.f32.gmra.mxu0 %v1592
      %v1735 = vpop.f32.mrf.mxu0
      %v1736 = vadd.f32 0.0, %v1735
      %v1737 = vpop.f32.mrf.mxu0
      %v1738 = vadd.f32 0.0, %v1737
      %1739 = vmatprep.mubr.f32.mxu0 0.0
      %1740 = vmatmul.mubr.f32.gmra.mxu0 %v1595
      %v1741 = vpop.f32.mrf.mxu0
      %v1742 = vadd.f32 0.0, %v1741
      %v1743 = vpop.f32.mrf.mxu0
      %v1744 = vadd.f32 0.0, %v1743
      %1745 = vmatprep.mubr.f32.mxu0 0.0
      %1746 = vmatmul.mubr.f32.gmra.mxu0 %v1598
      %v1747 = vpop.f32.mrf.mxu0
      %v1748 = vadd.f32 0.0, %v1747
      %v1749 = vpop.f32.mrf.mxu0
      %v1750 = vadd.f32 0.0, %v1749
      %1751 = vmatprep.mubr.f32.mxu0 0.0
      %1752 = vmatmul.mubr.f32.gmra.mxu0 %v1601
      %v1753 = vpop.f32.mrf.mxu0
      %v1754 = vadd.f32 0.0, %v1753
      %v1755 = vpop.f32.mrf.mxu0
      %v1756 = vadd.f32 0.0, %v1755
      %1757 = vmatprep.mubr.f32.mxu0 0.0
      %1758 = vmatmul.mubr.f32.gmra.mxu0 %v1604
      %v1759 = vpop.f32.mrf.mxu0
      %v1760 = vadd.f32 0.0, %v1759
      %v1761 = vpop.f32.mrf.mxu0
      %v1762 = vadd.f32 0.0, %v1761
      %1763 = vmatprep.mubr.f32.mxu0 0.0
      %1764 = vmatmul.mubr.f32.gmra.mxu0 %v1607
      %v1765 = vpop.f32.mrf.mxu0
      %v1766 = vadd.f32 0.0, %v1765
      %v1767 = vpop.f32.mrf.mxu0
      %v1768 = vadd.f32 0.0, %v1767
      %1769 = vdwg.mxu0
      %v1770 = vadd.f32 %v1422, %v1676
      %v1771 = vadd.f32 %v1423, %v1678
      %v1772 = vadd.f32 %v1424, %v1682
      %v1773 = vadd.f32 %v1425, %v1684
      %v1774 = vadd.f32 %v1426, %v1688
      %v1775 = vadd.f32 %v1427, %v1690
      %v1776 = vadd.f32 %v1428, %v1694
      %v1777 = vadd.f32 %v1429, %v1696
      %v1778 = vadd.f32 %v1430, %v1700
      %v1779 = vadd.f32 %v1431, %v1702
      %v1780 = vadd.f32 %v1432, %v1706
      %v1781 = vadd.f32 %v1433, %v1708
      %v1782 = vadd.f32 %v1434, %v1712
      %v1783 = vadd.f32 %v1435, %v1714
      %v1784 = vadd.f32 %v1436, %v1718
      %v1785 = vadd.f32 %v1437, %v1720
      %v1786 = vadd.f32 %v1438, %v1724
      %v1787 = vadd.f32 %v1439, %v1726
      %v1788 = vadd.f32 %v1440, %v1730
      %v1789 = vadd.f32 %v1441, %v1732
      %v1790 = vadd.f32 %v1442, %v1736
      %v1791 = vadd.f32 %v1443, %v1738
      %v1792 = vadd.f32 %v1444, %v1742
      %v1793 = vadd.f32 %v1445, %v1744
      %v1794 = vadd.f32 %v1446, %v1748
      %v1795 = vadd.f32 %v1447, %v1750
      %v1796 = vadd.f32 %v1448, %v1754
      %v1797 = vadd.f32 %v1449, %v1756
      %v1798 = vadd.f32 %v1450, %v1760
      %v1799 = vadd.f32 %v1451, %v1762
      %v1800 = vadd.f32 %v1452, %v1766
      %v1801 = vadd.f32 %v1453, %v1768
      %s1802 = scalar_lea.vmem %s3, 512
      %v1803 = vld [vmem:[%s1802] sm:$0xff]
      %v1804 = vld [vmem:[%s1802 + $0x8] sm:$0xff]
      %v1805 = vld [vmem:[%s1802 + $0x10] sm:$0xff]
      %v1806 = vld [vmem:[%s1802 + $0x18] sm:$0xff]
      %v1807 = vld [vmem:[%s1802 + $0x20] sm:$0xff]
      %v1808 = vld [vmem:[%s1802 + $0x28] sm:$0xff]
      %v1809 = vld [vmem:[%s1802 + $0x30] sm:$0xff]
      %v1810 = vld [vmem:[%s1802 + $0x38] sm:$0xff]
      %v1811 = vld [vmem:[%s1802 + $0x40] sm:$0xff]
      %v1812 = vld [vmem:[%s1802 + $0x48] sm:$0xff]
      %v1813 = vld [vmem:[%s1802 + $0x50] sm:$0xff]
      %v1814 = vld [vmem:[%s1802 + $0x58] sm:$0xff]
      %v1815 = vld [vmem:[%s1802 + $0x60] sm:$0xff]
      %v1816 = vld [vmem:[%s1802 + $0x68] sm:$0xff]
      %v1817 = vld [vmem:[%s1802 + $0x70] sm:$0xff]
      %v1818 = vld [vmem:[%s1802 + $0x78] sm:$0xff]
      %v1820 = vsel %vm620, %v1803, 0
      %v1823 = vsel %vm620, %v1804, 0
      %v1826 = vsel %vm620, %v1805, 0
      %v1829 = vsel %vm620, %v1806, 0
      %v1832 = vsel %vm620, %v1807, 0
      %v1835 = vsel %vm620, %v1808, 0
      %v1838 = vsel %vm620, %v1809, 0
      %v1841 = vsel %vm620, %v1810, 0
      %v1844 = vsel %vm620, %v1811, 0
      %v1847 = vsel %vm620, %v1812, 0
      %v1850 = vsel %vm620, %v1813, 0
      %v1853 = vsel %vm620, %v1814, 0
      %v1856 = vsel %vm620, %v1815, 0
      %v1859 = vsel %vm620, %v1816, 0
      %v1862 = vsel %vm620, %v1817, 0
      %v1865 = vsel %vm620, %v1818, 0
      %1867 = vmatprep.subr.mxu0 0.0
      %1868 = vmatpush1.msra.mxu0 0.0
      %1869 = vmatprep.subr.mxu0 0.0
      %1870 = vmatpush1.msra.mxu0 0.0
      %1871 = vmatprep.subr.mxu0 0.0
      %1872 = vmatpush1.msra.mxu0 0.0
      %1873 = vmatprep.subr.mxu0 0.0
      %1874 = vmatpush1.msra.mxu0 0.0
      %1875 = vmatprep.subr.mxu0 0.0
      %1876 = vmatpush1.msra.mxu0 0.0
      %1877 = vmatprep.subr.mxu0 0.0
      %1878 = vmatpush1.msra.mxu0 0.0
      %1879 = vmatprep.subr.mxu0 0.0
      %1880 = vmatpush1.msra.mxu0 0.0
      %1881 = vmatprep.subr.mxu0 0.0
      %1882 = vmatpush1.msra.mxu0 0.0
      %1883 = vmatprep.subr.mxu0 0.0
      %1884 = vmatpush1.msra.mxu0 0.0
      %1885 = vmatprep.subr.mxu0 0.0
      %1886 = vmatpush1.msra.mxu0 0.0
      %1887 = vmatprep.subr.mxu0 0.0
      %1888 = vmatpush1.msra.mxu0 0.0
      %1889 = vmatprep.subr.mxu0 %v494
      %1890 = vmatpush1.msra.mxu0 %v493
      %1891 = vmatprep.subr.mxu0 %v491
      %1892 = vmatpush1.msra.mxu0 %v490
      %1893 = vmatprep.subr.mxu0 %v488
      %1894 = vmatpush1.msra.mxu0 %v487
      %1895 = vmatprep.subr.mxu0 %v485
      %1896 = vmatpush1.msra.mxu0 %v484
      %1897 = vmatprep.subr.mxu0 %v482
      %1898 = vmatpush1.msra.mxu0 %v481
      %1899 = vmatprep.subr.mxu0 0.0
      %1900 = vmatpush2.msra.mxu0 0.0
      %1901 = vmatprep.subr.mxu0 0.0
      %1902 = vmatpush2.msra.mxu0 0.0
      %1903 = vmatprep.subr.mxu0 0.0
      %1904 = vmatpush2.msra.mxu0 0.0
      %1905 = vmatprep.subr.mxu0 0.0
      %1906 = vmatpush2.msra.mxu0 0.0
      %1907 = vmatprep.subr.mxu0 0.0
      %1908 = vmatpush2.msra.mxu0 0.0
      %1909 = vmatprep.subr.mxu0 0.0
      %1910 = vmatpush2.msra.mxu0 0.0
      %1911 = vmatprep.subr.mxu0 0.0
      %1912 = vmatpush2.msra.mxu0 0.0
      %1913 = vmatprep.subr.mxu0 0.0
      %1914 = vmatpush2.msra.mxu0 0.0
      %1915 = vmatprep.subr.mxu0 0.0
      %1916 = vmatpush2.msra.mxu0 0.0
      %1917 = vmatprep.subr.mxu0 0.0
      %1918 = vmatpush2.msra.mxu0 0.0
      %1919 = vmatprep.subr.mxu0 0.0
      %1920 = vmatpush2.msra.mxu0 0.0
      %1921 = vmatprep.subr.mxu0 0.0
      %1922 = vmatpush2.msra.mxu0 0.0
      %1923 = vmatprep.subr.mxu0 0.0
      %1924 = vmatpush2.msra.mxu0 0.0
      %1925 = vmatprep.subr.mxu0 0.0
      %1926 = vmatpush2.msra.mxu0 0.0
      %1927 = vmatprep.subr.mxu0 0.0
      %1928 = vmatpush2.msra.mxu0 0.0
      %1929 = vmatprep.subr.mxu0 0.0
      %1930 = vmatpush2.msra.mxu0 0.0
      %1931 = vmatprep.mubr.f32.mxu0 0.0
      %1932 = vmatmul.mubr.f32.gmra.mxu0 %v1820
      %v1933 = vpop.f32.mrf.mxu0
      %v1934 = vadd.f32 0.0, %v1933
      %v1935 = vpop.f32.mrf.mxu0
      %v1936 = vadd.f32 0.0, %v1935
      %1937 = vmatprep.mubr.f32.mxu0 0.0
      %1938 = vmatmul.mubr.f32.gmra.mxu0 %v1823
      %v1939 = vpop.f32.mrf.mxu0
      %v1940 = vadd.f32 0.0, %v1939
      %v1941 = vpop.f32.mrf.mxu0
      %v1942 = vadd.f32 0.0, %v1941
      %1943 = vmatprep.mubr.f32.mxu0 0.0
      %1944 = vmatmul.mubr.f32.gmra.mxu0 %v1826
      %v1945 = vpop.f32.mrf.mxu0
      %v1946 = vadd.f32 0.0, %v1945
      %v1947 = vpop.f32.mrf.mxu0
      %v1948 = vadd.f32 0.0, %v1947
      %1949 = vmatprep.mubr.f32.mxu0 0.0
      %1950 = vmatmul.mubr.f32.gmra.mxu0 %v1829
      %v1951 = vpop.f32.mrf.mxu0
      %v1952 = vadd.f32 0.0, %v1951
      %v1953 = vpop.f32.mrf.mxu0
      %v1954 = vadd.f32 0.0, %v1953
      %1955 = vmatprep.mubr.f32.mxu0 0.0
      %1956 = vmatmul.mubr.f32.gmra.mxu0 %v1832
      %v1957 = vpop.f32.mrf.mxu0
      %v1958 = vadd.f32 0.0, %v1957
      %v1959 = vpop.f32.mrf.mxu0
      %v1960 = vadd.f32 0.0, %v1959
      %1961 = vmatprep.mubr.f32.mxu0 0.0
      %1962 = vmatmul.mubr.f32.gmra.mxu0 %v1835
      %v1963 = vpop.f32.mrf.mxu0
      %v1964 = vadd.f32 0.0, %v1963
      %v1965 = vpop.f32.mrf.mxu0
      %v1966 = vadd.f32 0.0, %v1965
      %1967 = vmatprep.mubr.f32.mxu0 0.0
      %1968 = vmatmul.mubr.f32.gmra.mxu0 %v1838
      %v1969 = vpop.f32.mrf.mxu0
      %v1970 = vadd.f32 0.0, %v1969
      %v1971 = vpop.f32.mrf.mxu0
      %v1972 = vadd.f32 0.0, %v1971
      %1973 = vmatprep.mubr.f32.mxu0 0.0
      %1974 = vmatmul.mubr.f32.gmra.mxu0 %v1841
      %v1975 = vpop.f32.mrf.mxu0
      %v1976 = vadd.f32 0.0, %v1975
      %v1977 = vpop.f32.mrf.mxu0
      %v1978 = vadd.f32 0.0, %v1977
      %1979 = vmatprep.mubr.f32.mxu0 0.0
      %1980 = vmatmul.mubr.f32.gmra.mxu0 %v1844
      %v1981 = vpop.f32.mrf.mxu0
      %v1982 = vadd.f32 0.0, %v1981
      %v1983 = vpop.f32.mrf.mxu0
      %v1984 = vadd.f32 0.0, %v1983
      %1985 = vmatprep.mubr.f32.mxu0 0.0
      %1986 = vmatmul.mubr.f32.gmra.mxu0 %v1847
      %v1987 = vpop.f32.mrf.mxu0
      %v1988 = vadd.f32 0.0, %v1987
      %v1989 = vpop.f32.mrf.mxu0
      %v1990 = vadd.f32 0.0, %v1989
      %1991 = vmatprep.mubr.f32.mxu0 0.0
      %1992 = vmatmul.mubr.f32.gmra.mxu0 %v1850
      %v1993 = vpop.f32.mrf.mxu0
      %v1994 = vadd.f32 0.0, %v1993
      %v1995 = vpop.f32.mrf.mxu0
      %v1996 = vadd.f32 0.0, %v1995
      %1997 = vmatprep.mubr.f32.mxu0 0.0
      %1998 = vmatmul.mubr.f32.gmra.mxu0 %v1853
      %v1999 = vpop.f32.mrf.mxu0
      %v2000 = vadd.f32 0.0, %v1999
      %v2001 = vpop.f32.mrf.mxu0
      %v2002 = vadd.f32 0.0, %v2001
      %2003 = vmatprep.mubr.f32.mxu0 0.0
      %2004 = vmatmul.mubr.f32.gmra.mxu0 %v1856
      %v2005 = vpop.f32.mrf.mxu0
      %v2006 = vadd.f32 0.0, %v2005
      %v2007 = vpop.f32.mrf.mxu0
      %v2008 = vadd.f32 0.0, %v2007
      %2009 = vmatprep.mubr.f32.mxu0 0.0
      %2010 = vmatmul.mubr.f32.gmra.mxu0 %v1859
      %v2011 = vpop.f32.mrf.mxu0
      %v2012 = vadd.f32 0.0, %v2011
      %v2013 = vpop.f32.mrf.mxu0
      %v2014 = vadd.f32 0.0, %v2013
      %2015 = vmatprep.mubr.f32.mxu0 0.0
      %2016 = vmatmul.mubr.f32.gmra.mxu0 %v1862
      %v2017 = vpop.f32.mrf.mxu0
      %v2018 = vadd.f32 0.0, %v2017
      %v2019 = vpop.f32.mrf.mxu0
      %v2020 = vadd.f32 0.0, %v2019
      %2021 = vmatprep.mubr.f32.mxu0 0.0
      %2022 = vmatmul.mubr.f32.gmra.mxu0 %v1865
      %v2023 = vpop.f32.mrf.mxu0
      %v2024 = vadd.f32 0.0, %v2023
      %v2025 = vpop.f32.mrf.mxu0
      %v2026 = vadd.f32 0.0, %v2025
      %2027 = vdwg.mxu0
      %v2028 = vadd.f32 %v1770, %v1934
      %v2029 = vadd.f32 %v1771, %v1936
      %v2030 = vadd.f32 %v1772, %v1940
      %v2031 = vadd.f32 %v1773, %v1942
      %v2032 = vadd.f32 %v1774, %v1946
      %v2033 = vadd.f32 %v1775, %v1948
      %v2034 = vadd.f32 %v1776, %v1952
      %v2035 = vadd.f32 %v1777, %v1954
      %v2036 = vadd.f32 %v1778, %v1958
      %v2037 = vadd.f32 %v1779, %v1960
      %v2038 = vadd.f32 %v1780, %v1964
      %v2039 = vadd.f32 %v1781, %v1966
      %v2040 = vadd.f32 %v1782, %v1970
      %v2041 = vadd.f32 %v1783, %v1972
      %v2042 = vadd.f32 %v1784, %v1976
      %v2043 = vadd.f32 %v1785, %v1978
      %v2044 = vadd.f32 %v1786, %v1982
      %v2045 = vadd.f32 %v1787, %v1984
      %v2046 = vadd.f32 %v1788, %v1988
      %v2047 = vadd.f32 %v1789, %v1990
      %v2048 = vadd.f32 %v1790, %v1994
      %v2049 = vadd.f32 %v1791, %v1996
      %v2050 = vadd.f32 %v1792, %v2000
      %v2051 = vadd.f32 %v1793, %v2002
      %v2052 = vadd.f32 %v1794, %v2006
      %v2053 = vadd.f32 %v1795, %v2008
      %v2054 = vadd.f32 %v1796, %v2012
      %v2055 = vadd.f32 %v1797, %v2014
      %v2056 = vadd.f32 %v1798, %v2018
      %v2057 = vadd.f32 %v1799, %v2020
      %v2058 = vadd.f32 %v1800, %v2024
      %v2059 = vadd.f32 %v1801, %v2026
      %v2060 = vld [vmem:[#allocation2 + $0x8] sm:$0xff]
      %v2061 = vld [vmem:[#allocation2 + $0x10] sm:$0xff]
      %v2062 = vld [vmem:[#allocation2 + $0x18] sm:$0xff]
      %v2063 = vld [vmem:[#allocation2 + $0x28] sm:$0xff]
      %v2064 = vld [vmem:[#allocation2 + $0x30] sm:$0xff]
      %v2065 = vld [vmem:[#allocation2 + $0x38] sm:$0xff]
      %v2066 = vld [vmem:[#allocation2 + $0x48] sm:$0xff]
      %v2067 = vld [vmem:[#allocation2 + $0x50] sm:$0xff]
      %v2068 = vld [vmem:[#allocation2 + $0x58] sm:$0xff]
      %v2069 = vld [vmem:[#allocation2 + $0x68] sm:$0xff]
      %v2070 = vld [vmem:[#allocation2 + $0x70] sm:$0xff]
      %v2071 = vld [vmem:[#allocation2 + $0x78] sm:$0xff]
      %v2072 = vld [vmem:[#allocation2 + $0x88] sm:$0xff]
      %v2073 = vld [vmem:[#allocation2 + $0x90] sm:$0xff]
      %v2074 = vld [vmem:[#allocation2 + $0x98] sm:$0xff]
      %2075 = vrot.lane.b32.xlu0 %v435, 1
      %v2076 = vpop.permute.xlu0 %2075
      %2077 = vrot.lane.b32.xlu0 %v436, 1
      %v2078 = vpop.permute.xlu0 %2077
      %v2079 = vsel %vm1540, %v2076, %v2078
      %v2083 = vmul.f32 %v2060, %v2076
      %v2084 = vmul.f32 %v2061, %v2079
      %v2085 = vmul.f32 %v2062, %v2078
      %v2086 = vmul.f32 %v2063, %v2076
      %v2087 = vmul.f32 %v2064, %v2079
      %v2088 = vmul.f32 %v2065, %v2078
      %v2089 = vmul.f32 %v2066, %v2076
      %v2090 = vmul.f32 %v2067, %v2079
      %v2091 = vmul.f32 %v2068, %v2078
      %v2092 = vmul.f32 %v2069, %v2076
      %v2093 = vmul.f32 %v2070, %v2079
      %v2094 = vmul.f32 %v2071, %v2078
      %v2095 = vmul.f32 %v2072, %v2076
      %v2096 = vmul.f32 %v2073, %v2079
      %v2097 = vmul.f32 %v2074, %v2078
      %s2098 = scalar_lea.vmem %s3, 640
      %v2099 = vld [vmem:[%s2098] sm:$0xff]
      %v2100 = vld [vmem:[%s2098 + $0x8] sm:$0xff]
      %v2101 = vld [vmem:[%s2098 + $0x10] sm:$0xff]
      %v2102 = vld [vmem:[%s2098 + $0x18] sm:$0xff]
      %v2103 = vld [vmem:[%s2098 + $0x20] sm:$0xff]
      %v2104 = vld [vmem:[%s2098 + $0x28] sm:$0xff]
      %v2105 = vld [vmem:[%s2098 + $0x30] sm:$0xff]
      %v2106 = vld [vmem:[%s2098 + $0x38] sm:$0xff]
      %v2107 = vld [vmem:[%s2098 + $0x40] sm:$0xff]
      %v2108 = vld [vmem:[%s2098 + $0x48] sm:$0xff]
      %v2109 = vld [vmem:[%s2098 + $0x50] sm:$0xff]
      %v2110 = vld [vmem:[%s2098 + $0x58] sm:$0xff]
      %v2111 = vld [vmem:[%s2098 + $0x60] sm:$0xff]
      %v2112 = vld [vmem:[%s2098 + $0x68] sm:$0xff]
      %v2113 = vld [vmem:[%s2098 + $0x70] sm:$0xff]
      %v2114 = vld [vmem:[%s2098 + $0x78] sm:$0xff]
      %2130 = vrot.lane.b32.xlu0 %v2083, 127
      %v2131 = vpop.permute.xlu0 %2130
      %2132 = vrot.lane.b32.xlu0 %v2084, 127
      %v2133 = vpop.permute.xlu0 %2132
      %2134 = vrot.lane.b32.xlu0 %v2085, 127
      %v2135 = vpop.permute.xlu0 %2134
      %2136 = vrot.lane.b32.xlu0 %v2086, 127
      %v2137 = vpop.permute.xlu0 %2136
      %2138 = vrot.lane.b32.xlu0 %v2087, 127
      %v2139 = vpop.permute.xlu0 %2138
      %2140 = vrot.lane.b32.xlu0 %v2088, 127
      %v2141 = vpop.permute.xlu0 %2140
      %2142 = vrot.lane.b32.xlu0 %v2089, 127
      %v2143 = vpop.permute.xlu0 %2142
      %2144 = vrot.lane.b32.xlu0 %v2090, 127
      %v2145 = vpop.permute.xlu0 %2144
      %2146 = vrot.lane.b32.xlu0 %v2091, 127
      %v2147 = vpop.permute.xlu0 %2146
      %2148 = vrot.lane.b32.xlu0 %v2092, 127
      %v2149 = vpop.permute.xlu0 %2148
      %2150 = vrot.lane.b32.xlu0 %v2093, 127
      %v2151 = vpop.permute.xlu0 %2150
      %2152 = vrot.lane.b32.xlu0 %v2094, 127
      %v2153 = vpop.permute.xlu0 %2152
      %2154 = vrot.lane.b32.xlu0 %v2095, 127
      %v2155 = vpop.permute.xlu0 %2154
      %2156 = vrot.lane.b32.xlu0 %v2096, 127
      %v2157 = vpop.permute.xlu0 %2156
      %2158 = vrot.lane.b32.xlu0 %v2097, 127
      %v2159 = vpop.permute.xlu0 %2158
      %v2160 = vsel %vm1458, %v2131, %v2133
      %v2161 = vsel %vm1458, %v2133, %v2135
      %v2162 = vsel %vm1458, %v2137, %v2139
      %v2163 = vsel %vm1458, %v2139, %v2141
      %v2164 = vsel %vm1458, %v2143, %v2145
      %v2165 = vsel %vm1458, %v2145, %v2147
      %v2166 = vsel %vm1458, %v2149, %v2151
      %v2167 = vsel %vm1458, %v2151, %v2153
      %v2168 = vsel %vm1458, %v2155, %v2157
      %v2169 = vsel %vm1458, %v2157, %v2159
      %v2181 = vsel %vm620, %v2099, 0
      %v2184 = vsel %vm620, %v2100, 0
      %v2187 = vsel %vm620, %v2101, 0
      %v2190 = vsel %vm620, %v2102, 0
      %v2193 = vsel %vm620, %v2103, 0
      %v2196 = vsel %vm620, %v2104, 0
      %v2199 = vsel %vm620, %v2105, 0
      %v2202 = vsel %vm620, %v2106, 0
      %v2205 = vsel %vm620, %v2107, 0
      %v2208 = vsel %vm620, %v2108, 0
      %v2211 = vsel %vm620, %v2109, 0
      %v2214 = vsel %vm620, %v2110, 0
      %v2217 = vsel %vm620, %v2111, 0
      %v2220 = vsel %vm620, %v2112, 0
      %v2223 = vsel %vm620, %v2113, 0
      %v2226 = vsel %vm620, %v2114, 0
      %2228 = vmatprep.subr.mxu0 0.0
      %2229 = vmatpush1.msra.mxu0 0.0
      %2230 = vmatprep.subr.mxu0 0.0
      %2231 = vmatpush1.msra.mxu0 0.0
      %2232 = vmatprep.subr.mxu0 0.0
      %2233 = vmatpush1.msra.mxu0 0.0
      %2234 = vmatprep.subr.mxu0 0.0
      %2235 = vmatpush1.msra.mxu0 0.0
      %2236 = vmatprep.subr.mxu0 0.0
      %2237 = vmatpush1.msra.mxu0 0.0
      %2238 = vmatprep.subr.mxu0 0.0
      %2239 = vmatpush1.msra.mxu0 0.0
      %2240 = vmatprep.subr.mxu0 0.0
      %2241 = vmatpush1.msra.mxu0 0.0
      %2242 = vmatprep.subr.mxu0 0.0
      %2243 = vmatpush1.msra.mxu0 0.0
      %2244 = vmatprep.subr.mxu0 0.0
      %2245 = vmatpush1.msra.mxu0 0.0
      %2246 = vmatprep.subr.mxu0 0.0
      %2247 = vmatpush1.msra.mxu0 0.0
      %2248 = vmatprep.subr.mxu0 0.0
      %2249 = vmatpush1.msra.mxu0 0.0
      %2250 = vmatprep.subr.mxu0 %v2169
      %2251 = vmatpush1.msra.mxu0 %v2168
      %2252 = vmatprep.subr.mxu0 %v2167
      %2253 = vmatpush1.msra.mxu0 %v2166
      %2254 = vmatprep.subr.mxu0 %v2165
      %2255 = vmatpush1.msra.mxu0 %v2164
      %2256 = vmatprep.subr.mxu0 %v2163
      %2257 = vmatpush1.msra.mxu0 %v2162
      %2258 = vmatprep.subr.mxu0 %v2161
      %2259 = vmatpush1.msra.mxu0 %v2160
      %2260 = vmatprep.subr.mxu0 0.0
      %2261 = vmatpush2.msra.mxu0 0.0
      %2262 = vmatprep.subr.mxu0 0.0
      %2263 = vmatpush2.msra.mxu0 0.0
      %2264 = vmatprep.subr.mxu0 0.0
      %2265 = vmatpush2.msra.mxu0 0.0
      %2266 = vmatprep.subr.mxu0 0.0
      %2267 = vmatpush2.msra.mxu0 0.0
      %2268 = vmatprep.subr.mxu0 0.0
      %2269 = vmatpush2.msra.mxu0 0.0
      %2270 = vmatprep.subr.mxu0 0.0
      %2271 = vmatpush2.msra.mxu0 0.0
      %2272 = vmatprep.subr.mxu0 0.0
      %2273 = vmatpush2.msra.mxu0 0.0
      %2274 = vmatprep.subr.mxu0 0.0
      %2275 = vmatpush2.msra.mxu0 0.0
      %2276 = vmatprep.subr.mxu0 0.0
      %2277 = vmatpush2.msra.mxu0 0.0
      %2278 = vmatprep.subr.mxu0 0.0
      %2279 = vmatpush2.msra.mxu0 0.0
      %2280 = vmatprep.subr.mxu0 0.0
      %2281 = vmatpush2.msra.mxu0 0.0
      %2282 = vmatprep.subr.mxu0 0.0
      %2283 = vmatpush2.msra.mxu0 0.0
      %2284 = vmatprep.subr.mxu0 0.0
      %2285 = vmatpush2.msra.mxu0 0.0
      %2286 = vmatprep.subr.mxu0 0.0
      %2287 = vmatpush2.msra.mxu0 0.0
      %2288 = vmatprep.subr.mxu0 0.0
      %2289 = vmatpush2.msra.mxu0 0.0
      %2290 = vmatprep.subr.mxu0 0.0
      %2291 = vmatpush2.msra.mxu0 0.0
      %2292 = vmatprep.mubr.f32.mxu0 0.0
      %2293 = vmatmul.mubr.f32.gmra.mxu0 %v2181
      %v2294 = vpop.f32.mrf.mxu0
      %v2295 = vadd.f32 0.0, %v2294
      %v2296 = vpop.f32.mrf.mxu0
      %v2297 = vadd.f32 0.0, %v2296
      %2298 = vmatprep.mubr.f32.mxu0 0.0
      %2299 = vmatmul.mubr.f32.gmra.mxu0 %v2184
      %v2300 = vpop.f32.mrf.mxu0
      %v2301 = vadd.f32 0.0, %v2300
      %v2302 = vpop.f32.mrf.mxu0
      %v2303 = vadd.f32 0.0, %v2302
      %2304 = vmatprep.mubr.f32.mxu0 0.0
      %2305 = vmatmul.mubr.f32.gmra.mxu0 %v2187
      %v2306 = vpop.f32.mrf.mxu0
      %v2307 = vadd.f32 0.0, %v2306
      %v2308 = vpop.f32.mrf.mxu0
      %v2309 = vadd.f32 0.0, %v2308
      %2310 = vmatprep.mubr.f32.mxu0 0.0
      %2311 = vmatmul.mubr.f32.gmra.mxu0 %v2190
      %v2312 = vpop.f32.mrf.mxu0
      %v2313 = vadd.f32 0.0, %v2312
      %v2314 = vpop.f32.mrf.mxu0
      %v2315 = vadd.f32 0.0, %v2314
      %2316 = vmatprep.mubr.f32.mxu0 0.0
      %2317 = vmatmul.mubr.f32.gmra.mxu0 %v2193
      %v2318 = vpop.f32.mrf.mxu0
      %v2319 = vadd.f32 0.0, %v2318
      %v2320 = vpop.f32.mrf.mxu0
      %v2321 = vadd.f32 0.0, %v2320
      %2322 = vmatprep.mubr.f32.mxu0 0.0
      %2323 = vmatmul.mubr.f32.gmra.mxu0 %v2196
      %v2324 = vpop.f32.mrf.mxu0
      %v2325 = vadd.f32 0.0, %v2324
      %v2326 = vpop.f32.mrf.mxu0
      %v2327 = vadd.f32 0.0, %v2326
      %2328 = vmatprep.mubr.f32.mxu0 0.0
      %2329 = vmatmul.mubr.f32.gmra.mxu0 %v2199
      %v2330 = vpop.f32.mrf.mxu0
      %v2331 = vadd.f32 0.0, %v2330
      %v2332 = vpop.f32.mrf.mxu0
      %v2333 = vadd.f32 0.0, %v2332
      %2334 = vmatprep.mubr.f32.mxu0 0.0
      %2335 = vmatmul.mubr.f32.gmra.mxu0 %v2202
      %v2336 = vpop.f32.mrf.mxu0
      %v2337 = vadd.f32 0.0, %v2336
      %v2338 = vpop.f32.mrf.mxu0
      %v2339 = vadd.f32 0.0, %v2338
      %2340 = vmatprep.mubr.f32.mxu0 0.0
      %2341 = vmatmul.mubr.f32.gmra.mxu0 %v2205
      %v2342 = vpop.f32.mrf.mxu0
      %v2343 = vadd.f32 0.0, %v2342
      %v2344 = vpop.f32.mrf.mxu0
      %v2345 = vadd.f32 0.0, %v2344
      %2346 = vmatprep.mubr.f32.mxu0 0.0
      %2347 = vmatmul.mubr.f32.gmra.mxu0 %v2208
      %v2348 = vpop.f32.mrf.mxu0
      %v2349 = vadd.f32 0.0, %v2348
      %v2350 = vpop.f32.mrf.mxu0
      %v2351 = vadd.f32 0.0, %v2350
      %2352 = vmatprep.mubr.f32.mxu0 0.0
      %2353 = vmatmul.mubr.f32.gmra.mxu0 %v2211
      %v2354 = vpop.f32.mrf.mxu0
      %v2355 = vadd.f32 0.0, %v2354
      %v2356 = vpop.f32.mrf.mxu0
      %v2357 = vadd.f32 0.0, %v2356
      %2358 = vmatprep.mubr.f32.mxu0 0.0
      %2359 = vmatmul.mubr.f32.gmra.mxu0 %v2214
      %v2360 = vpop.f32.mrf.mxu0
      %v2361 = vadd.f32 0.0, %v2360
      %v2362 = vpop.f32.mrf.mxu0
      %v2363 = vadd.f32 0.0, %v2362
      %2364 = vmatprep.mubr.f32.mxu0 0.0
      %2365 = vmatmul.mubr.f32.gmra.mxu0 %v2217
      %v2366 = vpop.f32.mrf.mxu0
      %v2367 = vadd.f32 0.0, %v2366
      %v2368 = vpop.f32.mrf.mxu0
      %v2369 = vadd.f32 0.0, %v2368
      %2370 = vmatprep.mubr.f32.mxu0 0.0
      %2371 = vmatmul.mubr.f32.gmra.mxu0 %v2220
      %v2372 = vpop.f32.mrf.mxu0
      %v2373 = vadd.f32 0.0, %v2372
      %v2374 = vpop.f32.mrf.mxu0
      %v2375 = vadd.f32 0.0, %v2374
      %2376 = vmatprep.mubr.f32.mxu0 0.0
      %2377 = vmatmul.mubr.f32.gmra.mxu0 %v2223
      %v2378 = vpop.f32.mrf.mxu0
      %v2379 = vadd.f32 0.0, %v2378
      %v2380 = vpop.f32.mrf.mxu0
      %v2381 = vadd.f32 0.0, %v2380
      %2382 = vmatprep.mubr.f32.mxu0 0.0
      %2383 = vmatmul.mubr.f32.gmra.mxu0 %v2226
      %v2384 = vpop.f32.mrf.mxu0
      %v2385 = vadd.f32 0.0, %v2384
      %v2386 = vpop.f32.mrf.mxu0
      %v2387 = vadd.f32 0.0, %v2386
      %2388 = vdwg.mxu0
      %v2389 = vadd.f32 %v2028, %v2295
      %v2390 = vadd.f32 %v2029, %v2297
      %v2391 = vadd.f32 %v2030, %v2301
      %v2392 = vadd.f32 %v2031, %v2303
      %v2393 = vadd.f32 %v2032, %v2307
      %v2394 = vadd.f32 %v2033, %v2309
      %v2395 = vadd.f32 %v2034, %v2313
      %v2396 = vadd.f32 %v2035, %v2315
      %v2397 = vadd.f32 %v2036, %v2319
      %v2398 = vadd.f32 %v2037, %v2321
      %v2399 = vadd.f32 %v2038, %v2325
      %v2400 = vadd.f32 %v2039, %v2327
      %v2401 = vadd.f32 %v2040, %v2331
      %v2402 = vadd.f32 %v2041, %v2333
      %v2403 = vadd.f32 %v2042, %v2337
      %v2404 = vadd.f32 %v2043, %v2339
      %v2405 = vadd.f32 %v2044, %v2343
      %v2406 = vadd.f32 %v2045, %v2345
      %v2407 = vadd.f32 %v2046, %v2349
      %v2408 = vadd.f32 %v2047, %v2351
      %v2409 = vadd.f32 %v2048, %v2355
      %v2410 = vadd.f32 %v2049, %v2357
      %v2411 = vadd.f32 %v2050, %v2361
      %v2412 = vadd.f32 %v2051, %v2363
      %v2413 = vadd.f32 %v2052, %v2367
      %v2414 = vadd.f32 %v2053, %v2369
      %v2415 = vadd.f32 %v2054, %v2373
      %v2416 = vadd.f32 %v2055, %v2375
      %v2417 = vadd.f32 %v2056, %v2379
      %v2418 = vadd.f32 %v2057, %v2381
      %v2419 = vadd.f32 %v2058, %v2385
      %v2420 = vadd.f32 %v2059, %v2387
      %2421 = vrot.lane.b32.xlu0 %v429, 15
      %v2422 = vpop.permute.xlu0 %2421
      %2423 = vrot.lane.b32.xlu0 %v430, 15
      %v2424 = vpop.permute.xlu0 %2423
      %v2425 = vsel %vm1192, %v2422, %v2424
      %v2429 = vmul.f32 %v2060, %v2422
      %v2430 = vmul.f32 %v2061, %v2425
      %v2431 = vmul.f32 %v2062, %v2424
      %v2432 = vmul.f32 %v2063, %v2422
      %v2433 = vmul.f32 %v2064, %v2425
      %v2434 = vmul.f32 %v2065, %v2424
      %v2435 = vmul.f32 %v2066, %v2422
      %v2436 = vmul.f32 %v2067, %v2425
      %v2437 = vmul.f32 %v2068, %v2424
      %v2438 = vmul.f32 %v2069, %v2422
      %v2439 = vmul.f32 %v2070, %v2425
      %v2440 = vmul.f32 %v2071, %v2424
      %v2441 = vmul.f32 %v2072, %v2422
      %v2442 = vmul.f32 %v2073, %v2425
      %v2443 = vmul.f32 %v2074, %v2424
      %s2444 = scalar_lea.vmem %s3, 768
      %v2445 = vld [vmem:[%s2444] sm:$0xff]
      %v2446 = vld [vmem:[%s2444 + $0x8] sm:$0xff]
      %v2447 = vld [vmem:[%s2444 + $0x10] sm:$0xff]
      %v2448 = vld [vmem:[%s2444 + $0x18] sm:$0xff]
      %v2449 = vld [vmem:[%s2444 + $0x20] sm:$0xff]
      %v2450 = vld [vmem:[%s2444 + $0x28] sm:$0xff]
      %v2451 = vld [vmem:[%s2444 + $0x30] sm:$0xff]
      %v2452 = vld [vmem:[%s2444 + $0x38] sm:$0xff]
      %v2453 = vld [vmem:[%s2444 + $0x40] sm:$0xff]
      %v2454 = vld [vmem:[%s2444 + $0x48] sm:$0xff]
      %v2455 = vld [vmem:[%s2444 + $0x50] sm:$0xff]
      %v2456 = vld [vmem:[%s2444 + $0x58] sm:$0xff]
      %v2457 = vld [vmem:[%s2444 + $0x60] sm:$0xff]
      %v2458 = vld [vmem:[%s2444 + $0x68] sm:$0xff]
      %v2459 = vld [vmem:[%s2444 + $0x70] sm:$0xff]
      %v2460 = vld [vmem:[%s2444 + $0x78] sm:$0xff]
      %2476 = vrot.lane.b32.xlu0 %v2429, 113
      %v2477 = vpop.permute.xlu0 %2476
      %2478 = vrot.lane.b32.xlu0 %v2430, 113
      %v2479 = vpop.permute.xlu0 %2478
      %2480 = vrot.lane.b32.xlu0 %v2431, 113
      %v2481 = vpop.permute.xlu0 %2480
      %2482 = vrot.lane.b32.xlu0 %v2432, 113
      %v2483 = vpop.permute.xlu0 %2482
      %2484 = vrot.lane.b32.xlu0 %v2433, 113
      %v2485 = vpop.permute.xlu0 %2484
      %2486 = vrot.lane.b32.xlu0 %v2434, 113
      %v2487 = vpop.permute.xlu0 %2486
      %2488 = vrot.lane.b32.xlu0 %v2435, 113
      %v2489 = vpop.permute.xlu0 %2488
      %2490 = vrot.lane.b32.xlu0 %v2436, 113
      %v2491 = vpop.permute.xlu0 %2490
      %2492 = vrot.lane.b32.xlu0 %v2437, 113
      %v2493 = vpop.permute.xlu0 %2492
      %2494 = vrot.lane.b32.xlu0 %v2438, 113
      %v2495 = vpop.permute.xlu0 %2494
      %2496 = vrot.lane.b32.xlu0 %v2439, 113
      %v2497 = vpop.permute.xlu0 %2496
      %2498 = vrot.lane.b32.xlu0 %v2440, 113
      %v2499 = vpop.permute.xlu0 %2498
      %2500 = vrot.lane.b32.xlu0 %v2441, 113
      %v2501 = vpop.permute.xlu0 %2500
      %2502 = vrot.lane.b32.xlu0 %v2442, 113
      %v2503 = vpop.permute.xlu0 %2502
      %2504 = vrot.lane.b32.xlu0 %v2443, 113
      %v2505 = vpop.permute.xlu0 %2504
      %v2506 = vsel %vm1110, %v2477, %v2479
      %v2507 = vsel %vm1110, %v2479, %v2481
      %v2508 = vsel %vm1110, %v2483, %v2485
      %v2509 = vsel %vm1110, %v2485, %v2487
      %v2510 = vsel %vm1110, %v2489, %v2491
      %v2511 = vsel %vm1110, %v2491, %v2493
      %v2512 = vsel %vm1110, %v2495, %v2497
      %v2513 = vsel %vm1110, %v2497, %v2499
      %v2514 = vsel %vm1110, %v2501, %v2503
      %v2515 = vsel %vm1110, %v2503, %v2505
      %v2527 = vsel %vm620, %v2445, 0
      %v2530 = vsel %vm620, %v2446, 0
      %v2533 = vsel %vm620, %v2447, 0
      %v2536 = vsel %vm620, %v2448, 0
      %v2539 = vsel %vm620, %v2449, 0
      %v2542 = vsel %vm620, %v2450, 0
      %v2545 = vsel %vm620, %v2451, 0
      %v2548 = vsel %vm620, %v2452, 0
      %v2551 = vsel %vm620, %v2453, 0
      %v2554 = vsel %vm620, %v2454, 0
      %v2557 = vsel %vm620, %v2455, 0
      %v2560 = vsel %vm620, %v2456, 0
      %v2563 = vsel %vm620, %v2457, 0
      %v2566 = vsel %vm620, %v2458, 0
      %v2569 = vsel %vm620, %v2459, 0
      %v2572 = vsel %vm620, %v2460, 0
      %2574 = vmatprep.subr.mxu0 0.0
      %2575 = vmatpush1.msra.mxu0 0.0
      %2576 = vmatprep.subr.mxu0 0.0
      %2577 = vmatpush1.msra.mxu0 0.0
      %2578 = vmatprep.subr.mxu0 0.0
      %2579 = vmatpush1.msra.mxu0 0.0
      %2580 = vmatprep.subr.mxu0 0.0
      %2581 = vmatpush1.msra.mxu0 0.0
      %2582 = vmatprep.subr.mxu0 0.0
      %2583 = vmatpush1.msra.mxu0 0.0
      %2584 = vmatprep.subr.mxu0 0.0
      %2585 = vmatpush1.msra.mxu0 0.0
      %2586 = vmatprep.subr.mxu0 0.0
      %2587 = vmatpush1.msra.mxu0 0.0
      %2588 = vmatprep.subr.mxu0 0.0
      %2589 = vmatpush1.msra.mxu0 0.0
      %2590 = vmatprep.subr.mxu0 0.0
      %2591 = vmatpush1.msra.mxu0 0.0
      %2592 = vmatprep.subr.mxu0 0.0
      %2593 = vmatpush1.msra.mxu0 0.0
      %2594 = vmatprep.subr.mxu0 0.0
      %2595 = vmatpush1.msra.mxu0 0.0
      %2596 = vmatprep.subr.mxu0 %v2515
      %2597 = vmatpush1.msra.mxu0 %v2514
      %2598 = vmatprep.subr.mxu0 %v2513
      %2599 = vmatpush1.msra.mxu0 %v2512
      %2600 = vmatprep.subr.mxu0 %v2511
      %2601 = vmatpush1.msra.mxu0 %v2510
      %2602 = vmatprep.subr.mxu0 %v2509
      %2603 = vmatpush1.msra.mxu0 %v2508
      %2604 = vmatprep.subr.mxu0 %v2507
      %2605 = vmatpush1.msra.mxu0 %v2506
      %2606 = vmatprep.subr.mxu0 0.0
      %2607 = vmatpush2.msra.mxu0 0.0
      %2608 = vmatprep.subr.mxu0 0.0
      %2609 = vmatpush2.msra.mxu0 0.0
      %2610 = vmatprep.subr.mxu0 0.0
      %2611 = vmatpush2.msra.mxu0 0.0
      %2612 = vmatprep.subr.mxu0 0.0
      %2613 = vmatpush2.msra.mxu0 0.0
      %2614 = vmatprep.subr.mxu0 0.0
      %2615 = vmatpush2.msra.mxu0 0.0
      %2616 = vmatprep.subr.mxu0 0.0
      %2617 = vmatpush2.msra.mxu0 0.0
      %2618 = vmatprep.subr.mxu0 0.0
      %2619 = vmatpush2.msra.mxu0 0.0
      %2620 = vmatprep.subr.mxu0 0.0
      %2621 = vmatpush2.msra.mxu0 0.0
      %2622 = vmatprep.subr.mxu0 0.0
      %2623 = vmatpush2.msra.mxu0 0.0
      %2624 = vmatprep.subr.mxu0 0.0
      %2625 = vmatpush2.msra.mxu0 0.0
      %2626 = vmatprep.subr.mxu0 0.0
      %2627 = vmatpush2.msra.mxu0 0.0
      %2628 = vmatprep.subr.mxu0 0.0
      %2629 = vmatpush2.msra.mxu0 0.0
      %2630 = vmatprep.subr.mxu0 0.0
      %2631 = vmatpush2.msra.mxu0 0.0
      %2632 = vmatprep.subr.mxu0 0.0
      %2633 = vmatpush2.msra.mxu0 0.0
      %2634 = vmatprep.subr.mxu0 0.0
      %2635 = vmatpush2.msra.mxu0 0.0
      %2636 = vmatprep.subr.mxu0 0.0
      %2637 = vmatpush2.msra.mxu0 0.0
      %2638 = vmatprep.mubr.f32.mxu0 0.0
      %2639 = vmatmul.mubr.f32.gmra.mxu0 %v2527
      %v2640 = vpop.f32.mrf.mxu0
      %v2641 = vadd.f32 0.0, %v2640
      %v2642 = vpop.f32.mrf.mxu0
      %v2643 = vadd.f32 0.0, %v2642
      %2644 = vmatprep.mubr.f32.mxu0 0.0
      %2645 = vmatmul.mubr.f32.gmra.mxu0 %v2530
      %v2646 = vpop.f32.mrf.mxu0
      %v2647 = vadd.f32 0.0, %v2646
      %v2648 = vpop.f32.mrf.mxu0
      %v2649 = vadd.f32 0.0, %v2648
      %2650 = vmatprep.mubr.f32.mxu0 0.0
      %2651 = vmatmul.mubr.f32.gmra.mxu0 %v2533
      %v2652 = vpop.f32.mrf.mxu0
      %v2653 = vadd.f32 0.0, %v2652
      %v2654 = vpop.f32.mrf.mxu0
      %v2655 = vadd.f32 0.0, %v2654
      %2656 = vmatprep.mubr.f32.mxu0 0.0
      %2657 = vmatmul.mubr.f32.gmra.mxu0 %v2536
      %v2658 = vpop.f32.mrf.mxu0
      %v2659 = vadd.f32 0.0, %v2658
      %v2660 = vpop.f32.mrf.mxu0
      %v2661 = vadd.f32 0.0, %v2660
      %2662 = vmatprep.mubr.f32.mxu0 0.0
      %2663 = vmatmul.mubr.f32.gmra.mxu0 %v2539
      %v2664 = vpop.f32.mrf.mxu0
      %v2665 = vadd.f32 0.0, %v2664
      %v2666 = vpop.f32.mrf.mxu0
      %v2667 = vadd.f32 0.0, %v2666
      %2668 = vmatprep.mubr.f32.mxu0 0.0
      %2669 = vmatmul.mubr.f32.gmra.mxu0 %v2542
      %v2670 = vpop.f32.mrf.mxu0
      %v2671 = vadd.f32 0.0, %v2670
      %v2672 = vpop.f32.mrf.mxu0
      %v2673 = vadd.f32 0.0, %v2672
      %2674 = vmatprep.mubr.f32.mxu0 0.0
      %2675 = vmatmul.mubr.f32.gmra.mxu0 %v2545
      %v2676 = vpop.f32.mrf.mxu0
      %v2677 = vadd.f32 0.0, %v2676
      %v2678 = vpop.f32.mrf.mxu0
      %v2679 = vadd.f32 0.0, %v2678
      %2680 = vmatprep.mubr.f32.mxu0 0.0
      %2681 = vmatmul.mubr.f32.gmra.mxu0 %v2548
      %v2682 = vpop.f32.mrf.mxu0
      %v2683 = vadd.f32 0.0, %v2682
      %v2684 = vpop.f32.mrf.mxu0
      %v2685 = vadd.f32 0.0, %v2684
      %2686 = vmatprep.mubr.f32.mxu0 0.0
      %2687 = vmatmul.mubr.f32.gmra.mxu0 %v2551
      %v2688 = vpop.f32.mrf.mxu0
      %v2689 = vadd.f32 0.0, %v2688
      %v2690 = vpop.f32.mrf.mxu0
      %v2691 = vadd.f32 0.0, %v2690
      %2692 = vmatprep.mubr.f32.mxu0 0.0
      %2693 = vmatmul.mubr.f32.gmra.mxu0 %v2554
      %v2694 = vpop.f32.mrf.mxu0
      %v2695 = vadd.f32 0.0, %v2694
      %v2696 = vpop.f32.mrf.mxu0
      %v2697 = vadd.f32 0.0, %v2696
      %2698 = vmatprep.mubr.f32.mxu0 0.0
      %2699 = vmatmul.mubr.f32.gmra.mxu0 %v2557
      %v2700 = vpop.f32.mrf.mxu0
      %v2701 = vadd.f32 0.0, %v2700
      %v2702 = vpop.f32.mrf.mxu0
      %v2703 = vadd.f32 0.0, %v2702
      %2704 = vmatprep.mubr.f32.mxu0 0.0
      %2705 = vmatmul.mubr.f32.gmra.mxu0 %v2560
      %v2706 = vpop.f32.mrf.mxu0
      %v2707 = vadd.f32 0.0, %v2706
      %v2708 = vpop.f32.mrf.mxu0
      %v2709 = vadd.f32 0.0, %v2708
      %2710 = vmatprep.mubr.f32.mxu0 0.0
      %2711 = vmatmul.mubr.f32.gmra.mxu0 %v2563
      %v2712 = vpop.f32.mrf.mxu0
      %v2713 = vadd.f32 0.0, %v2712
      %v2714 = vpop.f32.mrf.mxu0
      %v2715 = vadd.f32 0.0, %v2714
      %2716 = vmatprep.mubr.f32.mxu0 0.0
      %2717 = vmatmul.mubr.f32.gmra.mxu0 %v2566
      %v2718 = vpop.f32.mrf.mxu0
      %v2719 = vadd.f32 0.0, %v2718
      %v2720 = vpop.f32.mrf.mxu0
      %v2721 = vadd.f32 0.0, %v2720
      %2722 = vmatprep.mubr.f32.mxu0 0.0
      %2723 = vmatmul.mubr.f32.gmra.mxu0 %v2569
      %v2724 = vpop.f32.mrf.mxu0
      %v2725 = vadd.f32 0.0, %v2724
      %v2726 = vpop.f32.mrf.mxu0
      %v2727 = vadd.f32 0.0, %v2726
      %2728 = vmatprep.mubr.f32.mxu0 0.0
      %2729 = vmatmul.mubr.f32.gmra.mxu0 %v2572
      %v2730 = vpop.f32.mrf.mxu0
      %v2731 = vadd.f32 0.0, %v2730
      %v2732 = vpop.f32.mrf.mxu0
      %v2733 = vadd.f32 0.0, %v2732
      %2734 = vdwg.mxu0
      %v2735 = vadd.f32 %v2389, %v2641
      %v2736 = vadd.f32 %v2390, %v2643
      %v2737 = vadd.f32 %v2391, %v2647
      %v2738 = vadd.f32 %v2392, %v2649
      %v2739 = vadd.f32 %v2393, %v2653
      %v2740 = vadd.f32 %v2394, %v2655
      %v2741 = vadd.f32 %v2395, %v2659
      %v2742 = vadd.f32 %v2396, %v2661
      %v2743 = vadd.f32 %v2397, %v2665
      %v2744 = vadd.f32 %v2398, %v2667
      %v2745 = vadd.f32 %v2399, %v2671
      %v2746 = vadd.f32 %v2400, %v2673
      %v2747 = vadd.f32 %v2401, %v2677
      %v2748 = vadd.f32 %v2402, %v2679
      %v2749 = vadd.f32 %v2403, %v2683
      %v2750 = vadd.f32 %v2404, %v2685
      %v2751 = vadd.f32 %v2405, %v2689
      %v2752 = vadd.f32 %v2406, %v2691
      %v2753 = vadd.f32 %v2407, %v2695
      %v2754 = vadd.f32 %v2408, %v2697
      %v2755 = vadd.f32 %v2409, %v2701
      %v2756 = vadd.f32 %v2410, %v2703
      %v2757 = vadd.f32 %v2411, %v2707
      %v2758 = vadd.f32 %v2412, %v2709
      %v2759 = vadd.f32 %v2413, %v2713
      %v2760 = vadd.f32 %v2414, %v2715
      %v2761 = vadd.f32 %v2415, %v2719
      %v2762 = vadd.f32 %v2416, %v2721
      %v2763 = vadd.f32 %v2417, %v2725
      %v2764 = vadd.f32 %v2418, %v2727
      %v2765 = vadd.f32 %v2419, %v2731
      %v2766 = vadd.f32 %v2420, %v2733
      %s2767 = scalar_lea.vmem %s3, 896
      %v2768 = vld [vmem:[%s2767] sm:$0xff]
      %v2769 = vld [vmem:[%s2767 + $0x8] sm:$0xff]
      %v2770 = vld [vmem:[%s2767 + $0x10] sm:$0xff]
      %v2771 = vld [vmem:[%s2767 + $0x18] sm:$0xff]
      %v2772 = vld [vmem:[%s2767 + $0x20] sm:$0xff]
      %v2773 = vld [vmem:[%s2767 + $0x28] sm:$0xff]
      %v2774 = vld [vmem:[%s2767 + $0x30] sm:$0xff]
      %v2775 = vld [vmem:[%s2767 + $0x38] sm:$0xff]
      %v2776 = vld [vmem:[%s2767 + $0x40] sm:$0xff]
      %v2777 = vld [vmem:[%s2767 + $0x48] sm:$0xff]
      %v2778 = vld [vmem:[%s2767 + $0x50] sm:$0xff]
      %v2779 = vld [vmem:[%s2767 + $0x58] sm:$0xff]
      %v2780 = vld [vmem:[%s2767 + $0x60] sm:$0xff]
      %v2781 = vld [vmem:[%s2767 + $0x68] sm:$0xff]
      %v2782 = vld [vmem:[%s2767 + $0x70] sm:$0xff]
      %v2783 = vld [vmem:[%s2767 + $0x78] sm:$0xff]
      %2799 = vrot.lane.b32.xlu0 %v2060, 112
      %v2800 = vpop.permute.xlu0 %2799
      %2801 = vrot.lane.b32.xlu0 %v2061, 112
      %v2802 = vpop.permute.xlu0 %2801
      %2803 = vrot.lane.b32.xlu0 %v2062, 112
      %v2804 = vpop.permute.xlu0 %2803
      %2805 = vrot.lane.b32.xlu0 %v2063, 112
      %v2806 = vpop.permute.xlu0 %2805
      %2807 = vrot.lane.b32.xlu0 %v2064, 112
      %v2808 = vpop.permute.xlu0 %2807
      %2809 = vrot.lane.b32.xlu0 %v2065, 112
      %v2810 = vpop.permute.xlu0 %2809
      %2811 = vrot.lane.b32.xlu0 %v2066, 112
      %v2812 = vpop.permute.xlu0 %2811
      %2813 = vrot.lane.b32.xlu0 %v2067, 112
      %v2814 = vpop.permute.xlu0 %2813
      %2815 = vrot.lane.b32.xlu0 %v2068, 112
      %v2816 = vpop.permute.xlu0 %2815
      %2817 = vrot.lane.b32.xlu0 %v2069, 112
      %v2818 = vpop.permute.xlu0 %2817
      %2819 = vrot.lane.b32.xlu0 %v2070, 112
      %v2820 = vpop.permute.xlu0 %2819
      %2821 = vrot.lane.b32.xlu0 %v2071, 112
      %v2822 = vpop.permute.xlu0 %2821
      %2823 = vrot.lane.b32.xlu0 %v2072, 112
      %v2824 = vpop.permute.xlu0 %2823
      %2825 = vrot.lane.b32.xlu0 %v2073, 112
      %v2826 = vpop.permute.xlu0 %2825
      %2827 = vrot.lane.b32.xlu0 %v2074, 112
      %v2828 = vpop.permute.xlu0 %2827
      %vm2829 = vcmask 916480
      %v2830 = vsel %vm2829, %v2800, %v2802
      %v2831 = vsel %vm2829, %v2802, %v2804
      %v2832 = vsel %vm2829, %v2806, %v2808
      %v2833 = vsel %vm2829, %v2808, %v2810
      %v2834 = vsel %vm2829, %v2812, %v2814
      %v2835 = vsel %vm2829, %v2814, %v2816
      %v2836 = vsel %vm2829, %v2818, %v2820
      %v2837 = vsel %vm2829, %v2820, %v2822
      %v2838 = vsel %vm2829, %v2824, %v2826
      %v2839 = vsel %vm2829, %v2826, %v2828
      %v2851 = vsel %vm620, %v2768, 0
      %v2854 = vsel %vm620, %v2769, 0
      %v2857 = vsel %vm620, %v2770, 0
      %v2860 = vsel %vm620, %v2771, 0
      %v2863 = vsel %vm620, %v2772, 0
      %v2866 = vsel %vm620, %v2773, 0
      %v2869 = vsel %vm620, %v2774, 0
      %v2872 = vsel %vm620, %v2775, 0
      %v2875 = vsel %vm620, %v2776, 0
      %v2878 = vsel %vm620, %v2777, 0
      %v2881 = vsel %vm620, %v2778, 0
      %v2884 = vsel %vm620, %v2779, 0
      %v2887 = vsel %vm620, %v2780, 0
      %v2890 = vsel %vm620, %v2781, 0
      %v2893 = vsel %vm620, %v2782, 0
      %v2896 = vsel %vm620, %v2783, 0
      %2898 = vmatprep.subr.mxu0 0.0
      %2899 = vmatpush1.msra.mxu0 0.0
      %2900 = vmatprep.subr.mxu0 0.0
      %2901 = vmatpush1.msra.mxu0 0.0
      %2902 = vmatprep.subr.mxu0 0.0
      %2903 = vmatpush1.msra.mxu0 0.0
      %2904 = vmatprep.subr.mxu0 0.0
      %2905 = vmatpush1.msra.mxu0 0.0
      %2906 = vmatprep.subr.mxu0 0.0
      %2907 = vmatpush1.msra.mxu0 0.0
      %2908 = vmatprep.subr.mxu0 0.0
      %2909 = vmatpush1.msra.mxu0 0.0
      %2910 = vmatprep.subr.mxu0 0.0
      %2911 = vmatpush1.msra.mxu0 0.0
      %2912 = vmatprep.subr.mxu0 0.0
      %2913 = vmatpush1.msra.mxu0 0.0
      %2914 = vmatprep.subr.mxu0 0.0
      %2915 = vmatpush1.msra.mxu0 0.0
      %2916 = vmatprep.subr.mxu0 0.0
      %2917 = vmatpush1.msra.mxu0 0.0
      %2918 = vmatprep.subr.mxu0 0.0
      %2919 = vmatpush1.msra.mxu0 0.0
      %2920 = vmatprep.subr.mxu0 %v2839
      %2921 = vmatpush1.msra.mxu0 %v2838
      %2922 = vmatprep.subr.mxu0 %v2837
      %2923 = vmatpush1.msra.mxu0 %v2836
      %2924 = vmatprep.subr.mxu0 %v2835
      %2925 = vmatpush1.msra.mxu0 %v2834
      %2926 = vmatprep.subr.mxu0 %v2833
      %2927 = vmatpush1.msra.mxu0 %v2832
      %2928 = vmatprep.subr.mxu0 %v2831
      %2929 = vmatpush1.msra.mxu0 %v2830
      %2930 = vmatprep.subr.mxu0 0.0
      %2931 = vmatpush2.msra.mxu0 0.0
      %2932 = vmatprep.subr.mxu0 0.0
      %2933 = vmatpush2.msra.mxu0 0.0
      %2934 = vmatprep.subr.mxu0 0.0
      %2935 = vmatpush2.msra.mxu0 0.0
      %2936 = vmatprep.subr.mxu0 0.0
      %2937 = vmatpush2.msra.mxu0 0.0
      %2938 = vmatprep.subr.mxu0 0.0
      %2939 = vmatpush2.msra.mxu0 0.0
      %2940 = vmatprep.subr.mxu0 0.0
      %2941 = vmatpush2.msra.mxu0 0.0
      %2942 = vmatprep.subr.mxu0 0.0
      %2943 = vmatpush2.msra.mxu0 0.0
      %2944 = vmatprep.subr.mxu0 0.0
      %2945 = vmatpush2.msra.mxu0 0.0
      %2946 = vmatprep.subr.mxu0 0.0
      %2947 = vmatpush2.msra.mxu0 0.0
      %2948 = vmatprep.subr.mxu0 0.0
      %2949 = vmatpush2.msra.mxu0 0.0
      %2950 = vmatprep.subr.mxu0 0.0
      %2951 = vmatpush2.msra.mxu0 0.0
      %2952 = vmatprep.subr.mxu0 0.0
      %2953 = vmatpush2.msra.mxu0 0.0
      %2954 = vmatprep.subr.mxu0 0.0
      %2955 = vmatpush2.msra.mxu0 0.0
      %2956 = vmatprep.subr.mxu0 0.0
      %2957 = vmatpush2.msra.mxu0 0.0
      %2958 = vmatprep.subr.mxu0 0.0
      %2959 = vmatpush2.msra.mxu0 0.0
      %2960 = vmatprep.subr.mxu0 0.0
      %2961 = vmatpush2.msra.mxu0 0.0
      %2962 = vmatprep.mubr.f32.mxu0 0.0
      %2963 = vmatmul.mubr.f32.gmra.mxu0 %v2851
      %v2964 = vpop.f32.mrf.mxu0
      %v2965 = vadd.f32 0.0, %v2964
      %v2966 = vpop.f32.mrf.mxu0
      %v2967 = vadd.f32 0.0, %v2966
      %2968 = vmatprep.mubr.f32.mxu0 0.0
      %2969 = vmatmul.mubr.f32.gmra.mxu0 %v2854
      %v2970 = vpop.f32.mrf.mxu0
      %v2971 = vadd.f32 0.0, %v2970
      %v2972 = vpop.f32.mrf.mxu0
      %v2973 = vadd.f32 0.0, %v2972
      %2974 = vmatprep.mubr.f32.mxu0 0.0
      %2975 = vmatmul.mubr.f32.gmra.mxu0 %v2857
      %v2976 = vpop.f32.mrf.mxu0
      %v2977 = vadd.f32 0.0, %v2976
      %v2978 = vpop.f32.mrf.mxu0
      %v2979 = vadd.f32 0.0, %v2978
      %2980 = vmatprep.mubr.f32.mxu0 0.0
      %2981 = vmatmul.mubr.f32.gmra.mxu0 %v2860
      %v2982 = vpop.f32.mrf.mxu0
      %v2983 = vadd.f32 0.0, %v2982
      %v2984 = vpop.f32.mrf.mxu0
      %v2985 = vadd.f32 0.0, %v2984
      %2986 = vmatprep.mubr.f32.mxu0 0.0
      %2987 = vmatmul.mubr.f32.gmra.mxu0 %v2863
      %v2988 = vpop.f32.mrf.mxu0
      %v2989 = vadd.f32 0.0, %v2988
      %v2990 = vpop.f32.mrf.mxu0
      %v2991 = vadd.f32 0.0, %v2990
      %2992 = vmatprep.mubr.f32.mxu0 0.0
      %2993 = vmatmul.mubr.f32.gmra.mxu0 %v2866
      %v2994 = vpop.f32.mrf.mxu0
      %v2995 = vadd.f32 0.0, %v2994
      %v2996 = vpop.f32.mrf.mxu0
      %v2997 = vadd.f32 0.0, %v2996
      %2998 = vmatprep.mubr.f32.mxu0 0.0
      %2999 = vmatmul.mubr.f32.gmra.mxu0 %v2869
      %v3000 = vpop.f32.mrf.mxu0
      %v3001 = vadd.f32 0.0, %v3000
      %v3002 = vpop.f32.mrf.mxu0
      %v3003 = vadd.f32 0.0, %v3002
      %3004 = vmatprep.mubr.f32.mxu0 0.0
      %3005 = vmatmul.mubr.f32.gmra.mxu0 %v2872
      %v3006 = vpop.f32.mrf.mxu0
      %v3007 = vadd.f32 0.0, %v3006
      %v3008 = vpop.f32.mrf.mxu0
      %v3009 = vadd.f32 0.0, %v3008
      %3010 = vmatprep.mubr.f32.mxu0 0.0
      %3011 = vmatmul.mubr.f32.gmra.mxu0 %v2875
      %v3012 = vpop.f32.mrf.mxu0
      %v3013 = vadd.f32 0.0, %v3012
      %v3014 = vpop.f32.mrf.mxu0
      %v3015 = vadd.f32 0.0, %v3014
      %3016 = vmatprep.mubr.f32.mxu0 0.0
      %3017 = vmatmul.mubr.f32.gmra.mxu0 %v2878
      %v3018 = vpop.f32.mrf.mxu0
      %v3019 = vadd.f32 0.0, %v3018
      %v3020 = vpop.f32.mrf.mxu0
      %v3021 = vadd.f32 0.0, %v3020
      %3022 = vmatprep.mubr.f32.mxu0 0.0
      %3023 = vmatmul.mubr.f32.gmra.mxu0 %v2881
      %v3024 = vpop.f32.mrf.mxu0
      %v3025 = vadd.f32 0.0, %v3024
      %v3026 = vpop.f32.mrf.mxu0
      %v3027 = vadd.f32 0.0, %v3026
      %3028 = vmatprep.mubr.f32.mxu0 0.0
      %3029 = vmatmul.mubr.f32.gmra.mxu0 %v2884
      %v3030 = vpop.f32.mrf.mxu0
      %v3031 = vadd.f32 0.0, %v3030
      %v3032 = vpop.f32.mrf.mxu0
      %v3033 = vadd.f32 0.0, %v3032
      %3034 = vmatprep.mubr.f32.mxu0 0.0
      %3035 = vmatmul.mubr.f32.gmra.mxu0 %v2887
      %v3036 = vpop.f32.mrf.mxu0
      %v3037 = vadd.f32 0.0, %v3036
      %v3038 = vpop.f32.mrf.mxu0
      %v3039 = vadd.f32 0.0, %v3038
      %3040 = vmatprep.mubr.f32.mxu0 0.0
      %3041 = vmatmul.mubr.f32.gmra.mxu0 %v2890
      %v3042 = vpop.f32.mrf.mxu0
      %v3043 = vadd.f32 0.0, %v3042
      %v3044 = vpop.f32.mrf.mxu0
      %v3045 = vadd.f32 0.0, %v3044
      %3046 = vmatprep.mubr.f32.mxu0 0.0
      %3047 = vmatmul.mubr.f32.gmra.mxu0 %v2893
      %v3048 = vpop.f32.mrf.mxu0
      %v3049 = vadd.f32 0.0, %v3048
      %v3050 = vpop.f32.mrf.mxu0
      %v3051 = vadd.f32 0.0, %v3050
      %3052 = vmatprep.mubr.f32.mxu0 0.0
      %3053 = vmatmul.mubr.f32.gmra.mxu0 %v2896
      %v3054 = vpop.f32.mrf.mxu0
      %v3055 = vadd.f32 0.0, %v3054
      %v3056 = vpop.f32.mrf.mxu0
      %v3057 = vadd.f32 0.0, %v3056
      %3058 = vdwg.mxu0
      %v3059 = vadd.f32 %v2735, %v2965
      %v3060 = vadd.f32 %v2736, %v2967
      %v3061 = vadd.f32 %v2737, %v2971
      %v3062 = vadd.f32 %v2738, %v2973
      %v3063 = vadd.f32 %v2739, %v2977
      %v3064 = vadd.f32 %v2740, %v2979
      %v3065 = vadd.f32 %v2741, %v2983
      %v3066 = vadd.f32 %v2742, %v2985
      %v3067 = vadd.f32 %v2743, %v2989
      %v3068 = vadd.f32 %v2744, %v2991
      %v3069 = vadd.f32 %v2745, %v2995
      %v3070 = vadd.f32 %v2746, %v2997
      %v3071 = vadd.f32 %v2747, %v3001
      %v3072 = vadd.f32 %v2748, %v3003
      %v3073 = vadd.f32 %v2749, %v3007
      %v3074 = vadd.f32 %v2750, %v3009
      %v3075 = vadd.f32 %v2751, %v3013
      %v3076 = vadd.f32 %v2752, %v3015
      %v3077 = vadd.f32 %v2753, %v3019
      %v3078 = vadd.f32 %v2754, %v3021
      %v3079 = vadd.f32 %v2755, %v3025
      %v3080 = vadd.f32 %v2756, %v3027
      %v3081 = vadd.f32 %v2757, %v3031
      %v3082 = vadd.f32 %v2758, %v3033
      %v3083 = vadd.f32 %v2759, %v3037
      %v3084 = vadd.f32 %v2760, %v3039
      %v3085 = vadd.f32 %v2761, %v3043
      %v3086 = vadd.f32 %v2762, %v3045
      %v3087 = vadd.f32 %v2763, %v3049
      %v3088 = vadd.f32 %v2764, %v3051
      %v3089 = vadd.f32 %v2765, %v3055
      %v3090 = vadd.f32 %v2766, %v3057
      %3091 = vrot.lane.b32.xlu0 %v435, 17
      %v3092 = vpop.permute.xlu0 %3091
      %3093 = vrot.lane.b32.xlu0 %v436, 17
      %v3094 = vpop.permute.xlu0 %3093
      %v3095 = vsel %vm440, %v3092, %v3094
      %v3099 = vmul.f32 %v2060, %v3092
      %v3100 = vmul.f32 %v2061, %v3095
      %v3101 = vmul.f32 %v2062, %v3094
      %v3102 = vmul.f32 %v2063, %v3092
      %v3103 = vmul.f32 %v2064, %v3095
      %v3104 = vmul.f32 %v2065, %v3094
      %v3105 = vmul.f32 %v2066, %v3092
      %v3106 = vmul.f32 %v2067, %v3095
      %v3107 = vmul.f32 %v2068, %v3094
      %v3108 = vmul.f32 %v2069, %v3092
      %v3109 = vmul.f32 %v2070, %v3095
      %v3110 = vmul.f32 %v2071, %v3094
      %v3111 = vmul.f32 %v2072, %v3092
      %v3112 = vmul.f32 %v2073, %v3095
      %v3113 = vmul.f32 %v2074, %v3094
      %s3114 = scalar_lea.vmem %s3, 1024
      %v3115 = vld [vmem:[%s3114] sm:$0xff]
      %v3116 = vld [vmem:[%s3114 + $0x8] sm:$0xff]
      %v3117 = vld [vmem:[%s3114 + $0x10] sm:$0xff]
      %v3118 = vld [vmem:[%s3114 + $0x18] sm:$0xff]
      %v3119 = vld [vmem:[%s3114 + $0x20] sm:$0xff]
      %v3120 = vld [vmem:[%s3114 + $0x28] sm:$0xff]
      %v3121 = vld [vmem:[%s3114 + $0x30] sm:$0xff]
      %v3122 = vld [vmem:[%s3114 + $0x38] sm:$0xff]
      %v3123 = vld [vmem:[%s3114 + $0x40] sm:$0xff]
      %v3124 = vld [vmem:[%s3114 + $0x48] sm:$0xff]
      %v3125 = vld [vmem:[%s3114 + $0x50] sm:$0xff]
      %v3126 = vld [vmem:[%s3114 + $0x58] sm:$0xff]
      %v3127 = vld [vmem:[%s3114 + $0x60] sm:$0xff]
      %v3128 = vld [vmem:[%s3114 + $0x68] sm:$0xff]
      %v3129 = vld [vmem:[%s3114 + $0x70] sm:$0xff]
      %v3130 = vld [vmem:[%s3114 + $0x78] sm:$0xff]
      %3146 = vrot.lane.b32.xlu0 %v3099, 111
      %v3147 = vpop.permute.xlu0 %3146
      %3148 = vrot.lane.b32.xlu0 %v3100, 111
      %v3149 = vpop.permute.xlu0 %3148
      %3150 = vrot.lane.b32.xlu0 %v3101, 111
      %v3151 = vpop.permute.xlu0 %3150
      %3152 = vrot.lane.b32.xlu0 %v3102, 111
      %v3153 = vpop.permute.xlu0 %3152
      %3154 = vrot.lane.b32.xlu0 %v3103, 111
      %v3155 = vpop.permute.xlu0 %3154
      %3156 = vrot.lane.b32.xlu0 %v3104, 111
      %v3157 = vpop.permute.xlu0 %3156
      %3158 = vrot.lane.b32.xlu0 %v3105, 111
      %v3159 = vpop.permute.xlu0 %3158
      %3160 = vrot.lane.b32.xlu0 %v3106, 111
      %v3161 = vpop.permute.xlu0 %3160
      %3162 = vrot.lane.b32.xlu0 %v3107, 111
      %v3163 = vpop.permute.xlu0 %3162
      %3164 = vrot.lane.b32.xlu0 %v3108, 111
      %v3165 = vpop.permute.xlu0 %3164
      %3166 = vrot.lane.b32.xlu0 %v3109, 111
      %v3167 = vpop.permute.xlu0 %3166
      %3168 = vrot.lane.b32.xlu0 %v3110, 111
      %v3169 = vpop.permute.xlu0 %3168
      %3170 = vrot.lane.b32.xlu0 %v3111, 111
      %v3171 = vpop.permute.xlu0 %3170
      %3172 = vrot.lane.b32.xlu0 %v3112, 111
      %v3173 = vpop.permute.xlu0 %3172
      %3174 = vrot.lane.b32.xlu0 %v3113, 111
      %v3175 = vpop.permute.xlu0 %3174
      %v3176 = vsel %vm501, %v3147, %v3149
      %v3177 = vsel %vm501, %v3149, %v3151
      %v3178 = vsel %vm501, %v3153, %v3155
      %v3179 = vsel %vm501, %v3155, %v3157
      %v3180 = vsel %vm501, %v3159, %v3161
      %v3181 = vsel %vm501, %v3161, %v3163
      %v3182 = vsel %vm501, %v3165, %v3167
      %v3183 = vsel %vm501, %v3167, %v3169
      %v3184 = vsel %vm501, %v3171, %v3173
      %v3185 = vsel %vm501, %v3173, %v3175
      %v3197 = vsel %vm620, %v3115, 0
      %v3200 = vsel %vm620, %v3116, 0
      %v3203 = vsel %vm620, %v3117, 0
      %v3206 = vsel %vm620, %v3118, 0
      %v3209 = vsel %vm620, %v3119, 0
      %v3212 = vsel %vm620, %v3120, 0
      %v3215 = vsel %vm620, %v3121, 0
      %v3218 = vsel %vm620, %v3122, 0
      %v3221 = vsel %vm620, %v3123, 0
      %v3224 = vsel %vm620, %v3124, 0
      %v3227 = vsel %vm620, %v3125, 0
      %v3230 = vsel %vm620, %v3126, 0
      %v3233 = vsel %vm620, %v3127, 0
      %v3236 = vsel %vm620, %v3128, 0
      %v3239 = vsel %vm620, %v3129, 0
      %v3242 = vsel %vm620, %v3130, 0
      %3244 = vmatprep.subr.mxu0 0.0
      %3245 = vmatpush1.msra.mxu0 0.0
      %3246 = vmatprep.subr.mxu0 0.0
      %3247 = vmatpush1.msra.mxu0 0.0
      %3248 = vmatprep.subr.mxu0 0.0
      %3249 = vmatpush1.msra.mxu0 0.0
      %3250 = vmatprep.subr.mxu0 0.0
      %3251 = vmatpush1.msra.mxu0 0.0
      %3252 = vmatprep.subr.mxu0 0.0
      %3253 = vmatpush1.msra.mxu0 0.0
      %3254 = vmatprep.subr.mxu0 0.0
      %3255 = vmatpush1.msra.mxu0 0.0
      %3256 = vmatprep.subr.mxu0 0.0
      %3257 = vmatpush1.msra.mxu0 0.0
      %3258 = vmatprep.subr.mxu0 0.0
      %3259 = vmatpush1.msra.mxu0 0.0
      %3260 = vmatprep.subr.mxu0 0.0
      %3261 = vmatpush1.msra.mxu0 0.0
      %3262 = vmatprep.subr.mxu0 0.0
      %3263 = vmatpush1.msra.mxu0 0.0
      %3264 = vmatprep.subr.mxu0 0.0
      %3265 = vmatpush1.msra.mxu0 0.0
      %3266 = vmatprep.subr.mxu0 %v3185
      %3267 = vmatpush1.msra.mxu0 %v3184
      %3268 = vmatprep.subr.mxu0 %v3183
      %3269 = vmatpush1.msra.mxu0 %v3182
      %3270 = vmatprep.subr.mxu0 %v3181
      %3271 = vmatpush1.msra.mxu0 %v3180
      %3272 = vmatprep.subr.mxu0 %v3179
      %3273 = vmatpush1.msra.mxu0 %v3178
      %3274 = vmatprep.subr.mxu0 %v3177
      %3275 = vmatpush1.msra.mxu0 %v3176
      %3276 = vmatprep.subr.mxu0 0.0
      %3277 = vmatpush2.msra.mxu0 0.0
      %3278 = vmatprep.subr.mxu0 0.0
      %3279 = vmatpush2.msra.mxu0 0.0
      %3280 = vmatprep.subr.mxu0 0.0
      %3281 = vmatpush2.msra.mxu0 0.0
      %3282 = vmatprep.subr.mxu0 0.0
      %3283 = vmatpush2.msra.mxu0 0.0
      %3284 = vmatprep.subr.mxu0 0.0
      %3285 = vmatpush2.msra.mxu0 0.0
      %3286 = vmatprep.subr.mxu0 0.0
      %3287 = vmatpush2.msra.mxu0 0.0
      %3288 = vmatprep.subr.mxu0 0.0
      %3289 = vmatpush2.msra.mxu0 0.0
      %3290 = vmatprep.subr.mxu0 0.0
      %3291 = vmatpush2.msra.mxu0 0.0
      %3292 = vmatprep.subr.mxu0 0.0
      %3293 = vmatpush2.msra.mxu0 0.0
      %3294 = vmatprep.subr.mxu0 0.0
      %3295 = vmatpush2.msra.mxu0 0.0
      %3296 = vmatprep.subr.mxu0 0.0
      %3297 = vmatpush2.msra.mxu0 0.0
      %3298 = vmatprep.subr.mxu0 0.0
      %3299 = vmatpush2.msra.mxu0 0.0
      %3300 = vmatprep.subr.mxu0 0.0
      %3301 = vmatpush2.msra.mxu0 0.0
      %3302 = vmatprep.subr.mxu0 0.0
      %3303 = vmatpush2.msra.mxu0 0.0
      %3304 = vmatprep.subr.mxu0 0.0
      %3305 = vmatpush2.msra.mxu0 0.0
      %3306 = vmatprep.subr.mxu0 0.0
      %3307 = vmatpush2.msra.mxu0 0.0
      %3308 = vmatprep.mubr.f32.mxu0 0.0
      %3309 = vmatmul.mubr.f32.gmra.mxu0 %v3197
      %v3310 = vpop.f32.mrf.mxu0
      %v3311 = vadd.f32 0.0, %v3310
      %v3312 = vpop.f32.mrf.mxu0
      %v3313 = vadd.f32 0.0, %v3312
      %3314 = vmatprep.mubr.f32.mxu0 0.0
      %3315 = vmatmul.mubr.f32.gmra.mxu0 %v3200
      %v3316 = vpop.f32.mrf.mxu0
      %v3317 = vadd.f32 0.0, %v3316
      %v3318 = vpop.f32.mrf.mxu0
      %v3319 = vadd.f32 0.0, %v3318
      %3320 = vmatprep.mubr.f32.mxu0 0.0
      %3321 = vmatmul.mubr.f32.gmra.mxu0 %v3203
      %v3322 = vpop.f32.mrf.mxu0
      %v3323 = vadd.f32 0.0, %v3322
      %v3324 = vpop.f32.mrf.mxu0
      %v3325 = vadd.f32 0.0, %v3324
      %3326 = vmatprep.mubr.f32.mxu0 0.0
      %3327 = vmatmul.mubr.f32.gmra.mxu0 %v3206
      %v3328 = vpop.f32.mrf.mxu0
      %v3329 = vadd.f32 0.0, %v3328
      %v3330 = vpop.f32.mrf.mxu0
      %v3331 = vadd.f32 0.0, %v3330
      %3332 = vmatprep.mubr.f32.mxu0 0.0
      %3333 = vmatmul.mubr.f32.gmra.mxu0 %v3209
      %v3334 = vpop.f32.mrf.mxu0
      %v3335 = vadd.f32 0.0, %v3334
      %v3336 = vpop.f32.mrf.mxu0
      %v3337 = vadd.f32 0.0, %v3336
      %3338 = vmatprep.mubr.f32.mxu0 0.0
      %3339 = vmatmul.mubr.f32.gmra.mxu0 %v3212
      %v3340 = vpop.f32.mrf.mxu0
      %v3341 = vadd.f32 0.0, %v3340
      %v3342 = vpop.f32.mrf.mxu0
      %v3343 = vadd.f32 0.0, %v3342
      %3344 = vmatprep.mubr.f32.mxu0 0.0
      %3345 = vmatmul.mubr.f32.gmra.mxu0 %v3215
      %v3346 = vpop.f32.mrf.mxu0
      %v3347 = vadd.f32 0.0, %v3346
      %v3348 = vpop.f32.mrf.mxu0
      %v3349 = vadd.f32 0.0, %v3348
      %3350 = vmatprep.mubr.f32.mxu0 0.0
      %3351 = vmatmul.mubr.f32.gmra.mxu0 %v3218
      %v3352 = vpop.f32.mrf.mxu0
      %v3353 = vadd.f32 0.0, %v3352
      %v3354 = vpop.f32.mrf.mxu0
      %v3355 = vadd.f32 0.0, %v3354
      %3356 = vmatprep.mubr.f32.mxu0 0.0
      %3357 = vmatmul.mubr.f32.gmra.mxu0 %v3221
      %v3358 = vpop.f32.mrf.mxu0
      %v3359 = vadd.f32 0.0, %v3358
      %v3360 = vpop.f32.mrf.mxu0
      %v3361 = vadd.f32 0.0, %v3360
      %3362 = vmatprep.mubr.f32.mxu0 0.0
      %3363 = vmatmul.mubr.f32.gmra.mxu0 %v3224
      %v3364 = vpop.f32.mrf.mxu0
      %v3365 = vadd.f32 0.0, %v3364
      %v3366 = vpop.f32.mrf.mxu0
      %v3367 = vadd.f32 0.0, %v3366
      %3368 = vmatprep.mubr.f32.mxu0 0.0
      %3369 = vmatmul.mubr.f32.gmra.mxu0 %v3227
      %v3370 = vpop.f32.mrf.mxu0
      %v3371 = vadd.f32 0.0, %v3370
      %v3372 = vpop.f32.mrf.mxu0
      %v3373 = vadd.f32 0.0, %v3372
      %3374 = vmatprep.mubr.f32.mxu0 0.0
      %3375 = vmatmul.mubr.f32.gmra.mxu0 %v3230
      %v3376 = vpop.f32.mrf.mxu0
      %v3377 = vadd.f32 0.0, %v3376
      %v3378 = vpop.f32.mrf.mxu0
      %v3379 = vadd.f32 0.0, %v3378
      %3380 = vmatprep.mubr.f32.mxu0 0.0
      %3381 = vmatmul.mubr.f32.gmra.mxu0 %v3233
      %v3382 = vpop.f32.mrf.mxu0
      %v3383 = vadd.f32 0.0, %v3382
      %v3384 = vpop.f32.mrf.mxu0
      %v3385 = vadd.f32 0.0, %v3384
      %3386 = vmatprep.mubr.f32.mxu0 0.0
      %3387 = vmatmul.mubr.f32.gmra.mxu0 %v3236
      %v3388 = vpop.f32.mrf.mxu0
      %v3389 = vadd.f32 0.0, %v3388
      %v3390 = vpop.f32.mrf.mxu0
      %v3391 = vadd.f32 0.0, %v3390
      %3392 = vmatprep.mubr.f32.mxu0 0.0
      %3393 = vmatmul.mubr.f32.gmra.mxu0 %v3239
      %v3394 = vpop.f32.mrf.mxu0
      %v3395 = vadd.f32 0.0, %v3394
      %v3396 = vpop.f32.mrf.mxu0
      %v3397 = vadd.f32 0.0, %v3396
      %3398 = vmatprep.mubr.f32.mxu0 0.0
      %3399 = vmatmul.mubr.f32.gmra.mxu0 %v3242
      %v3400 = vpop.f32.mrf.mxu0
      %v3401 = vadd.f32 0.0, %v3400
      %v3402 = vpop.f32.mrf.mxu0
      %v3403 = vadd.f32 0.0, %v3402
      %3404 = vdwg.mxu0
      %v3405 = vadd.f32 %v3059, %v3311
      %v3406 = vadd.f32 %v3060, %v3313
      %v3407 = vadd.f32 %v3061, %v3317
      %v3408 = vadd.f32 %v3062, %v3319
      %v3409 = vadd.f32 %v3063, %v3323
      %v3410 = vadd.f32 %v3064, %v3325
      %v3411 = vadd.f32 %v3065, %v3329
      %v3412 = vadd.f32 %v3066, %v3331
      %v3413 = vadd.f32 %v3067, %v3335
      %v3414 = vadd.f32 %v3068, %v3337
      %v3415 = vadd.f32 %v3069, %v3341
      %v3416 = vadd.f32 %v3070, %v3343
      %v3417 = vadd.f32 %v3071, %v3347
      %v3418 = vadd.f32 %v3072, %v3349
      %v3419 = vadd.f32 %v3073, %v3353
      %v3420 = vadd.f32 %v3074, %v3355
      %v3421 = vadd.f32 %v3075, %v3359
      %v3422 = vadd.f32 %v3076, %v3361
      %v3423 = vadd.f32 %v3077, %v3365
      %v3424 = vadd.f32 %v3078, %v3367
      %v3425 = vadd.f32 %v3079, %v3371
      %v3426 = vadd.f32 %v3080, %v3373
      %v3427 = vadd.f32 %v3081, %v3377
      %v3428 = vadd.f32 %v3082, %v3379
      %v3429 = vadd.f32 %v3083, %v3383
      %v3430 = vadd.f32 %v3084, %v3385
      %v3431 = vadd.f32 %v3085, %v3389
      %v3432 = vadd.f32 %v3086, %v3391
      %v3433 = vadd.f32 %v3087, %v3395
      %v3434 = vadd.f32 %v3088, %v3397
      %v3435 = vadd.f32 %v3089, %v3401
      %v3436 = vadd.f32 %v3090, %v3403
      %v3437 = vld [vmem:[%s4] sm:$0xff]
      %v3438 = vld [vmem:[%s4 + $0x8] sm:$0xff]
      %v3439 = vld [vmem:[%s4 + $0x10] sm:$0xff]
      %v3440 = vld [vmem:[%s4 + $0x18] sm:$0xff]
      %v3441 = vld [vmem:[%s4 + $0x20] sm:$0xff]
      %v3442 = vld [vmem:[%s4 + $0x28] sm:$0xff]
      %v3443 = vld [vmem:[%s4 + $0x30] sm:$0xff]
      %v3444 = vld [vmem:[%s4 + $0x38] sm:$0xff]
      %v3445 = vld [vmem:[%s4 + $0x40] sm:$0xff]
      %v3446 = vld [vmem:[%s4 + $0x48] sm:$0xff]
      %v3447 = vld [vmem:[%s4 + $0x50] sm:$0xff]
      %v3448 = vld [vmem:[%s4 + $0x58] sm:$0xff]
      %v3449 = vld [vmem:[%s4 + $0x60] sm:$0xff]
      %v3450 = vld [vmem:[%s4 + $0x68] sm:$0xff]
      %v3451 = vld [vmem:[%s4 + $0x70] sm:$0xff]
      %v3452 = vld [vmem:[%s4 + $0x78] sm:$0xff]
      %3454 = vset.pattern.permute.xlu0 0
      %3455 = vperm.xlu0 %3454, %v3437
      %v3456 = vpop.permute.xlu0 %3455
      %3459 = vset.pattern.permute.xlu0 0
      %3460 = vperm.xlu0 %3459, %v3438
      %v3461 = vpop.permute.xlu0 %3460
      %3464 = vset.pattern.permute.xlu0 0
      %3465 = vperm.xlu0 %3464, %v3439
      %v3466 = vpop.permute.xlu0 %3465
      %3469 = vset.pattern.permute.xlu0 0
      %3470 = vperm.xlu0 %3469, %v3440
      %v3471 = vpop.permute.xlu0 %3470
      %3474 = vset.pattern.permute.xlu0 0
      %3475 = vperm.xlu0 %3474, %v3441
      %v3476 = vpop.permute.xlu0 %3475
      %3479 = vset.pattern.permute.xlu0 0
      %3480 = vperm.xlu0 %3479, %v3442
      %v3481 = vpop.permute.xlu0 %3480
      %3484 = vset.pattern.permute.xlu0 0
      %3485 = vperm.xlu0 %3484, %v3443
      %v3486 = vpop.permute.xlu0 %3485
      %3489 = vset.pattern.permute.xlu0 0
      %3490 = vperm.xlu0 %3489, %v3444
      %v3491 = vpop.permute.xlu0 %3490
      %3494 = vset.pattern.permute.xlu0 0
      %3495 = vperm.xlu0 %3494, %v3445
      %v3496 = vpop.permute.xlu0 %3495
      %3499 = vset.pattern.permute.xlu0 0
      %3500 = vperm.xlu0 %3499, %v3446
      %v3501 = vpop.permute.xlu0 %3500
      %3504 = vset.pattern.permute.xlu0 0
      %3505 = vperm.xlu0 %3504, %v3447
      %v3506 = vpop.permute.xlu0 %3505
      %3509 = vset.pattern.permute.xlu0 0
      %3510 = vperm.xlu0 %3509, %v3448
      %v3511 = vpop.permute.xlu0 %3510
      %3514 = vset.pattern.permute.xlu0 0
      %3515 = vperm.xlu0 %3514, %v3449
      %v3516 = vpop.permute.xlu0 %3515
      %3519 = vset.pattern.permute.xlu0 0
      %3520 = vperm.xlu0 %3519, %v3450
      %v3521 = vpop.permute.xlu0 %3520
      %3524 = vset.pattern.permute.xlu0 0
      %3525 = vperm.xlu0 %3524, %v3451
      %v3526 = vpop.permute.xlu0 %3525
      %3529 = vset.pattern.permute.xlu0 0
      %3530 = vperm.xlu0 %3529, %v3452
      %v3531 = vpop.permute.xlu0 %3530
      %v3533 = vadd.f32 %v3405, %v3456
      %v3534 = vadd.f32 %v3406, %v3456
      %v3535 = vadd.f32 %v3407, %v3461
      %v3536 = vadd.f32 %v3408, %v3461
      %v3537 = vadd.f32 %v3409, %v3466
      %v3538 = vadd.f32 %v3410, %v3466
      %v3539 = vadd.f32 %v3411, %v3471
      %v3540 = vadd.f32 %v3412, %v3471
      %v3541 = vadd.f32 %v3413, %v3476
      %v3542 = vadd.f32 %v3414, %v3476
      %v3543 = vadd.f32 %v3415, %v3481
      %v3544 = vadd.f32 %v3416, %v3481
      %v3545 = vadd.f32 %v3417, %v3486
      %v3546 = vadd.f32 %v3418, %v3486
      %v3547 = vadd.f32 %v3419, %v3491
      %v3548 = vadd.f32 %v3420, %v3491
      %v3549 = vadd.f32 %v3421, %v3496
      %v3550 = vadd.f32 %v3422, %v3496
      %v3551 = vadd.f32 %v3423, %v3501
      %v3552 = vadd.f32 %v3424, %v3501
      %v3553 = vadd.f32 %v3425, %v3506
      %v3554 = vadd.f32 %v3426, %v3506
      %v3555 = vadd.f32 %v3427, %v3511
      %v3556 = vadd.f32 %v3428, %v3511
      %v3557 = vadd.f32 %v3429, %v3516
      %v3558 = vadd.f32 %v3430, %v3516
      %v3559 = vadd.f32 %v3431, %v3521
      %v3560 = vadd.f32 %v3432, %v3521
      %v3561 = vadd.f32 %v3433, %v3526
      %v3562 = vadd.f32 %v3434, %v3526
      %v3563 = vadd.f32 %v3435, %v3531
      %v3564 = vadd.f32 %v3436, %v3531
      %v3565 = vsub.f32 0.0, %v3533
      %v3566 = vsub.f32 0.0, %v3534
      %v3567 = vsub.f32 0.0, %v3535
      %v3568 = vsub.f32 0.0, %v3536
      %v3569 = vsub.f32 0.0, %v3537
      %v3570 = vsub.f32 0.0, %v3538
      %v3571 = vsub.f32 0.0, %v3539
      %v3572 = vsub.f32 0.0, %v3540
      %v3573 = vmul.f32 %v3565, 1.442695
      %v3574 = vpow.pop %v3573
      %v3575 = vmul.f32 %v3566, 1.442695
      %v3576 = vpow.pop %v3575
      %v3577 = vmul.f32 %v3567, 1.442695
      %v3578 = vpow.pop %v3577
      %v3579 = vmul.f32 %v3568, 1.442695
      %v3580 = vpow.pop %v3579
      %v3581 = vmul.f32 %v3569, 1.442695
      %v3582 = vpow.pop %v3581
      %v3583 = vmul.f32 %v3570, 1.442695
      %v3584 = vpow.pop %v3583
      %v3585 = vmul.f32 %v3571, 1.442695
      %v3586 = vpow.pop %v3585
      %v3587 = vmul.f32 %v3572, 1.442695
      %v3588 = vpow.pop %v3587
      %v3589 = vadd.f32 %v3574, 1.0
      %v3590 = vadd.f32 %v3576, 1.0
      %v3591 = vadd.f32 %v3578, 1.0
      %v3592 = vadd.f32 %v3580, 1.0
      %v3593 = vadd.f32 %v3582, 1.0
      %v3594 = vadd.f32 %v3584, 1.0
      %v3595 = vadd.f32 %v3586, 1.0
      %v3596 = vadd.f32 %v3588, 1.0
      %v3597 = vrcp.pop %v3589
      %v3598 = vrcp.pop %v3590
      %v3599 = vrcp.pop %v3591
      %v3600 = vrcp.pop %v3592
      %v3601 = vrcp.pop %v3593
      %v3602 = vrcp.pop %v3594
      %v3603 = vrcp.pop %v3595
      %v3604 = vrcp.pop %v3596
      %v3605 = vsub.f32 0.0, %v3541
      %v3606 = vsub.f32 0.0, %v3542
      %v3607 = vsub.f32 0.0, %v3543
      %v3608 = vsub.f32 0.0, %v3544
      %v3609 = vsub.f32 0.0, %v3545
      %v3610 = vsub.f32 0.0, %v3546
      %v3611 = vsub.f32 0.0, %v3547
      %v3612 = vsub.f32 0.0, %v3548
      %v3613 = vmul.f32 %v3605, 1.442695
      %v3614 = vpow.pop %v3613
      %v3615 = vmul.f32 %v3606, 1.442695
      %v3616 = vpow.pop %v3615
      %v3617 = vmul.f32 %v3607, 1.442695
      %v3618 = vpow.pop %v3617
      %v3619 = vmul.f32 %v3608, 1.442695
      %v3620 = vpow.pop %v3619
      %v3621 = vmul.f32 %v3609, 1.442695
      %v3622 = vpow.pop %v3621
      %v3623 = vmul.f32 %v3610, 1.442695
      %v3624 = vpow.pop %v3623
      %v3625 = vmul.f32 %v3611, 1.442695
      %v3626 = vpow.pop %v3625
      %v3627 = vmul.f32 %v3612, 1.442695
      %v3628 = vpow.pop %v3627
      %v3629 = vadd.f32 %v3614, 1.0
      %v3630 = vadd.f32 %v3616, 1.0
      %v3631 = vadd.f32 %v3618, 1.0
      %v3632 = vadd.f32 %v3620, 1.0
      %v3633 = vadd.f32 %v3622, 1.0
      %v3634 = vadd.f32 %v3624, 1.0
      %v3635 = vadd.f32 %v3626, 1.0
      %v3636 = vadd.f32 %v3628, 1.0
      %v3637 = vrcp.pop %v3629
      %v3638 = vrcp.pop %v3630
      %v3639 = vrcp.pop %v3631
      %v3640 = vrcp.pop %v3632
      %v3641 = vrcp.pop %v3633
      %v3642 = vrcp.pop %v3634
      %v3643 = vrcp.pop %v3635
      %v3644 = vrcp.pop %v3636
      %v3645 = vsub.f32 0.0, %v3549
      %v3646 = vsub.f32 0.0, %v3550
      %v3647 = vsub.f32 0.0, %v3551
      %v3648 = vsub.f32 0.0, %v3552
      %v3649 = vsub.f32 0.0, %v3553
      %v3650 = vsub.f32 0.0, %v3554
      %v3651 = vsub.f32 0.0, %v3555
      %v3652 = vsub.f32 0.0, %v3556
      %v3653 = vmul.f32 %v3645, 1.442695
      %v3654 = vpow.pop %v3653
      %v3655 = vmul.f32 %v3646, 1.442695
      %v3656 = vpow.pop %v3655
      %v3657 = vmul.f32 %v3647, 1.442695
      %v3658 = vpow.pop %v3657
      %v3659 = vmul.f32 %v3648, 1.442695
      %v3660 = vpow.pop %v3659
      %v3661 = vmul.f32 %v3649, 1.442695
      %v3662 = vpow.pop %v3661
      %v3663 = vmul.f32 %v3650, 1.442695
      %v3664 = vpow.pop %v3663
      %v3665 = vmul.f32 %v3651, 1.442695
      %v3666 = vpow.pop %v3665
      %v3667 = vmul.f32 %v3652, 1.442695
      %v3668 = vpow.pop %v3667
      %v3669 = vadd.f32 %v3654, 1.0
      %v3670 = vadd.f32 %v3656, 1.0
      %v3671 = vadd.f32 %v3658, 1.0
      %v3672 = vadd.f32 %v3660, 1.0
      %v3673 = vadd.f32 %v3662, 1.0
      %v3674 = vadd.f32 %v3664, 1.0
      %v3675 = vadd.f32 %v3666, 1.0
      %v3676 = vadd.f32 %v3668, 1.0
      %v3677 = vrcp.pop %v3669
      %v3678 = vrcp.pop %v3670
      %v3679 = vrcp.pop %v3671
      %v3680 = vrcp.pop %v3672
      %v3681 = vrcp.pop %v3673
      %v3682 = vrcp.pop %v3674
      %v3683 = vrcp.pop %v3675
      %v3684 = vrcp.pop %v3676
      %v3685 = vtanh.pop %v3557
      %v3686 = vtanh.pop %v3558
      %v3687 = vtanh.pop %v3559
      %v3688 = vtanh.pop %v3560
      %v3689 = vtanh.pop %v3561
      %v3690 = vtanh.pop %v3562
      %v3691 = vtanh.pop %v3563
      %v3692 = vtanh.pop %v3564
      %v3693 = vld [vmem:[%s382] sm:$0xff]
      %v3694 = vld [vmem:[%s382 + $0x8] sm:$0xff]
      %v3695 = vld [vmem:[%s382 + $0x10] sm:$0xff]
      %v3696 = vld [vmem:[%s382 + $0x18] sm:$0xff]
      %v3697 = vld [vmem:[%s382 + $0x20] sm:$0xff]
      %v3698 = vld [vmem:[%s382 + $0x28] sm:$0xff]
      %v3699 = vld [vmem:[%s382 + $0x30] sm:$0xff]
      %v3700 = vld [vmem:[%s382 + $0x38] sm:$0xff]
      %v3701 = vmul.f32 %v3637, %v3693
      %v3702 = vmul.f32 %v3638, %v3694
      %v3703 = vmul.f32 %v3639, %v3695
      %v3704 = vmul.f32 %v3640, %v3696
      %v3705 = vmul.f32 %v3641, %v3697
      %v3706 = vmul.f32 %v3642, %v3698
      %v3707 = vmul.f32 %v3643, %v3699
      %v3708 = vmul.f32 %v3644, %v3700
      %v3709 = vmul.f32 %v3597, %v3685
      %v3710 = vmul.f32 %v3598, %v3686
      %v3711 = vmul.f32 %v3599, %v3687
      %v3712 = vmul.f32 %v3600, %v3688
      %v3713 = vmul.f32 %v3601, %v3689
      %v3714 = vmul.f32 %v3602, %v3690
      %v3715 = vmul.f32 %v3603, %v3691
      %v3716 = vmul.f32 %v3604, %v3692
      %v3717 = vadd.f32 %v3701, %v3709
      %v3718 = vadd.f32 %v3702, %v3710
      %v3719 = vadd.f32 %v3703, %v3711
      %v3720 = vadd.f32 %v3704, %v3712
      %v3721 = vadd.f32 %v3705, %v3713
      %v3722 = vadd.f32 %v3706, %v3714
      %v3723 = vadd.f32 %v3707, %v3715
      %v3724 = vadd.f32 %v3708, %v3716
      %v3725 = vtanh.pop %v3717
      %v3726 = vtanh.pop %v3718
      %v3727 = vtanh.pop %v3719
      %v3728 = vtanh.pop %v3720
      %v3729 = vtanh.pop %v3721
      %v3730 = vtanh.pop %v3722
      %v3731 = vtanh.pop %v3723
      %v3732 = vtanh.pop %v3724
      %v3733 = vmul.f32 %v3677, %v3725
      %v3734 = vmul.f32 %v3678, %v3726
      %v3735 = vmul.f32 %v3679, %v3727
      %v3736 = vmul.f32 %v3680, %v3728
      %v3737 = vmul.f32 %v3681, %v3729
      %v3738 = vmul.f32 %v3682, %v3730
      %v3739 = vmul.f32 %v3683, %v3731
      %v3740 = vmul.f32 %v3684, %v3732
      %3741 = vst [vmem:[%s392] sm:$0xff] %v3733
      %3742 = vst [vmem:[%s392 + $0x8] sm:$0xff] %v3734
      %3743 = vst [vmem:[%s392 + $0x10] sm:$0xff] %v3735
      %3744 = vst [vmem:[%s392 + $0x18] sm:$0xff] %v3736
      %3745 = vst [vmem:[%s392 + $0x20] sm:$0xff] %v3737
      %3746 = vst [vmem:[%s392 + $0x28] sm:$0xff] %v3738
      %3747 = vst [vmem:[%s392 + $0x30] sm:$0xff] %v3739
      %3748 = vst [vmem:[%s392 + $0x38] sm:$0xff] %v3740
      %3749 = vst [vmem:[%s397] sm:$0xff] %v3717
      %3750 = vst [vmem:[%s397 + $0x8] sm:$0xff] %v3718
      %3751 = vst [vmem:[%s397 + $0x10] sm:$0xff] %v3719
      %3752 = vst [vmem:[%s397 + $0x18] sm:$0xff] %v3720
      %3753 = vst [vmem:[%s397 + $0x20] sm:$0xff] %v3721
      %3754 = vst [vmem:[%s397 + $0x28] sm:$0xff] %v3722
      %3755 = vst [vmem:[%s397 + $0x30] sm:$0xff] %v3723
      %3756 = vst [vmem:[%s397 + $0x38] sm:$0xff] %v3724
      %3757 = vst [vmem:[#allocation3] sm:$0xff] 0.0
      %3758 = vst [vmem:[#allocation3 + $0x8] sm:$0xff] 0.0
      %3759 = vst [vmem:[#allocation3 + $0x10] sm:$0xff] 0.0
      %3760 = vst.msk [vmem:[#allocation3 + $0x18] sm:$0xff] %vm440, 0.0
      %3761 = vst [vmem:[#allocation3 + $0x20] sm:$0xff] 0.0
      %3762 = vst [vmem:[#allocation3 + $0x28] sm:$0xff] 0.0
      %3763 = vst [vmem:[#allocation3 + $0x30] sm:$0xff] 0.0
      %3764 = vst.msk [vmem:[#allocation3 + $0x38] sm:$0xff] %vm440, 0.0
      %3765 = vst [vmem:[#allocation3 + $0x40] sm:$0xff] 0.0
      %3766 = vst [vmem:[#allocation3 + $0x48] sm:$0xff] 0.0
      %3767 = vst [vmem:[#allocation3 + $0x50] sm:$0xff] 0.0
      %3768 = vst.msk [vmem:[#allocation3 + $0x58] sm:$0xff] %vm440, 0.0
      %3769 = vst [vmem:[#allocation3 + $0x60] sm:$0xff] 0.0
      %3770 = vst [vmem:[#allocation3 + $0x68] sm:$0xff] 0.0
      %3771 = vst [vmem:[#allocation3 + $0x70] sm:$0xff] 0.0
      %3772 = vst.msk [vmem:[#allocation3 + $0x78] sm:$0xff] %vm440, 0.0
      %3773 = vst [vmem:[#allocation3 + $0x8] sm:$0xff] %v3733
      %3774 = vst [vmem:[#allocation3 + $0x10] sm:$0xff] %v3734
      %3775 = vst [vmem:[#allocation3 + $0x28] sm:$0xff] %v3735
      %3776 = vst [vmem:[#allocation3 + $0x30] sm:$0xff] %v3736
      %3777 = vst [vmem:[#allocation3 + $0x48] sm:$0xff] %v3737
      %3778 = vst [vmem:[#allocation3 + $0x50] sm:$0xff] %v3738
      %3779 = vst [vmem:[#allocation3 + $0x68] sm:$0xff] %v3739
      %3780 = vst [vmem:[#allocation3 + $0x70] sm:$0xff] %v3740
      %v3781 = vld [vmem:[#allocation3] sm:$0xff]
      %v3782 = vld [vmem:[#allocation3 + $0x8] sm:$0xff]
      %v3783 = vld [vmem:[#allocation3 + $0x10] sm:$0xff]
      %v3784 = vld [vmem:[#allocation3 + $0x20] sm:$0xff]
      %v3785 = vld [vmem:[#allocation3 + $0x28] sm:$0xff]
      %v3786 = vld [vmem:[#allocation3 + $0x30] sm:$0xff]
      %v3787 = vld [vmem:[#allocation3 + $0x40] sm:$0xff]
      %v3788 = vld [vmem:[#allocation3 + $0x48] sm:$0xff]
      %v3789 = vld [vmem:[#allocation3 + $0x50] sm:$0xff]
      %v3790 = vld [vmem:[#allocation3 + $0x60] sm:$0xff]
      %v3791 = vld [vmem:[#allocation3 + $0x68] sm:$0xff]
      %v3792 = vld [vmem:[#allocation3 + $0x70] sm:$0xff]
      %v3793 = vmul.f32 %v3781, %v498
      %v3794 = vmul.f32 %v3782, %v502
      %v3795 = vmul.f32 %v3783, %v500
      %v3796 = vmul.f32 %v3784, %v498
      %v3797 = vmul.f32 %v3785, %v502
      %v3798 = vmul.f32 %v3786, %v500
      %v3799 = vmul.f32 %v3787, %v498
      %v3800 = vmul.f32 %v3788, %v502
      %v3801 = vmul.f32 %v3789, %v500
      %v3802 = vmul.f32 %v3790, %v498
      %v3803 = vmul.f32 %v3791, %v502
      %v3804 = vmul.f32 %v3792, %v500
      %v3805 = vld [vmem:[%s5] sm:$0xf]
      %s3806 = scalar_lea.vmem %s5, 4
      %v3807 = vld [vmem:[%s3806] sm:$0xf]
      %3820 = vrot.lane.b32.xlu0 %v3781, 16
      %v3821 = vpop.permute.xlu0 %3820
      %3822 = vrot.lane.b32.xlu0 %v3782, 16
      %v3823 = vpop.permute.xlu0 %3822
      %3824 = vrot.lane.b32.xlu0 %v3783, 16
      %v3825 = vpop.permute.xlu0 %3824
      %3826 = vrot.lane.b32.xlu0 %v3784, 16
      %v3827 = vpop.permute.xlu0 %3826
      %3828 = vrot.lane.b32.xlu0 %v3785, 16
      %v3829 = vpop.permute.xlu0 %3828
      %3830 = vrot.lane.b32.xlu0 %v3786, 16
      %v3831 = vpop.permute.xlu0 %3830
      %3832 = vrot.lane.b32.xlu0 %v3787, 16
      %v3833 = vpop.permute.xlu0 %3832
      %3834 = vrot.lane.b32.xlu0 %v3788, 16
      %v3835 = vpop.permute.xlu0 %3834
      %3836 = vrot.lane.b32.xlu0 %v3789, 16
      %v3837 = vpop.permute.xlu0 %3836
      %3838 = vrot.lane.b32.xlu0 %v3790, 16
      %v3839 = vpop.permute.xlu0 %3838
      %3840 = vrot.lane.b32.xlu0 %v3791, 16
      %v3841 = vpop.permute.xlu0 %3840
      %3842 = vrot.lane.b32.xlu0 %v3792, 16
      %v3843 = vpop.permute.xlu0 %3842
      %v3844 = vsel %vm599, %v3821, %v3823
      %v3845 = vsel %vm599, %v3823, %v3825
      %v3846 = vsel %vm599, %v3827, %v3829
      %v3847 = vsel %vm599, %v3829, %v3831
      %v3848 = vsel %vm599, %v3833, %v3835
      %v3849 = vsel %vm599, %v3835, %v3837
      %v3850 = vsel %vm599, %v3839, %v3841
      %v3851 = vsel %vm599, %v3841, %v3843
      %vm3860 = vcmask 261120
      %v3862 = vsel %vm3860, %v3807, 0
      %3864 = vmatprep.subr.mxu0 0.0
      %3865 = vmatpush1.msra.mxu0 0.0
      %3866 = vmatprep.subr.mxu0 0.0
      %3867 = vmatpush1.msra.mxu0 0.0
      %3868 = vmatprep.subr.mxu0 0.0
      %3869 = vmatpush1.msra.mxu0 0.0
      %3870 = vmatprep.subr.mxu0 0.0
      %3871 = vmatpush1.msra.mxu0 0.0
      %3872 = vmatprep.subr.mxu0 0.0
      %3873 = vmatpush1.msra.mxu0 0.0
      %3874 = vmatprep.subr.mxu0 0.0
      %3875 = vmatpush1.msra.mxu0 0.0
      %3876 = vmatprep.subr.mxu0 0.0
      %3877 = vmatpush1.msra.mxu0 0.0
      %3878 = vmatprep.subr.mxu0 0.0
      %3879 = vmatpush1.msra.mxu0 0.0
      %3880 = vmatprep.subr.mxu0 0.0
      %3881 = vmatpush1.msra.mxu0 0.0
      %3882 = vmatprep.subr.mxu0 0.0
      %3883 = vmatpush1.msra.mxu0 0.0
      %3884 = vmatprep.subr.mxu0 0.0
      %3885 = vmatpush1.msra.mxu0 0.0
      %3886 = vmatprep.subr.mxu0 0.0
      %3887 = vmatpush1.msra.mxu0 0.0
      %3888 = vmatprep.subr.mxu0 %v3851
      %3889 = vmatpush1.msra.mxu0 %v3850
      %3890 = vmatprep.subr.mxu0 %v3849
      %3891 = vmatpush1.msra.mxu0 %v3848
      %3892 = vmatprep.subr.mxu0 %v3847
      %3893 = vmatpush1.msra.mxu0 %v3846
      %3894 = vmatprep.subr.mxu0 %v3845
      %3895 = vmatpush1.msra.mxu0 %v3844
      %3896 = vmatprep.subr.mxu0 0.0
      %3897 = vmatpush2.msra.mxu0 0.0
      %3898 = vmatprep.subr.mxu0 0.0
      %3899 = vmatpush2.msra.mxu0 0.0
      %3900 = vmatprep.subr.mxu0 0.0
      %3901 = vmatpush2.msra.mxu0 0.0
      %3902 = vmatprep.subr.mxu0 0.0
      %3903 = vmatpush2.msra.mxu0 0.0
      %3904 = vmatprep.subr.mxu0 0.0
      %3905 = vmatpush2.msra.mxu0 0.0
      %3906 = vmatprep.subr.mxu0 0.0
      %3907 = vmatpush2.msra.mxu0 0.0
      %3908 = vmatprep.subr.mxu0 0.0
      %3909 = vmatpush2.msra.mxu0 0.0
      %3910 = vmatprep.subr.mxu0 0.0
      %3911 = vmatpush2.msra.mxu0 0.0
      %3912 = vmatprep.subr.mxu0 0.0
      %3913 = vmatpush2.msra.mxu0 0.0
      %3914 = vmatprep.subr.mxu0 0.0
      %3915 = vmatpush2.msra.mxu0 0.0
      %3916 = vmatprep.subr.mxu0 0.0
      %3917 = vmatpush2.msra.mxu0 0.0
      %3918 = vmatprep.subr.mxu0 0.0
      %3919 = vmatpush2.msra.mxu0 0.0
      %3920 = vmatprep.subr.mxu0 0.0
      %3921 = vmatpush2.msra.mxu0 0.0
      %3922 = vmatprep.subr.mxu0 0.0
      %3923 = vmatpush2.msra.mxu0 0.0
      %3924 = vmatprep.subr.mxu0 0.0
      %3925 = vmatpush2.msra.mxu0 0.0
      %3926 = vmatprep.subr.mxu0 0.0
      %3927 = vmatpush2.msra.mxu0 0.0
      %3928 = vmatprep.mubr.f32.mxu0 0.0
      %3929 = vmatmul.mubr.f32.gmra.mxu0 %v3862
      %v3930 = vpop.f32.mrf.mxu0
      %v3931 = vadd.f32 0.0, %v3930
      %v3932 = vpop.f32.mrf.mxu0
      %v3933 = vadd.f32 0.0, %v3932
      %3934 = vdwg.mxu0
      %3947 = vrot.lane.b32.xlu0 %v3793, 17
      %v3948 = vpop.permute.xlu0 %3947
      %3949 = vrot.lane.b32.xlu0 %v3794, 17
      %v3950 = vpop.permute.xlu0 %3949
      %3951 = vrot.lane.b32.xlu0 %v3795, 17
      %v3952 = vpop.permute.xlu0 %3951
      %3953 = vrot.lane.b32.xlu0 %v3796, 17
      %v3954 = vpop.permute.xlu0 %3953
      %3955 = vrot.lane.b32.xlu0 %v3797, 17
      %v3956 = vpop.permute.xlu0 %3955
      %3957 = vrot.lane.b32.xlu0 %v3798, 17
      %v3958 = vpop.permute.xlu0 %3957
      %3959 = vrot.lane.b32.xlu0 %v3799, 17
      %v3960 = vpop.permute.xlu0 %3959
      %3961 = vrot.lane.b32.xlu0 %v3800, 17
      %v3962 = vpop.permute.xlu0 %3961
      %3963 = vrot.lane.b32.xlu0 %v3801, 17
      %v3964 = vpop.permute.xlu0 %3963
      %3965 = vrot.lane.b32.xlu0 %v3802, 17
      %v3966 = vpop.permute.xlu0 %3965
      %3967 = vrot.lane.b32.xlu0 %v3803, 17
      %v3968 = vpop.permute.xlu0 %3967
      %3969 = vrot.lane.b32.xlu0 %v3804, 17
      %v3970 = vpop.permute.xlu0 %3969
      %v3971 = vsel %vm440, %v3948, %v3950
      %v3972 = vsel %vm440, %v3950, %v3952
      %v3973 = vsel %vm440, %v3954, %v3956
      %v3974 = vsel %vm440, %v3956, %v3958
      %v3975 = vsel %vm440, %v3960, %v3962
      %v3976 = vsel %vm440, %v3962, %v3964
      %v3977 = vsel %vm440, %v3966, %v3968
      %v3978 = vsel %vm440, %v3968, %v3970
      %v3988 = vsel %vm3860, %v3805, 0
      %3990 = vmatprep.subr.mxu0 0.0
      %3991 = vmatpush1.msra.mxu0 0.0
      %3992 = vmatprep.subr.mxu0 0.0
      %3993 = vmatpush1.msra.mxu0 0.0
      %3994 = vmatprep.subr.mxu0 0.0
      %3995 = vmatpush1.msra.mxu0 0.0
      %3996 = vmatprep.subr.mxu0 0.0
      %3997 = vmatpush1.msra.mxu0 0.0
      %3998 = vmatprep.subr.mxu0 0.0
      %3999 = vmatpush1.msra.mxu0 0.0
      %4000 = vmatprep.subr.mxu0 0.0
      %4001 = vmatpush1.msra.mxu0 0.0
      %4002 = vmatprep.subr.mxu0 0.0
      %4003 = vmatpush1.msra.mxu0 0.0
      %4004 = vmatprep.subr.mxu0 0.0
      %4005 = vmatpush1.msra.mxu0 0.0
      %4006 = vmatprep.subr.mxu0 0.0
      %4007 = vmatpush1.msra.mxu0 0.0
      %4008 = vmatprep.subr.mxu0 0.0
      %4009 = vmatpush1.msra.mxu0 0.0
      %4010 = vmatprep.subr.mxu0 0.0
      %4011 = vmatpush1.msra.mxu0 0.0
      %4012 = vmatprep.subr.mxu0 0.0
      %4013 = vmatpush1.msra.mxu0 0.0
      %4014 = vmatprep.subr.mxu0 %v3978
      %4015 = vmatpush1.msra.mxu0 %v3977
      %4016 = vmatprep.subr.mxu0 %v3976
      %4017 = vmatpush1.msra.mxu0 %v3975
      %4018 = vmatprep.subr.mxu0 %v3974
      %4019 = vmatpush1.msra.mxu0 %v3973
      %4020 = vmatprep.subr.mxu0 %v3972
      %4021 = vmatpush1.msra.mxu0 %v3971
      %4022 = vmatprep.subr.mxu0 0.0
      %4023 = vmatpush2.msra.mxu0 0.0
      %4024 = vmatprep.subr.mxu0 0.0
      %4025 = vmatpush2.msra.mxu0 0.0
      %4026 = vmatprep.subr.mxu0 0.0
      %4027 = vmatpush2.msra.mxu0 0.0
      %4028 = vmatprep.subr.mxu0 0.0
      %4029 = vmatpush2.msra.mxu0 0.0
      %4030 = vmatprep.subr.mxu0 0.0
      %4031 = vmatpush2.msra.mxu0 0.0
      %4032 = vmatprep.subr.mxu0 0.0
      %4033 = vmatpush2.msra.mxu0 0.0
      %4034 = vmatprep.subr.mxu0 0.0
      %4035 = vmatpush2.msra.mxu0 0.0
      %4036 = vmatprep.subr.mxu0 0.0
      %4037 = vmatpush2.msra.mxu0 0.0
      %4038 = vmatprep.subr.mxu0 0.0
      %4039 = vmatpush2.msra.mxu0 0.0
      %4040 = vmatprep.subr.mxu0 0.0
      %4041 = vmatpush2.msra.mxu0 0.0
      %4042 = vmatprep.subr.mxu0 0.0
      %4043 = vmatpush2.msra.mxu0 0.0
      %4044 = vmatprep.subr.mxu0 0.0
      %4045 = vmatpush2.msra.mxu0 0.0
      %4046 = vmatprep.subr.mxu0 0.0
      %4047 = vmatpush2.msra.mxu0 0.0
      %4048 = vmatprep.subr.mxu0 0.0
      %4049 = vmatpush2.msra.mxu0 0.0
      %4050 = vmatprep.subr.mxu0 0.0
      %4051 = vmatpush2.msra.mxu0 0.0
      %4052 = vmatprep.subr.mxu0 0.0
      %4053 = vmatpush2.msra.mxu0 0.0
      %4054 = vmatprep.mubr.f32.mxu0 0.0
      %4055 = vmatmul.mubr.f32.gmra.mxu0 %v3988
      %v4056 = vpop.f32.mrf.mxu0
      %v4057 = vadd.f32 %v3931, %v4056
      %v4058 = vpop.f32.mrf.mxu0
      %v4059 = vadd.f32 %v3933, %v4058
      %4060 = vdwg.mxu0
      %v4061 = vmul.f32 %v3781, %v1107
      %v4062 = vmul.f32 %v3782, %v1111
      %v4063 = vmul.f32 %v3783, %v1109
      %v4064 = vmul.f32 %v3784, %v1107
      %v4065 = vmul.f32 %v3785, %v1111
      %v4066 = vmul.f32 %v3786, %v1109
      %v4067 = vmul.f32 %v3787, %v1107
      %v4068 = vmul.f32 %v3788, %v1111
      %v4069 = vmul.f32 %v3789, %v1109
      %v4070 = vmul.f32 %v3790, %v1107
      %v4071 = vmul.f32 %v3791, %v1111
      %v4072 = vmul.f32 %v3792, %v1109
      %s4073 = scalar_lea.vmem %s5, 8
      %v4074 = vld [vmem:[%s4073] sm:$0xf]
      %4087 = vrot.lane.b32.xlu0 %v4061, 15
      %v4088 = vpop.permute.xlu0 %4087
      %4089 = vrot.lane.b32.xlu0 %v4062, 15
      %v4090 = vpop.permute.xlu0 %4089
      %4091 = vrot.lane.b32.xlu0 %v4063, 15
      %v4092 = vpop.permute.xlu0 %4091
      %4093 = vrot.lane.b32.xlu0 %v4064, 15
      %v4094 = vpop.permute.xlu0 %4093
      %4095 = vrot.lane.b32.xlu0 %v4065, 15
      %v4096 = vpop.permute.xlu0 %4095
      %4097 = vrot.lane.b32.xlu0 %v4066, 15
      %v4098 = vpop.permute.xlu0 %4097
      %4099 = vrot.lane.b32.xlu0 %v4067, 15
      %v4100 = vpop.permute.xlu0 %4099
      %4101 = vrot.lane.b32.xlu0 %v4068, 15
      %v4102 = vpop.permute.xlu0 %4101
      %4103 = vrot.lane.b32.xlu0 %v4069, 15
      %v4104 = vpop.permute.xlu0 %4103
      %4105 = vrot.lane.b32.xlu0 %v4070, 15
      %v4106 = vpop.permute.xlu0 %4105
      %4107 = vrot.lane.b32.xlu0 %v4071, 15
      %v4108 = vpop.permute.xlu0 %4107
      %4109 = vrot.lane.b32.xlu0 %v4072, 15
      %v4110 = vpop.permute.xlu0 %4109
      %v4111 = vsel %vm1192, %v4088, %v4090
      %v4112 = vsel %vm1192, %v4090, %v4092
      %v4113 = vsel %vm1192, %v4094, %v4096
      %v4114 = vsel %vm1192, %v4096, %v4098
      %v4115 = vsel %vm1192, %v4100, %v4102
      %v4116 = vsel %vm1192, %v4102, %v4104
      %v4117 = vsel %vm1192, %v4106, %v4108
      %v4118 = vsel %vm1192, %v4108, %v4110
      %v4128 = vsel %vm3860, %v4074, 0
      %4130 = vmatprep.subr.mxu0 0.0
      %4131 = vmatpush1.msra.mxu0 0.0
      %4132 = vmatprep.subr.mxu0 0.0
      %4133 = vmatpush1.msra.mxu0 0.0
      %4134 = vmatprep.subr.mxu0 0.0
      %4135 = vmatpush1.msra.mxu0 0.0
      %4136 = vmatprep.subr.mxu0 0.0
      %4137 = vmatpush1.msra.mxu0 0.0
      %4138 = vmatprep.subr.mxu0 0.0
      %4139 = vmatpush1.msra.mxu0 0.0
      %4140 = vmatprep.subr.mxu0 0.0
      %4141 = vmatpush1.msra.mxu0 0.0
      %4142 = vmatprep.subr.mxu0 0.0
      %4143 = vmatpush1.msra.mxu0 0.0
      %4144 = vmatprep.subr.mxu0 0.0
      %4145 = vmatpush1.msra.mxu0 0.0
      %4146 = vmatprep.subr.mxu0 0.0
      %4147 = vmatpush1.msra.mxu0 0.0
      %4148 = vmatprep.subr.mxu0 0.0
      %4149 = vmatpush1.msra.mxu0 0.0
      %4150 = vmatprep.subr.mxu0 0.0
      %4151 = vmatpush1.msra.mxu0 0.0
      %4152 = vmatprep.subr.mxu0 0.0
      %4153 = vmatpush1.msra.mxu0 0.0
      %4154 = vmatprep.subr.mxu0 %v4118
      %4155 = vmatpush1.msra.mxu0 %v4117
      %4156 = vmatprep.subr.mxu0 %v4116
      %4157 = vmatpush1.msra.mxu0 %v4115
      %4158 = vmatprep.subr.mxu0 %v4114
      %4159 = vmatpush1.msra.mxu0 %v4113
      %4160 = vmatprep.subr.mxu0 %v4112
      %4161 = vmatpush1.msra.mxu0 %v4111
      %4162 = vmatprep.subr.mxu0 0.0
      %4163 = vmatpush2.msra.mxu0 0.0
      %4164 = vmatprep.subr.mxu0 0.0
      %4165 = vmatpush2.msra.mxu0 0.0
      %4166 = vmatprep.subr.mxu0 0.0
      %4167 = vmatpush2.msra.mxu0 0.0
      %4168 = vmatprep.subr.mxu0 0.0
      %4169 = vmatpush2.msra.mxu0 0.0
      %4170 = vmatprep.subr.mxu0 0.0
      %4171 = vmatpush2.msra.mxu0 0.0
      %4172 = vmatprep.subr.mxu0 0.0
      %4173 = vmatpush2.msra.mxu0 0.0
      %4174 = vmatprep.subr.mxu0 0.0
      %4175 = vmatpush2.msra.mxu0 0.0
      %4176 = vmatprep.subr.mxu0 0.0
      %4177 = vmatpush2.msra.mxu0 0.0
      %4178 = vmatprep.subr.mxu0 0.0
      %4179 = vmatpush2.msra.mxu0 0.0
      %4180 = vmatprep.subr.mxu0 0.0
      %4181 = vmatpush2.msra.mxu0 0.0
      %4182 = vmatprep.subr.mxu0 0.0
      %4183 = vmatpush2.msra.mxu0 0.0
      %4184 = vmatprep.subr.mxu0 0.0
      %4185 = vmatpush2.msra.mxu0 0.0
      %4186 = vmatprep.subr.mxu0 0.0
      %4187 = vmatpush2.msra.mxu0 0.0
      %4188 = vmatprep.subr.mxu0 0.0
      %4189 = vmatpush2.msra.mxu0 0.0
      %4190 = vmatprep.subr.mxu0 0.0
      %4191 = vmatpush2.msra.mxu0 0.0
      %4192 = vmatprep.subr.mxu0 0.0
      %4193 = vmatpush2.msra.mxu0 0.0
      %4194 = vmatprep.mubr.f32.mxu0 0.0
      %4195 = vmatmul.mubr.f32.gmra.mxu0 %v4128
      %v4196 = vpop.f32.mrf.mxu0
      %v4197 = vadd.f32 0.0, %v4196
      %v4198 = vpop.f32.mrf.mxu0
      %v4199 = vadd.f32 0.0, %v4198
      %4200 = vdwg.mxu0
      %v4201 = vadd.f32 %v4057, %v4197
      %v4202 = vadd.f32 %v4059, %v4199
      %v4203 = vmul.f32 %v3781, %v1455
      %v4204 = vmul.f32 %v3782, %v1459
      %v4205 = vmul.f32 %v3783, %v1457
      %v4206 = vmul.f32 %v3784, %v1455
      %v4207 = vmul.f32 %v3785, %v1459
      %v4208 = vmul.f32 %v3786, %v1457
      %v4209 = vmul.f32 %v3787, %v1455
      %v4210 = vmul.f32 %v3788, %v1459
      %v4211 = vmul.f32 %v3789, %v1457
      %v4212 = vmul.f32 %v3790, %v1455
      %v4213 = vmul.f32 %v3791, %v1459
      %v4214 = vmul.f32 %v3792, %v1457
      %s4215 = scalar_lea.vmem %s5, 12
      %v4216 = vld [vmem:[%s4215] sm:$0xf]
      %4229 = vrot.lane.b32.xlu0 %v4203, 1
      %v4230 = vpop.permute.xlu0 %4229
      %4231 = vrot.lane.b32.xlu0 %v4204, 1
      %v4232 = vpop.permute.xlu0 %4231
      %4233 = vrot.lane.b32.xlu0 %v4205, 1
      %v4234 = vpop.permute.xlu0 %4233
      %4235 = vrot.lane.b32.xlu0 %v4206, 1
      %v4236 = vpop.permute.xlu0 %4235
      %4237 = vrot.lane.b32.xlu0 %v4207, 1
      %v4238 = vpop.permute.xlu0 %4237
      %4239 = vrot.lane.b32.xlu0 %v4208, 1
      %v4240 = vpop.permute.xlu0 %4239
      %4241 = vrot.lane.b32.xlu0 %v4209, 1
      %v4242 = vpop.permute.xlu0 %4241
      %4243 = vrot.lane.b32.xlu0 %v4210, 1
      %v4244 = vpop.permute.xlu0 %4243
      %4245 = vrot.lane.b32.xlu0 %v4211, 1
      %v4246 = vpop.permute.xlu0 %4245
      %4247 = vrot.lane.b32.xlu0 %v4212, 1
      %v4248 = vpop.permute.xlu0 %4247
      %4249 = vrot.lane.b32.xlu0 %v4213, 1
      %v4250 = vpop.permute.xlu0 %4249
      %4251 = vrot.lane.b32.xlu0 %v4214, 1
      %v4252 = vpop.permute.xlu0 %4251
      %v4253 = vsel %vm1540, %v4230, %v4232
      %v4254 = vsel %vm1540, %v4232, %v4234
      %v4255 = vsel %vm1540, %v4236, %v4238
      %v4256 = vsel %vm1540, %v4238, %v4240
      %v4257 = vsel %vm1540, %v4242, %v4244
      %v4258 = vsel %vm1540, %v4244, %v4246
      %v4259 = vsel %vm1540, %v4248, %v4250
      %v4260 = vsel %vm1540, %v4250, %v4252
      %v4270 = vsel %vm3860, %v4216, 0
      %4272 = vmatprep.subr.mxu0 0.0
      %4273 = vmatpush1.msra.mxu0 0.0
      %4274 = vmatprep.subr.mxu0 0.0
      %4275 = vmatpush1.msra.mxu0 0.0
      %4276 = vmatprep.subr.mxu0 0.0
      %4277 = vmatpush1.msra.mxu0 0.0
      %4278 = vmatprep.subr.mxu0 0.0
      %4279 = vmatpush1.msra.mxu0 0.0
      %4280 = vmatprep.subr.mxu0 0.0
      %4281 = vmatpush1.msra.mxu0 0.0
      %4282 = vmatprep.subr.mxu0 0.0
      %4283 = vmatpush1.msra.mxu0 0.0
      %4284 = vmatprep.subr.mxu0 0.0
      %4285 = vmatpush1.msra.mxu0 0.0
      %4286 = vmatprep.subr.mxu0 0.0
      %4287 = vmatpush1.msra.mxu0 0.0
      %4288 = vmatprep.subr.mxu0 0.0
      %4289 = vmatpush1.msra.mxu0 0.0
      %4290 = vmatprep.subr.mxu0 0.0
      %4291 = vmatpush1.msra.mxu0 0.0
      %4292 = vmatprep.subr.mxu0 0.0
      %4293 = vmatpush1.msra.mxu0 0.0
      %4294 = vmatprep.subr.mxu0 0.0
      %4295 = vmatpush1.msra.mxu0 0.0
      %4296 = vmatprep.subr.mxu0 %v4260
      %4297 = vmatpush1.msra.mxu0 %v4259
      %4298 = vmatprep.subr.mxu0 %v4258
      %4299 = vmatpush1.msra.mxu0 %v4257
      %4300 = vmatprep.subr.mxu0 %v4256
      %4301 = vmatpush1.msra.mxu0 %v4255
      %4302 = vmatprep.subr.mxu0 %v4254
      %4303 = vmatpush1.msra.mxu0 %v4253
      %4304 = vmatprep.subr.mxu0 0.0
      %4305 = vmatpush2.msra.mxu0 0.0
      %4306 = vmatprep.subr.mxu0 0.0
      %4307 = vmatpush2.msra.mxu0 0.0
      %4308 = vmatprep.subr.mxu0 0.0
      %4309 = vmatpush2.msra.mxu0 0.0
      %4310 = vmatprep.subr.mxu0 0.0
      %4311 = vmatpush2.msra.mxu0 0.0
      %4312 = vmatprep.subr.mxu0 0.0
      %4313 = vmatpush2.msra.mxu0 0.0
      %4314 = vmatprep.subr.mxu0 0.0
      %4315 = vmatpush2.msra.mxu0 0.0
      %4316 = vmatprep.subr.mxu0 0.0
      %4317 = vmatpush2.msra.mxu0 0.0
      %4318 = vmatprep.subr.mxu0 0.0
      %4319 = vmatpush2.msra.mxu0 0.0
      %4320 = vmatprep.subr.mxu0 0.0
      %4321 = vmatpush2.msra.mxu0 0.0
      %4322 = vmatprep.subr.mxu0 0.0
      %4323 = vmatpush2.msra.mxu0 0.0
      %4324 = vmatprep.subr.mxu0 0.0
      %4325 = vmatpush2.msra.mxu0 0.0
      %4326 = vmatprep.subr.mxu0 0.0
      %4327 = vmatpush2.msra.mxu0 0.0
      %4328 = vmatprep.subr.mxu0 0.0
      %4329 = vmatpush2.msra.mxu0 0.0
      %4330 = vmatprep.subr.mxu0 0.0
      %4331 = vmatpush2.msra.mxu0 0.0
      %4332 = vmatprep.subr.mxu0 0.0
      %4333 = vmatpush2.msra.mxu0 0.0
      %4334 = vmatprep.subr.mxu0 0.0
      %4335 = vmatpush2.msra.mxu0 0.0
      %4336 = vmatprep.mubr.f32.mxu0 0.0
      %4337 = vmatmul.mubr.f32.gmra.mxu0 %v4270
      %v4338 = vpop.f32.mrf.mxu0
      %v4339 = vadd.f32 0.0, %v4338
      %v4340 = vpop.f32.mrf.mxu0
      %v4341 = vadd.f32 0.0, %v4340
      %4342 = vdwg.mxu0
      %v4343 = vadd.f32 %v4201, %v4339
      %v4344 = vadd.f32 %v4202, %v4341
      %s4345 = scalar_lea.vmem %s5, 16
      %v4346 = vld [vmem:[%s4345] sm:$0xf]
      %v4348 = vsel %vm3860, %v4346, 0
      %4350 = vmatprep.subr.mxu0 0.0
      %4351 = vmatpush1.msra.mxu0 0.0
      %4352 = vmatprep.subr.mxu0 0.0
      %4353 = vmatpush1.msra.mxu0 0.0
      %4354 = vmatprep.subr.mxu0 0.0
      %4355 = vmatpush1.msra.mxu0 0.0
      %4356 = vmatprep.subr.mxu0 0.0
      %4357 = vmatpush1.msra.mxu0 0.0
      %4358 = vmatprep.subr.mxu0 0.0
      %4359 = vmatpush1.msra.mxu0 0.0
      %4360 = vmatprep.subr.mxu0 0.0
      %4361 = vmatpush1.msra.mxu0 0.0
      %4362 = vmatprep.subr.mxu0 0.0
      %4363 = vmatpush1.msra.mxu0 0.0
      %4364 = vmatprep.subr.mxu0 0.0
      %4365 = vmatpush1.msra.mxu0 0.0
      %4366 = vmatprep.subr.mxu0 0.0
      %4367 = vmatpush1.msra.mxu0 0.0
      %4368 = vmatprep.subr.mxu0 0.0
      %4369 = vmatpush1.msra.mxu0 0.0
      %4370 = vmatprep.subr.mxu0 0.0
      %4371 = vmatpush1.msra.mxu0 0.0
      %4372 = vmatprep.subr.mxu0 0.0
      %4373 = vmatpush1.msra.mxu0 0.0
      %4374 = vmatprep.subr.mxu0 %v3792
      %4375 = vmatpush1.msra.mxu0 %v3791
      %4376 = vmatprep.subr.mxu0 %v3789
      %4377 = vmatpush1.msra.mxu0 %v3788
      %4378 = vmatprep.subr.mxu0 %v3786
      %4379 = vmatpush1.msra.mxu0 %v3785
      %4380 = vmatprep.subr.mxu0 %v3783
      %4381 = vmatpush1.msra.mxu0 %v3782
      %4382 = vmatprep.subr.mxu0 0.0
      %4383 = vmatpush2.msra.mxu0 0.0
      %4384 = vmatprep.subr.mxu0 0.0
      %4385 = vmatpush2.msra.mxu0 0.0
      %4386 = vmatprep.subr.mxu0 0.0
      %4387 = vmatpush2.msra.mxu0 0.0
      %4388 = vmatprep.subr.mxu0 0.0
      %4389 = vmatpush2.msra.mxu0 0.0
      %4390 = vmatprep.subr.mxu0 0.0
      %4391 = vmatpush2.msra.mxu0 0.0
      %4392 = vmatprep.subr.mxu0 0.0
      %4393 = vmatpush2.msra.mxu0 0.0
      %4394 = vmatprep.subr.mxu0 0.0
      %4395 = vmatpush2.msra.mxu0 0.0
      %4396 = vmatprep.subr.mxu0 0.0
      %4397 = vmatpush2.msra.mxu0 0.0
      %4398 = vmatprep.subr.mxu0 0.0
      %4399 = vmatpush2.msra.mxu0 0.0
      %4400 = vmatprep.subr.mxu0 0.0
      %4401 = vmatpush2.msra.mxu0 0.0
      %4402 = vmatprep.subr.mxu0 0.0
      %4403 = vmatpush2.msra.mxu0 0.0
      %4404 = vmatprep.subr.mxu0 0.0
      %4405 = vmatpush2.msra.mxu0 0.0
      %4406 = vmatprep.subr.mxu0 0.0
      %4407 = vmatpush2.msra.mxu0 0.0
      %4408 = vmatprep.subr.mxu0 0.0
      %4409 = vmatpush2.msra.mxu0 0.0
      %4410 = vmatprep.subr.mxu0 0.0
      %4411 = vmatpush2.msra.mxu0 0.0
      %4412 = vmatprep.subr.mxu0 0.0
      %4413 = vmatpush2.msra.mxu0 0.0
      %4414 = vmatprep.mubr.f32.mxu0 0.0
      %4415 = vmatmul.mubr.f32.gmra.mxu0 %v4348
      %v4416 = vpop.f32.mrf.mxu0
      %v4417 = vadd.f32 0.0, %v4416
      %v4418 = vpop.f32.mrf.mxu0
      %v4419 = vadd.f32 0.0, %v4418
      %4420 = vdwg.mxu0
      %v4421 = vadd.f32 %v4343, %v4417
      %v4422 = vadd.f32 %v4344, %v4419
      %v4423 = vld [vmem:[#allocation3 + $0x8] sm:$0xff]
      %v4424 = vld [vmem:[#allocation3 + $0x10] sm:$0xff]
      %v4425 = vld [vmem:[#allocation3 + $0x18] sm:$0xff]
      %v4426 = vld [vmem:[#allocation3 + $0x28] sm:$0xff]
      %v4427 = vld [vmem:[#allocation3 + $0x30] sm:$0xff]
      %v4428 = vld [vmem:[#allocation3 + $0x38] sm:$0xff]
      %v4429 = vld [vmem:[#allocation3 + $0x48] sm:$0xff]
      %v4430 = vld [vmem:[#allocation3 + $0x50] sm:$0xff]
      %v4431 = vld [vmem:[#allocation3 + $0x58] sm:$0xff]
      %v4432 = vld [vmem:[#allocation3 + $0x68] sm:$0xff]
      %v4433 = vld [vmem:[#allocation3 + $0x70] sm:$0xff]
      %v4434 = vld [vmem:[#allocation3 + $0x78] sm:$0xff]
      %v4435 = vmul.f32 %v4423, %v2076
      %v4436 = vmul.f32 %v4424, %v2079
      %v4437 = vmul.f32 %v4425, %v2078
      %v4438 = vmul.f32 %v4426, %v2076
      %v4439 = vmul.f32 %v4427, %v2079
      %v4440 = vmul.f32 %v4428, %v2078
      %v4441 = vmul.f32 %v4429, %v2076
      %v4442 = vmul.f32 %v4430, %v2079
      %v4443 = vmul.f32 %v4431, %v2078
      %v4444 = vmul.f32 %v4432, %v2076
      %v4445 = vmul.f32 %v4433, %v2079
      %v4446 = vmul.f32 %v4434, %v2078
      %s4447 = scalar_lea.vmem %s5, 20
      %v4448 = vld [vmem:[%s4447] sm:$0xf]
      %4461 = vrot.lane.b32.xlu0 %v4435, 127
      %v4462 = vpop.permute.xlu0 %4461
      %4463 = vrot.lane.b32.xlu0 %v4436, 127
      %v4464 = vpop.permute.xlu0 %4463
      %4465 = vrot.lane.b32.xlu0 %v4437, 127
      %v4466 = vpop.permute.xlu0 %4465
      %4467 = vrot.lane.b32.xlu0 %v4438, 127
      %v4468 = vpop.permute.xlu0 %4467
      %4469 = vrot.lane.b32.xlu0 %v4439, 127
      %v4470 = vpop.permute.xlu0 %4469
      %4471 = vrot.lane.b32.xlu0 %v4440, 127
      %v4472 = vpop.permute.xlu0 %4471
      %4473 = vrot.lane.b32.xlu0 %v4441, 127
      %v4474 = vpop.permute.xlu0 %4473
      %4475 = vrot.lane.b32.xlu0 %v4442, 127
      %v4476 = vpop.permute.xlu0 %4475
      %4477 = vrot.lane.b32.xlu0 %v4443, 127
      %v4478 = vpop.permute.xlu0 %4477
      %4479 = vrot.lane.b32.xlu0 %v4444, 127
      %v4480 = vpop.permute.xlu0 %4479
      %4481 = vrot.lane.b32.xlu0 %v4445, 127
      %v4482 = vpop.permute.xlu0 %4481
      %4483 = vrot.lane.b32.xlu0 %v4446, 127
      %v4484 = vpop.permute.xlu0 %4483
      %v4485 = vsel %vm1458, %v4462, %v4464
      %v4486 = vsel %vm1458, %v4464, %v4466
      %v4487 = vsel %vm1458, %v4468, %v4470
      %v4488 = vsel %vm1458, %v4470, %v4472
      %v4489 = vsel %vm1458, %v4474, %v4476
      %v4490 = vsel %vm1458, %v4476, %v4478
      %v4491 = vsel %vm1458, %v4480, %v4482
      %v4492 = vsel %vm1458, %v4482, %v4484
      %v4502 = vsel %vm3860, %v4448, 0
      %4504 = vmatprep.subr.mxu0 0.0
      %4505 = vmatpush1.msra.mxu0 0.0
      %4506 = vmatprep.subr.mxu0 0.0
      %4507 = vmatpush1.msra.mxu0 0.0
      %4508 = vmatprep.subr.mxu0 0.0
      %4509 = vmatpush1.msra.mxu0 0.0
      %4510 = vmatprep.subr.mxu0 0.0
      %4511 = vmatpush1.msra.mxu0 0.0
      %4512 = vmatprep.subr.mxu0 0.0
      %4513 = vmatpush1.msra.mxu0 0.0
      %4514 = vmatprep.subr.mxu0 0.0
      %4515 = vmatpush1.msra.mxu0 0.0
      %4516 = vmatprep.subr.mxu0 0.0
      %4517 = vmatpush1.msra.mxu0 0.0
      %4518 = vmatprep.subr.mxu0 0.0
      %4519 = vmatpush1.msra.mxu0 0.0
      %4520 = vmatprep.subr.mxu0 0.0
      %4521 = vmatpush1.msra.mxu0 0.0
      %4522 = vmatprep.subr.mxu0 0.0
      %4523 = vmatpush1.msra.mxu0 0.0
      %4524 = vmatprep.subr.mxu0 0.0
      %4525 = vmatpush1.msra.mxu0 0.0
      %4526 = vmatprep.subr.mxu0 0.0
      %4527 = vmatpush1.msra.mxu0 0.0
      %4528 = vmatprep.subr.mxu0 %v4492
      %4529 = vmatpush1.msra.mxu0 %v4491
      %4530 = vmatprep.subr.mxu0 %v4490
      %4531 = vmatpush1.msra.mxu0 %v4489
      %4532 = vmatprep.subr.mxu0 %v4488
      %4533 = vmatpush1.msra.mxu0 %v4487
      %4534 = vmatprep.subr.mxu0 %v4486
      %4535 = vmatpush1.msra.mxu0 %v4485
      %4536 = vmatprep.subr.mxu0 0.0
      %4537 = vmatpush2.msra.mxu0 0.0
      %4538 = vmatprep.subr.mxu0 0.0
      %4539 = vmatpush2.msra.mxu0 0.0
      %4540 = vmatprep.subr.mxu0 0.0
      %4541 = vmatpush2.msra.mxu0 0.0
      %4542 = vmatprep.subr.mxu0 0.0
      %4543 = vmatpush2.msra.mxu0 0.0
      %4544 = vmatprep.subr.mxu0 0.0
      %4545 = vmatpush2.msra.mxu0 0.0
      %4546 = vmatprep.subr.mxu0 0.0
      %4547 = vmatpush2.msra.mxu0 0.0
      %4548 = vmatprep.subr.mxu0 0.0
      %4549 = vmatpush2.msra.mxu0 0.0
      %4550 = vmatprep.subr.mxu0 0.0
      %4551 = vmatpush2.msra.mxu0 0.0
      %4552 = vmatprep.subr.mxu0 0.0
      %4553 = vmatpush2.msra.mxu0 0.0
      %4554 = vmatprep.subr.mxu0 0.0
      %4555 = vmatpush2.msra.mxu0 0.0
      %4556 = vmatprep.subr.mxu0 0.0
      %4557 = vmatpush2.msra.mxu0 0.0
      %4558 = vmatprep.subr.mxu0 0.0
      %4559 = vmatpush2.msra.mxu0 0.0
      %4560 = vmatprep.subr.mxu0 0.0
      %4561 = vmatpush2.msra.mxu0 0.0
      %4562 = vmatprep.subr.mxu0 0.0
      %4563 = vmatpush2.msra.mxu0 0.0
      %4564 = vmatprep.subr.mxu0 0.0
      %4565 = vmatpush2.msra.mxu0 0.0
      %4566 = vmatprep.subr.mxu0 0.0
      %4567 = vmatpush2.msra.mxu0 0.0
      %4568 = vmatprep.mubr.f32.mxu0 0.0
      %4569 = vmatmul.mubr.f32.gmra.mxu0 %v4502
      %v4570 = vpop.f32.mrf.mxu0
      %v4571 = vadd.f32 0.0, %v4570
      %v4572 = vpop.f32.mrf.mxu0
      %v4573 = vadd.f32 0.0, %v4572
      %4574 = vdwg.mxu0
      %v4575 = vadd.f32 %v4421, %v4571
      %v4576 = vadd.f32 %v4422, %v4573
      %v4577 = vmul.f32 %v4423, %v2422
      %v4578 = vmul.f32 %v4424, %v2425
      %v4579 = vmul.f32 %v4425, %v2424
      %v4580 = vmul.f32 %v4426, %v2422
      %v4581 = vmul.f32 %v4427, %v2425
      %v4582 = vmul.f32 %v4428, %v2424
      %v4583 = vmul.f32 %v4429, %v2422
      %v4584 = vmul.f32 %v4430, %v2425
      %v4585 = vmul.f32 %v4431, %v2424
      %v4586 = vmul.f32 %v4432, %v2422
      %v4587 = vmul.f32 %v4433, %v2425
      %v4588 = vmul.f32 %v4434, %v2424
      %s4589 = scalar_lea.vmem %s5, 24
      %v4590 = vld [vmem:[%s4589] sm:$0xf]
      %4603 = vrot.lane.b32.xlu0 %v4577, 113
      %v4604 = vpop.permute.xlu0 %4603
      %4605 = vrot.lane.b32.xlu0 %v4578, 113
      %v4606 = vpop.permute.xlu0 %4605
      %4607 = vrot.lane.b32.xlu0 %v4579, 113
      %v4608 = vpop.permute.xlu0 %4607
      %4609 = vrot.lane.b32.xlu0 %v4580, 113
      %v4610 = vpop.permute.xlu0 %4609
      %4611 = vrot.lane.b32.xlu0 %v4581, 113
      %v4612 = vpop.permute.xlu0 %4611
      %4613 = vrot.lane.b32.xlu0 %v4582, 113
      %v4614 = vpop.permute.xlu0 %4613
      %4615 = vrot.lane.b32.xlu0 %v4583, 113
      %v4616 = vpop.permute.xlu0 %4615
      %4617 = vrot.lane.b32.xlu0 %v4584, 113
      %v4618 = vpop.permute.xlu0 %4617
      %4619 = vrot.lane.b32.xlu0 %v4585, 113
      %v4620 = vpop.permute.xlu0 %4619
      %4621 = vrot.lane.b32.xlu0 %v4586, 113
      %v4622 = vpop.permute.xlu0 %4621
      %4623 = vrot.lane.b32.xlu0 %v4587, 113
      %v4624 = vpop.permute.xlu0 %4623
      %4625 = vrot.lane.b32.xlu0 %v4588, 113
      %v4626 = vpop.permute.xlu0 %4625
      %v4627 = vsel %vm1110, %v4604, %v4606
      %v4628 = vsel %vm1110, %v4606, %v4608
      %v4629 = vsel %vm1110, %v4610, %v4612
      %v4630 = vsel %vm1110, %v4612, %v4614
      %v4631 = vsel %vm1110, %v4616, %v4618
      %v4632 = vsel %vm1110, %v4618, %v4620
      %v4633 = vsel %vm1110, %v4622, %v4624
      %v4634 = vsel %vm1110, %v4624, %v4626
      %v4644 = vsel %vm3860, %v4590, 0
      %4646 = vmatprep.subr.mxu0 0.0
      %4647 = vmatpush1.msra.mxu0 0.0
      %4648 = vmatprep.subr.mxu0 0.0
      %4649 = vmatpush1.msra.mxu0 0.0
      %4650 = vmatprep.subr.mxu0 0.0
      %4651 = vmatpush1.msra.mxu0 0.0
      %4652 = vmatprep.subr.mxu0 0.0
      %4653 = vmatpush1.msra.mxu0 0.0
      %4654 = vmatprep.subr.mxu0 0.0
      %4655 = vmatpush1.msra.mxu0 0.0
      %4656 = vmatprep.subr.mxu0 0.0
      %4657 = vmatpush1.msra.mxu0 0.0
      %4658 = vmatprep.subr.mxu0 0.0
      %4659 = vmatpush1.msra.mxu0 0.0
      %4660 = vmatprep.subr.mxu0 0.0
      %4661 = vmatpush1.msra.mxu0 0.0
      %4662 = vmatprep.subr.mxu0 0.0
      %4663 = vmatpush1.msra.mxu0 0.0
      %4664 = vmatprep.subr.mxu0 0.0
      %4665 = vmatpush1.msra.mxu0 0.0
      %4666 = vmatprep.subr.mxu0 0.0
      %4667 = vmatpush1.msra.mxu0 0.0
      %4668 = vmatprep.subr.mxu0 0.0
      %4669 = vmatpush1.msra.mxu0 0.0
      %4670 = vmatprep.subr.mxu0 %v4634
      %4671 = vmatpush1.msra.mxu0 %v4633
      %4672 = vmatprep.subr.mxu0 %v4632
      %4673 = vmatpush1.msra.mxu0 %v4631
      %4674 = vmatprep.subr.mxu0 %v4630
      %4675 = vmatpush1.msra.mxu0 %v4629
      %4676 = vmatprep.subr.mxu0 %v4628
      %4677 = vmatpush1.msra.mxu0 %v4627
      %4678 = vmatprep.subr.mxu0 0.0
      %4679 = vmatpush2.msra.mxu0 0.0
      %4680 = vmatprep.subr.mxu0 0.0
      %4681 = vmatpush2.msra.mxu0 0.0
      %4682 = vmatprep.subr.mxu0 0.0
      %4683 = vmatpush2.msra.mxu0 0.0
      %4684 = vmatprep.subr.mxu0 0.0
      %4685 = vmatpush2.msra.mxu0 0.0
      %4686 = vmatprep.subr.mxu0 0.0
      %4687 = vmatpush2.msra.mxu0 0.0
      %4688 = vmatprep.subr.mxu0 0.0
      %4689 = vmatpush2.msra.mxu0 0.0
      %4690 = vmatprep.subr.mxu0 0.0
      %4691 = vmatpush2.msra.mxu0 0.0
      %4692 = vmatprep.subr.mxu0 0.0
      %4693 = vmatpush2.msra.mxu0 0.0
      %4694 = vmatprep.subr.mxu0 0.0
      %4695 = vmatpush2.msra.mxu0 0.0
      %4696 = vmatprep.subr.mxu0 0.0
      %4697 = vmatpush2.msra.mxu0 0.0
      %4698 = vmatprep.subr.mxu0 0.0
      %4699 = vmatpush2.msra.mxu0 0.0
      %4700 = vmatprep.subr.mxu0 0.0
      %4701 = vmatpush2.msra.mxu0 0.0
      %4702 = vmatprep.subr.mxu0 0.0
      %4703 = vmatpush2.msra.mxu0 0.0
      %4704 = vmatprep.subr.mxu0 0.0
      %4705 = vmatpush2.msra.mxu0 0.0
      %4706 = vmatprep.subr.mxu0 0.0
      %4707 = vmatpush2.msra.mxu0 0.0
      %4708 = vmatprep.subr.mxu0 0.0
      %4709 = vmatpush2.msra.mxu0 0.0
      %4710 = vmatprep.mubr.f32.mxu0 0.0
      %4711 = vmatmul.mubr.f32.gmra.mxu0 %v4644
      %v4712 = vpop.f32.mrf.mxu0
      %v4713 = vadd.f32 0.0, %v4712
      %v4714 = vpop.f32.mrf.mxu0
      %v4715 = vadd.f32 0.0, %v4714
      %4716 = vdwg.mxu0
      %v4717 = vadd.f32 %v4575, %v4713
      %v4718 = vadd.f32 %v4576, %v4715
      %s4719 = scalar_lea.vmem %s5, 28
      %v4720 = vld [vmem:[%s4719] sm:$0xf]
      %4733 = vrot.lane.b32.xlu0 %v4423, 112
      %v4734 = vpop.permute.xlu0 %4733
      %4735 = vrot.lane.b32.xlu0 %v4424, 112
      %v4736 = vpop.permute.xlu0 %4735
      %4737 = vrot.lane.b32.xlu0 %v4425, 112
      %v4738 = vpop.permute.xlu0 %4737
      %4739 = vrot.lane.b32.xlu0 %v4426, 112
      %v4740 = vpop.permute.xlu0 %4739
      %4741 = vrot.lane.b32.xlu0 %v4427, 112
      %v4742 = vpop.permute.xlu0 %4741
      %4743 = vrot.lane.b32.xlu0 %v4428, 112
      %v4744 = vpop.permute.xlu0 %4743
      %4745 = vrot.lane.b32.xlu0 %v4429, 112
      %v4746 = vpop.permute.xlu0 %4745
      %4747 = vrot.lane.b32.xlu0 %v4430, 112
      %v4748 = vpop.permute.xlu0 %4747
      %4749 = vrot.lane.b32.xlu0 %v4431, 112
      %v4750 = vpop.permute.xlu0 %4749
      %4751 = vrot.lane.b32.xlu0 %v4432, 112
      %v4752 = vpop.permute.xlu0 %4751
      %4753 = vrot.lane.b32.xlu0 %v4433, 112
      %v4754 = vpop.permute.xlu0 %4753
      %4755 = vrot.lane.b32.xlu0 %v4434, 112
      %v4756 = vpop.permute.xlu0 %4755
      %v4757 = vsel %vm2829, %v4734, %v4736
      %v4758 = vsel %vm2829, %v4736, %v4738
      %v4759 = vsel %vm2829, %v4740, %v4742
      %v4760 = vsel %vm2829, %v4742, %v4744
      %v4761 = vsel %vm2829, %v4746, %v4748
      %v4762 = vsel %vm2829, %v4748, %v4750
      %v4763 = vsel %vm2829, %v4752, %v4754
      %v4764 = vsel %vm2829, %v4754, %v4756
      %v4774 = vsel %vm3860, %v4720, 0
      %4776 = vmatprep.subr.mxu0 0.0
      %4777 = vmatpush1.msra.mxu0 0.0
      %4778 = vmatprep.subr.mxu0 0.0
      %4779 = vmatpush1.msra.mxu0 0.0
      %4780 = vmatprep.subr.mxu0 0.0
      %4781 = vmatpush1.msra.mxu0 0.0
      %4782 = vmatprep.subr.mxu0 0.0
      %4783 = vmatpush1.msra.mxu0 0.0
      %4784 = vmatprep.subr.mxu0 0.0
      %4785 = vmatpush1.msra.mxu0 0.0
      %4786 = vmatprep.subr.mxu0 0.0
      %4787 = vmatpush1.msra.mxu0 0.0
      %4788 = vmatprep.subr.mxu0 0.0
      %4789 = vmatpush1.msra.mxu0 0.0
      %4790 = vmatprep.subr.mxu0 0.0
      %4791 = vmatpush1.msra.mxu0 0.0
      %4792 = vmatprep.subr.mxu0 0.0
      %4793 = vmatpush1.msra.mxu0 0.0
      %4794 = vmatprep.subr.mxu0 0.0
      %4795 = vmatpush1.msra.mxu0 0.0
      %4796 = vmatprep.subr.mxu0 0.0
      %4797 = vmatpush1.msra.mxu0 0.0
      %4798 = vmatprep.subr.mxu0 0.0
      %4799 = vmatpush1.msra.mxu0 0.0
      %4800 = vmatprep.subr.mxu0 %v4764
      %4801 = vmatpush1.msra.mxu0 %v4763
      %4802 = vmatprep.subr.mxu0 %v4762
      %4803 = vmatpush1.msra.mxu0 %v4761
      %4804 = vmatprep.subr.mxu0 %v4760
      %4805 = vmatpush1.msra.mxu0 %v4759
      %4806 = vmatprep.subr.mxu0 %v4758
      %4807 = vmatpush1.msra.mxu0 %v4757
      %4808 = vmatprep.subr.mxu0 0.0
      %4809 = vmatpush2.msra.mxu0 0.0
      %4810 = vmatprep.subr.mxu0 0.0
      %4811 = vmatpush2.msra.mxu0 0.0
      %4812 = vmatprep.subr.mxu0 0.0
      %4813 = vmatpush2.msra.mxu0 0.0
      %4814 = vmatprep.subr.mxu0 0.0
      %4815 = vmatpush2.msra.mxu0 0.0
      %4816 = vmatprep.subr.mxu0 0.0
      %4817 = vmatpush2.msra.mxu0 0.0
      %4818 = vmatprep.subr.mxu0 0.0
      %4819 = vmatpush2.msra.mxu0 0.0
      %4820 = vmatprep.subr.mxu0 0.0
      %4821 = vmatpush2.msra.mxu0 0.0
      %4822 = vmatprep.subr.mxu0 0.0
      %4823 = vmatpush2.msra.mxu0 0.0
      %4824 = vmatprep.subr.mxu0 0.0
      %4825 = vmatpush2.msra.mxu0 0.0
      %4826 = vmatprep.subr.mxu0 0.0
      %4827 = vmatpush2.msra.mxu0 0.0
      %4828 = vmatprep.subr.mxu0 0.0
      %4829 = vmatpush2.msra.mxu0 0.0
      %4830 = vmatprep.subr.mxu0 0.0
      %4831 = vmatpush2.msra.mxu0 0.0
      %4832 = vmatprep.subr.mxu0 0.0
      %4833 = vmatpush2.msra.mxu0 0.0
      %4834 = vmatprep.subr.mxu0 0.0
      %4835 = vmatpush2.msra.mxu0 0.0
      %4836 = vmatprep.subr.mxu0 0.0
      %4837 = vmatpush2.msra.mxu0 0.0
      %4838 = vmatprep.subr.mxu0 0.0
      %4839 = vmatpush2.msra.mxu0 0.0
      %4840 = vmatprep.mubr.f32.mxu0 0.0
      %4841 = vmatmul.mubr.f32.gmra.mxu0 %v4774
      %v4842 = vpop.f32.mrf.mxu0
      %v4843 = vadd.f32 0.0, %v4842
      %v4844 = vpop.f32.mrf.mxu0
      %v4845 = vadd.f32 0.0, %v4844
      %4846 = vdwg.mxu0
      %v4847 = vadd.f32 %v4717, %v4843
      %v4848 = vadd.f32 %v4718, %v4845
      %v4849 = vmul.f32 %v4423, %v3092
      %v4850 = vmul.f32 %v4424, %v3095
      %v4851 = vmul.f32 %v4425, %v3094
      %v4852 = vmul.f32 %v4426, %v3092
      %v4853 = vmul.f32 %v4427, %v3095
      %v4854 = vmul.f32 %v4428, %v3094
      %v4855 = vmul.f32 %v4429, %v3092
      %v4856 = vmul.f32 %v4430, %v3095
      %v4857 = vmul.f32 %v4431, %v3094
      %v4858 = vmul.f32 %v4432, %v3092
      %v4859 = vmul.f32 %v4433, %v3095
      %v4860 = vmul.f32 %v4434, %v3094
      %s4861 = scalar_lea.vmem %s5, 32
      %v4862 = vld [vmem:[%s4861] sm:$0xf]
      %4875 = vrot.lane.b32.xlu0 %v4849, 111
      %v4876 = vpop.permute.xlu0 %4875
      %4877 = vrot.lane.b32.xlu0 %v4850, 111
      %v4878 = vpop.permute.xlu0 %4877
      %4879 = vrot.lane.b32.xlu0 %v4851, 111
      %v4880 = vpop.permute.xlu0 %4879
      %4881 = vrot.lane.b32.xlu0 %v4852, 111
      %v4882 = vpop.permute.xlu0 %4881
      %4883 = vrot.lane.b32.xlu0 %v4853, 111
      %v4884 = vpop.permute.xlu0 %4883
      %4885 = vrot.lane.b32.xlu0 %v4854, 111
      %v4886 = vpop.permute.xlu0 %4885
      %4887 = vrot.lane.b32.xlu0 %v4855, 111
      %v4888 = vpop.permute.xlu0 %4887
      %4889 = vrot.lane.b32.xlu0 %v4856, 111
      %v4890 = vpop.permute.xlu0 %4889
      %4891 = vrot.lane.b32.xlu0 %v4857, 111
      %v4892 = vpop.permute.xlu0 %4891
      %4893 = vrot.lane.b32.xlu0 %v4858, 111
      %v4894 = vpop.permute.xlu0 %4893
      %4895 = vrot.lane.b32.xlu0 %v4859, 111
      %v4896 = vpop.permute.xlu0 %4895
      %4897 = vrot.lane.b32.xlu0 %v4860, 111
      %v4898 = vpop.permute.xlu0 %4897
      %v4899 = vsel %vm501, %v4876, %v4878
      %v4900 = vsel %vm501, %v4878, %v4880
      %v4901 = vsel %vm501, %v4882, %v4884
      %v4902 = vsel %vm501, %v4884, %v4886
      %v4903 = vsel %vm501, %v4888, %v4890
      %v4904 = vsel %vm501, %v4890, %v4892
      %v4905 = vsel %vm501, %v4894, %v4896
      %v4906 = vsel %vm501, %v4896, %v4898
      %v4916 = vsel %vm3860, %v4862, 0
      %4918 = vmatprep.subr.mxu0 0.0
      %4919 = vmatpush1.msra.mxu0 0.0
      %4920 = vmatprep.subr.mxu0 0.0
      %4921 = vmatpush1.msra.mxu0 0.0
      %4922 = vmatprep.subr.mxu0 0.0
      %4923 = vmatpush1.msra.mxu0 0.0
      %4924 = vmatprep.subr.mxu0 0.0
      %4925 = vmatpush1.msra.mxu0 0.0
      %4926 = vmatprep.subr.mxu0 0.0
      %4927 = vmatpush1.msra.mxu0 0.0
      %4928 = vmatprep.subr.mxu0 0.0
      %4929 = vmatpush1.msra.mxu0 0.0
      %4930 = vmatprep.subr.mxu0 0.0
      %4931 = vmatpush1.msra.mxu0 0.0
      %4932 = vmatprep.subr.mxu0 0.0
      %4933 = vmatpush1.msra.mxu0 0.0
      %4934 = vmatprep.subr.mxu0 0.0
      %4935 = vmatpush1.msra.mxu0 0.0
      %4936 = vmatprep.subr.mxu0 0.0
      %4937 = vmatpush1.msra.mxu0 0.0
      %4938 = vmatprep.subr.mxu0 0.0
      %4939 = vmatpush1.msra.mxu0 0.0
      %4940 = vmatprep.subr.mxu0 0.0
      %4941 = vmatpush1.msra.mxu0 0.0
      %4942 = vmatprep.subr.mxu0 %v4906
      %4943 = vmatpush1.msra.mxu0 %v4905
      %4944 = vmatprep.subr.mxu0 %v4904
      %4945 = vmatpush1.msra.mxu0 %v4903
      %4946 = vmatprep.subr.mxu0 %v4902
      %4947 = vmatpush1.msra.mxu0 %v4901
      %4948 = vmatprep.subr.mxu0 %v4900
      %4949 = vmatpush1.msra.mxu0 %v4899
      %4950 = vmatprep.subr.mxu0 0.0
      %4951 = vmatpush2.msra.mxu0 0.0
      %4952 = vmatprep.subr.mxu0 0.0
      %4953 = vmatpush2.msra.mxu0 0.0
      %4954 = vmatprep.subr.mxu0 0.0
      %4955 = vmatpush2.msra.mxu0 0.0
      %4956 = vmatprep.subr.mxu0 0.0
      %4957 = vmatpush2.msra.mxu0 0.0
      %4958 = vmatprep.subr.mxu0 0.0
      %4959 = vmatpush2.msra.mxu0 0.0
      %4960 = vmatprep.subr.mxu0 0.0
      %4961 = vmatpush2.msra.mxu0 0.0
      %4962 = vmatprep.subr.mxu0 0.0
      %4963 = vmatpush2.msra.mxu0 0.0
      %4964 = vmatprep.subr.mxu0 0.0
      %4965 = vmatpush2.msra.mxu0 0.0
      %4966 = vmatprep.subr.mxu0 0.0
      %4967 = vmatpush2.msra.mxu0 0.0
      %4968 = vmatprep.subr.mxu0 0.0
      %4969 = vmatpush2.msra.mxu0 0.0
      %4970 = vmatprep.subr.mxu0 0.0
      %4971 = vmatpush2.msra.mxu0 0.0
      %4972 = vmatprep.subr.mxu0 0.0
      %4973 = vmatpush2.msra.mxu0 0.0
      %4974 = vmatprep.subr.mxu0 0.0
      %4975 = vmatpush2.msra.mxu0 0.0
      %4976 = vmatprep.subr.mxu0 0.0
      %4977 = vmatpush2.msra.mxu0 0.0
      %4978 = vmatprep.subr.mxu0 0.0
      %4979 = vmatpush2.msra.mxu0 0.0
      %4980 = vmatprep.subr.mxu0 0.0
      %4981 = vmatpush2.msra.mxu0 0.0
      %4982 = vmatprep.mubr.f32.mxu0 0.0
      %4983 = vmatmul.mubr.f32.gmra.mxu0 %v4916
      %v4984 = vpop.f32.mrf.mxu0
      %v4985 = vadd.f32 0.0, %v4984
      %v4986 = vpop.f32.mrf.mxu0
      %v4987 = vadd.f32 0.0, %v4986
      %4988 = vdwg.mxu0
      %v4989 = vadd.f32 %v4847, %v4985
      %v4990 = vadd.f32 %v4848, %v4987
      %v4991 = vld [vmem:[%s6] sm:$0xf]
      %4993 = vset.pattern.permute.xlu0 0
      %4994 = vperm.xlu0 %4993, %v4991
      %v4995 = vpop.permute.xlu0 %4994
      %v4997 = vadd.f32 %v4989, %v4995
      %v4998 = vadd.f32 %v4990, %v4995
      %v5001 = vcombine.low %v4997, %v4998
      %5003 = vst [vmem:[%s387] sm:$0xff] %v5001
      %p5004 = scmp.lt.s32.totalorder %s21, 1
      %s5005 = scalar_select %p5004, %s21, 1
      %s5006 = smul.addr %s5005, 2
      %s5007 = smul.addr %s5006, 4
      %s5008 = scalar_lea.vmem %s7, %s5007
      %p5009 = scmp.lt.s32.totalorder %s21, 1
      %s5010 = scalar_select %p5009, %s21, 1
      %s5011 = smul.addr %s5010, 8
      %s5012 = smul.addr %s5011, 8
      %s5013 = scalar_lea.vmem %s8, %s5012
      %p5014 = scmp.lt.s32.totalorder %s21, 1
      %s5015 = scalar_select %p5014, %s21, 1
      %s5016 = smul.addr %s5015, 8
      %s5017 = smul.addr %s5016, 8
      %s5018 = scalar_lea.vmem %s9, %s5017
      // Predicated region
      $region49: #{conv_lstm_grad_forward.1} parent=47 // pred_check
        %p5019 = pneg %p201
      $region50: #{conv_lstm_grad_forward.1} parent=47 // pred_check_branch
        %5021 = sbr.rel (%p5019) target = $region52
      $region51: #{conv_lstm_grad_forward.1} parent=47 // pred_region
        _
      $region52: #{conv_lstm_grad_forward.1} parent=47 // pred_fallthru
        _
      // Predicated region
      $region53: #{conv_lstm_grad_forward.1} parent=47 // pred_check
        %p5022 = pneg %p227
      $region54: #{conv_lstm_grad_forward.1} parent=47 // pred_check_branch
        %5024 = sbr.rel (%p5022) target = $region56
      $region55: #{conv_lstm_grad_forward.1} parent=47 // pred_region
        _
      $region56: #{conv_lstm_grad_forward.1} parent=47 // pred_fallthru
        _
      // Predicated region
      $region57: #{conv_lstm_grad_forward.1} parent=47 // pred_check
        %p5025 = pneg %p253
      $region58: #{conv_lstm_grad_forward.1} parent=47 // pred_check_branch
        %5027 = sbr.rel (%p5025) target = $region60
      $region59: #{conv_lstm_grad_forward.1} parent=47 // pred_region
        _
      $region60: #{conv_lstm_grad_forward.1} parent=47 // pred_fallthru
        _
    $region48: #{conv_lstm_grad_forward.1} parent=5 // pred_fallthru
      _
    %p5028 = scmp.le.s32.totalorder 2, %s16
    // Predicated region
    $region61: #{conv_lstm_grad_forward.1} parent=5 // pred_check
      %p5029 = pneg %p5028
    $region62: #{conv_lstm_grad_forward.1} parent=5 // pred_check_branch
      %5031 = sbr.rel (%p5029) target = $region64
    $region63: #{conv_lstm_grad_forward.1} parent=5 // pred_region
      %s5032 = ssub.s32 %s16, 2
      // Predicated region
      $region65: #{conv_lstm_grad_forward.1} parent=63 // pred_check
        %p5033 = pneg %p207
      $region66: #{conv_lstm_grad_forward.1} parent=63 // pred_check_branch
        %5035 = sbr.rel (%p5033) target = $region68
      $region67: #{conv_lstm_grad_forward.1} parent=63 // pred_region
        %p5036 = scmp.lt.s32.totalorder %s22, 1
        %s5037 = scalar_select %p5036, %s22, 1
        %s5038 = smul.addr %s5037, 2
        %s5039 = smul.addr %s5038, 4
        %s5040 = scalar_lea.vmem %s7, %s5039
      $region68: #{conv_lstm_grad_forward.1} parent=63 // pred_fallthru
        _
      // Predicated region
      $region69: #{conv_lstm_grad_forward.1} parent=63 // pred_check
        %p5041 = pneg %p233
      $region70: #{conv_lstm_grad_forward.1} parent=63 // pred_check_branch
        %5043 = sbr.rel (%p5041) target = $region72
      $region71: #{conv_lstm_grad_forward.1} parent=63 // pred_region
        %p5044 = scmp.lt.s32.totalorder %s22, 1
        %s5045 = scalar_select %p5044, %s22, 1
        %s5046 = smul.addr %s5045, 8
        %s5047 = smul.addr %s5046, 8
        %s5048 = scalar_lea.vmem %s8, %s5047
      $region72: #{conv_lstm_grad_forward.1} parent=63 // pred_fallthru
        _
      // Predicated region
      $region73: #{conv_lstm_grad_forward.1} parent=63 // pred_check
        %p5049 = pneg %p259
      $region74: #{conv_lstm_grad_forward.1} parent=63 // pred_check_branch
        %5051 = sbr.rel (%p5049) target = $region76
      $region75: #{conv_lstm_grad_forward.1} parent=63 // pred_region
        %p5052 = scmp.lt.s32.totalorder %s22, 1
        %s5053 = scalar_select %p5052, %s22, 1
        %s5054 = smul.addr %s5053, 8
        %s5055 = smul.addr %s5054, 8
        %s5056 = scalar_lea.vmem %s9, %s5055
      $region76: #{conv_lstm_grad_forward.1} parent=63 // pred_fallthru
        _
    $region64: #{conv_lstm_grad_forward.1} parent=5 // pred_fallthru
      _
  $region6: #{conv_lstm_grad_forward.1} parent=0 // loop_footer
    %s20 = sadd.s32 1, %s16
  $region7: #{conv_lstm_grad_forward.1} parent=0 // loop_footer_branch
    %15 = sbr.rel target = $region3
  $region8: #{conv_lstm_grad_forward.1} parent=0 // loop_exit
    _

</llo_original>
